<compile_context>
chip_gen: v6e
topology: v6e:2x2x1
jax: 0.10.0
libtpu: 0.0.40
codegen_flags: <defaults>
</compile_context>

<pallas_src>
import jax
import jax.numpy as jnp
from jax.experimental import pallas as pl
from jax.experimental.pallas import tpu as pltpu

# ---------------------------------------------------------------------------
# Model dimensions (input_size fixed to 784 by x.view(-1, 784))
# ---------------------------------------------------------------------------
INPUT_SIZE = 784
HIDDEN = 128
HIDDEN2 = 64
Z_DIM = 32
MAX_TB = 512            # largest batch tile (HBM-bound: big tiles amortize overhead)


def _round_up(v, m):
    return -(-v // m) * m


# ---------------------------------------------------------------------------
# Kernel
# ---------------------------------------------------------------------------
def _vae_kernel(x_ref, eps_ref,
                w1_ref, w2_ref, wmv_ref, wd1_ref, wd2_ref, wd3_ref,
                bias_ref,
                recon_ref, muvar_ref):
    # Packed biases: row 0=b1, 1=b2, 2=[bmu|bvar], 3=bd1, 4=bd2, 5=bd3.
    biases = bias_ref[...]                           # (8, 784) f32
    b1 = biases[0:1, :HIDDEN]
    b2 = biases[1:2, :HIDDEN2]
    bmv = biases[2:3, :2 * Z_DIM]
    bd1 = biases[3:4, :HIDDEN2]
    bd2 = biases[4:5, :HIDDEN]
    bd3 = biases[5:6, :INPUT_SIZE]

    def mm(a, w_ref):
        # bf16 operands on the MXU, f32 accumulation.
        return jnp.dot(a.astype(jnp.bfloat16), w_ref[...],
                       preferred_element_type=jnp.float32)

    x = x_ref[...]                                   # (TB, 784) f32 or bf16

    # ----- encoder -----
    h = jnp.maximum(mm(x, w1_ref) + b1, 0.0)         # ReLU
    h = jnp.maximum(mm(h, w2_ref) + b2, 0.0)         # ReLU
    muvar = mm(h, wmv_ref) + bmv                     # (TB, 64) = [mu | logvar]
    mu = muvar[:, :Z_DIM]
    logvar = muvar[:, Z_DIM:]

    # ----- sampling (reparameterization): z = eps * exp(0.5 * logvar) + mu ---
    z = eps_ref[...] * jnp.exp(0.5 * logvar) + mu

    # ----- decoder -----
    d = jnp.maximum(mm(z, wd1_ref) + bd1, 0.0)       # ReLU
    d = jnp.maximum(mm(d, wd2_ref) + bd2, 0.0)       # ReLU
    # f32 epilogue (portable across v5e/v6e/v7x); bf16 only at the store so the
    # dominant (TB, 784) writeback is half-width.
    recon = jax.nn.sigmoid(mm(d, wd3_ref) + bd3)     # Sigmoid

    recon_ref[...] = recon.astype(recon_ref.dtype)   # bf16 store
    muvar_ref[...] = muvar


def _resident(shape):
    # Whole-array block, same block index for every grid point (weights stay in
    # VMEM; Pallas does not re-fetch an unchanged block index across steps).
    return pl.BlockSpec(shape, lambda i: (0, 0))


# ---------------------------------------------------------------------------
# Wrapper
# ---------------------------------------------------------------------------
@jax.jit
def vae_forward(x_nchw, eps, params):
    """x_nchw: (B,1,28,28) f32 or bf16, eps: (B, Z_DIM) f32 ~ N(0,1).

    Returns (recon[b,784] bf16, mu[b,32] f32, logvar[b,32] f32).
    """
    w1, w2, wmv, wd1, wd2, wd3, bias_pack = params

    x = x_nchw.reshape(-1, INPUT_SIZE)               # == x.view(-1, 784)
    if x.dtype != jnp.bfloat16:
        x = x.astype(jnp.float32)                    # no-op if already f32
    b = x.shape[0]

    # ----- batch tiling -----------------------------------------------------
    if b <= 128:
        # Tiny batch: single block, pad by at most 15 rows (cheap).
        tb = max(16, _round_up(b, 16))
        if tb != b:
            x = jnp.pad(x, ((0, tb - b), (0, 0)))
            eps = jnp.pad(eps, ((0, tb - b), (0, 0)))
        rows = tb
    else:
        # Large tiles (up to 512) but always >= 2 grid steps so both v7x
        # TensorCores get work. No jnp.pad: the ragged tail is a partial last
        # block, masked by Pallas (OOB output rows are never written).
        tb = min(MAX_TB, _round_up(pl.cdiv(b, 2), 128))
        rows = b

    grid = (pl.cdiv(rows, tb),)

    # Advisory cost estimate for XLA scheduling around the custom call.
    n_rows = grid[0] * tb
    mm_macs = (INPUT_SIZE * HIDDEN + HIDDEN * HIDDEN2 + HIDDEN2 * 2 * Z_DIM
               + Z_DIM * HIDDEN2 + HIDDEN2 * HIDDEN + HIDDEN * INPUT_SIZE)
    weight_bytes = 2 * mm_macs + 8 * INPUT_SIZE * 4          # bf16 weights + f32 bias pack
    io_bytes = n_rows * (INPUT_SIZE * x.dtype.itemsize       # x
                         + Z_DIM * 4                         # eps
                         + INPUT_SIZE * 2                    # recon (bf16)
                         + 2 * Z_DIM * 4)                    # [mu|logvar]
    cost = pl.CostEstimate(
        flops=2 * n_rows * mm_macs,
        transcendentals=n_rows * (Z_DIM + INPUT_SIZE),
        bytes_accessed=weight_bytes + io_bytes,
    )

    recon, muvar = pl.pallas_call(
        _vae_kernel,
        out_shape=(
            jax.ShapeDtypeStruct((rows, INPUT_SIZE), jnp.bfloat16),
            jax.ShapeDtypeStruct((rows, 2 * Z_DIM), jnp.float32),
        ),
        grid_spec=pltpu.PrefetchScalarGridSpec(
            num_scalar_prefetch=0,
            grid=grid,
            in_specs=[
                pl.BlockSpec((tb, INPUT_SIZE), lambda i: (i, 0)),   # x tile
                pl.BlockSpec((tb, Z_DIM), lambda i: (i, 0)),        # eps tile
                _resident(w1.shape), _resident(w2.shape), _resident(wmv.shape),
                _resident(wd1.shape), _resident(wd2.shape), _resident(wd3.shape),
                _resident(bias_pack.shape),
            ],
            out_specs=[
                pl.BlockSpec((tb, INPUT_SIZE), lambda i: (i, 0)),   # recon (bf16)
                pl.BlockSpec((tb, 2 * Z_DIM), lambda i: (i, 0)),    # [mu|logvar]
            ],
        ),
        compiler_params=pltpu.CompilerParams(
            dimension_semantics=("parallel",),
            vmem_limit_bytes=32 * 1024 * 1024,
        ),
        cost_estimate=cost,
    )(x, eps, w1, w2, wmv, wd1, wd2, wd3, bias_pack)

    recon = recon[:b]
    mu = muvar[:b, :Z_DIM]
    logvar = muvar[:b, Z_DIM:]       # PyTorch model's `var` = log-variance
    return recon, mu, logvar


# ---------------------------------------------------------------------------
# Parameter init (mimics nn.Linear: U(-1/sqrt(fan_in), 1/sqrt(fan_in)))
# ---------------------------------------------------------------------------
def init_params(key):
    def linear(k, fan_in, fan_out):
        kw, kb = jax.random.split(k)
        bound = 1.0 / float(fan_in) ** 0.5
        w = jax.random.uniform(kw, (fan_in, fan_out), jnp.float32, -bound, bound)
        bias = jax.random.uniform(kb, (fan_out,), jnp.float32, -bound, bound)
        return w, bias

    keys = jax.random.split(key, 7)
    w1, b1 = linear(keys[0], INPUT_SIZE, HIDDEN)
    w2, b2 = linear(keys[1], HIDDEN, HIDDEN2)
    wmu, bmu = linear(keys[2], HIDDEN2, Z_DIM)
    wvar, bvar = linear(keys[3], HIDDEN2, Z_DIM)
    wd1, bd1 = linear(keys[4], Z_DIM, HIDDEN2)
    wd2, bd2 = linear(keys[5], HIDDEN2, HIDDEN)
    wd3, bd3 = linear(keys[6], HIDDEN, INPUT_SIZE)

    # Fused mu / log-var head.
    wmv = jnp.concatenate([wmu, wvar], axis=1)        # (64, 64)
    bmv = jnp.concatenate([bmu, bvar], axis=0)        # (64,)

    # Pack all biases into one (8, 784) f32 block (one kernel input).
    bias_pack = jnp.zeros((8, INPUT_SIZE), jnp.float32)
    bias_pack = bias_pack.at[0, :HIDDEN].set(b1)
    bias_pack = bias_pack.at[1, :HIDDEN2].set(b2)
    bias_pack = bias_pack.at[2, :2 * Z_DIM].set(bmv)
    bias_pack = bias_pack.at[3, :HIDDEN2].set(bd1)
    bias_pack = bias_pack.at[4, :HIDDEN].set(bd2)
    bias_pack = bias_pack.at[5, :INPUT_SIZE].set(bd3)

    bf16 = lambda w: w.astype(jnp.bfloat16)
    return (bf16(w1), bf16(w2), bf16(wmv), bf16(wd1), bf16(wd2), bf16(wd3),
            bias_pack)


# ---------------------------------------------------------------------------
# Pure-JAX reference (same bf16-operand / f32-accumulate numerics, f32 recon)
# ---------------------------------------------------------------------------
def _reference(x_nchw, eps, params):
    w1, w2, wmv, wd1, wd2, wd3, bias = params
    b1 = bias[0:1, :HIDDEN]
    b2 = bias[1:2, :HIDDEN2]
    bmv = bias[2:3, :2 * Z_DIM]
    bd1 = bias[3:4, :HIDDEN2]
    bd2 = bias[4:5, :HIDDEN]
    bd3 = bias[5:6, :INPUT_SIZE]

    mm = lambda a, w: jnp.dot(a.astype(jnp.bfloat16), w,
                              preferred_element_type=jnp.float32)
    x = x_nchw.reshape(-1, INPUT_SIZE)
    h = jax.nn.relu(mm(x, w1) + b1)
    h = jax.nn.relu(mm(h, w2) + b2)
    muvar = mm(h, wmv) + bmv
    mu, logvar = muvar[:, :Z_DIM], muvar[:, Z_DIM:]
    z = eps * jnp.exp(0.5 * logvar) + mu
    d = jax.nn.relu(mm(z, wd1) + bd1)
    d = jax.nn.relu(mm(d, wd2) + bd2)
    recon = jax.nn.sigmoid(mm(d, wd3) + bd3)
    return recon, mu, logvar


# ---------------------------------------------------------------------------
# Demo / sanity check
# ---------------------------------------------------------------------------
if __name__ == "__main__":
    key = jax.random.PRNGKey(0)
    k_param, k_x, k_eps = jax.random.split(key, 3)
    params = init_params(k_param)

    def run_and_check(batch, kx, ke):
        x = jax.random.uniform(kx, (batch, 1, 28, 28), jnp.float32)
        # torch.randn_like(std): N(0,1) noise, generated host-side for
        # determinism and passed into the kernel.
        eps = jax.random.normal(ke, (batch, Z_DIM), jnp.float32)
        recon, mu, logvar = vae_forward(x, eps, params)
        jax.block_until_ready((recon, mu, logvar))

        r_ref, mu_ref, lv_ref = _reference(x, eps, params)
        assert recon.shape == (batch, INPUT_SIZE) and recon.dtype == jnp.bfloat16
        assert mu.shape == (batch, Z_DIM) and logvar.shape == (batch, Z_DIM)
        assert jnp.allclose(mu, mu_ref, atol=5e-3, rtol=5e-3)
        assert jnp.allclose(logvar, lv_ref, atol=5e-3, rtol=5e-3)
        assert jnp.allclose(recon.astype(jnp.float32), r_ref,
                            atol=1.5e-2, rtol=1.5e-2)

    keys_x = jax.random.split(k_x, 3)
    keys_e = jax.random.split(k_eps, 3)

    # Even-divide path: tb=128, 2 parallel grid steps (uses both v7x TCs).
    run_and_check(256, keys_x[0], keys_e[0])
    # Large ragged batch: tb=256, 2 grid steps, partial last block, no jnp.pad.
    run_and_check(300, keys_x[1], keys_e[1])
    # Tiny batch: single block padded to a multiple of 16.
    run_and_check(10, keys_x[2], keys_e[2])

    print("KERNEL_OK")
</pallas_src>

<mosaic_0001>
module attributes {stable_mosaic.version = 11 : i64} {
  func.func @_vae_kernel(%arg0: i32, %arg1: memref<128x784xf32, #tpu.memory_space<vmem>>, %arg2: memref<128x32xf32, #tpu.memory_space<vmem>>, %arg3: memref<784x128xbf16, #tpu.memory_space<vmem>>, %arg4: memref<128x64xbf16, #tpu.memory_space<vmem>>, %arg5: memref<64x64xbf16, #tpu.memory_space<vmem>>, %arg6: memref<32x64xbf16, #tpu.memory_space<vmem>>, %arg7: memref<64x128xbf16, #tpu.memory_space<vmem>>, %arg8: memref<128x784xbf16, #tpu.memory_space<vmem>>, %arg9: memref<8x784xf32, #tpu.memory_space<vmem>>, %arg10: memref<128x784xbf16, #tpu.memory_space<vmem>>, %arg11: memref<128x64xf32, #tpu.memory_space<vmem>>) attributes {dimension_semantics = [#tpu.dimension_semantics<parallel>], iteration_bounds = array<i64: 2>, scalar_prefetch = 0 : i64, scratch_operands = 0 : i64, tpu.core_type = #tpu.core_type<tc>, window_params = [{transform_indices = @transform_0, window_bounds = array<i64: 128, 784>}, {transform_indices = @transform_1, window_bounds = array<i64: 128, 32>}, {pipeline_mode = #tpu.pipeline_mode<synchronous>, transform_indices = @transform_2, window_bounds = array<i64: 784, 128>}, {pipeline_mode = #tpu.pipeline_mode<synchronous>, transform_indices = @transform_3, window_bounds = array<i64: 128, 64>}, {pipeline_mode = #tpu.pipeline_mode<synchronous>, transform_indices = @transform_4, window_bounds = array<i64: 64, 64>}, {pipeline_mode = #tpu.pipeline_mode<synchronous>, transform_indices = @transform_5, window_bounds = array<i64: 32, 64>}, {pipeline_mode = #tpu.pipeline_mode<synchronous>, transform_indices = @transform_6, window_bounds = array<i64: 64, 128>}, {pipeline_mode = #tpu.pipeline_mode<synchronous>, transform_indices = @transform_7, window_bounds = array<i64: 128, 784>}, {pipeline_mode = #tpu.pipeline_mode<synchronous>, transform_indices = @transform_8, window_bounds = array<i64: 8, 784>}, {transform_indices = @transform_9, window_bounds = array<i64: 128, 784>}, {transform_indices = @transform_10, window_bounds = array<i64: 128, 64>}]} {
    %c0 = arith.constant 0 : index
    %c0_0 = arith.constant 0 : index
    %0 = vector.load %arg9[%c0, %c0_0] : memref<8x784xf32, #tpu.memory_space<vmem>>, vector<8x784xf32>
    %1 = vector.extract_strided_slice %0 {offsets = [0, 0], sizes = [1, 128], strides = [1, 1]} : vector<8x784xf32> to vector<1x128xf32>
    %2 = vector.extract_strided_slice %0 {offsets = [1, 0], sizes = [1, 64], strides = [1, 1]} : vector<8x784xf32> to vector<1x64xf32>
    %3 = vector.extract_strided_slice %0 {offsets = [2, 0], sizes = [1, 64], strides = [1, 1]} : vector<8x784xf32> to vector<1x64xf32>
    %4 = vector.extract_strided_slice %0 {offsets = [3, 0], sizes = [1, 64], strides = [1, 1]} : vector<8x784xf32> to vector<1x64xf32>
    %5 = vector.extract_strided_slice %0 {offsets = [4, 0], sizes = [1, 128], strides = [1, 1]} : vector<8x784xf32> to vector<1x128xf32>
    %6 = vector.extract_strided_slice %0 {offsets = [5, 0], sizes = [1, 784], strides = [1, 1]} : vector<8x784xf32> to vector<1x784xf32>
    %c0_1 = arith.constant 0 : index
    %c0_2 = arith.constant 0 : index
    %7 = vector.load %arg1[%c0_1, %c0_2] : memref<128x784xf32, #tpu.memory_space<vmem>>, vector<128x784xf32>
    %8 = arith.truncf %7 : vector<128x784xf32> to vector<128x784xbf16>
    %c0_3 = arith.constant 0 : index
    %c0_4 = arith.constant 0 : index
    %9 = vector.load %arg3[%c0_3, %c0_4] : memref<784x128xbf16, #tpu.memory_space<vmem>>, vector<784x128xbf16>
    %cst = arith.constant dense<0.000000e+00> : vector<128x128xf32>
    %10 = tpu.matmul %8, %9, %cst {dimension_numbers = #tpu.dot_dimension_numbers<[1], [0], [0], [1], [0, 0, 1, 1], [], []>} : vector<128x784xbf16>, vector<784x128xbf16>, vector<128x128xf32> -> vector<128x128xf32>
    %11 = vector.broadcast %1 : vector<1x128xf32> to vector<128x128xf32>
    %12 = arith.addf %10, %11 : vector<128x128xf32>
    %cst_5 = arith.constant 0.000000e+00 : f32
    %13 = vector.broadcast %cst_5 : f32 to vector<128x128xf32>
    %14 = arith.maximumf %12, %13 : vector<128x128xf32>
    %15 = arith.truncf %14 : vector<128x128xf32> to vector<128x128xbf16>
    %c0_6 = arith.constant 0 : index
    %c0_7 = arith.constant 0 : index
    %16 = vector.load %arg4[%c0_6, %c0_7] : memref<128x64xbf16, #tpu.memory_space<vmem>>, vector<128x64xbf16>
    %cst_8 = arith.constant dense<0.000000e+00> : vector<128x64xf32>
    %17 = tpu.matmul %15, %16, %cst_8 {dimension_numbers = #tpu.dot_dimension_numbers<[1], [0], [0], [1], [0, 0, 1, 1], [], []>} : vector<128x128xbf16>, vector<128x64xbf16>, vector<128x64xf32> -> vector<128x64xf32>
    %18 = vector.broadcast %2 : vector<1x64xf32> to vector<128x64xf32>
    %19 = arith.addf %17, %18 : vector<128x64xf32>
    %cst_9 = arith.constant 0.000000e+00 : f32
    %20 = vector.broadcast %cst_9 : f32 to vector<128x64xf32>
    %21 = arith.maximumf %19, %20 : vector<128x64xf32>
    %22 = arith.truncf %21 : vector<128x64xf32> to vector<128x64xbf16>
    %c0_10 = arith.constant 0 : index
    %c0_11 = arith.constant 0 : index
    %23 = vector.load %arg5[%c0_10, %c0_11] : memref<64x64xbf16, #tpu.memory_space<vmem>>, vector<64x64xbf16>
    %cst_12 = arith.constant dense<0.000000e+00> : vector<128x64xf32>
    %24 = tpu.matmul %22, %23, %cst_12 {dimension_numbers = #tpu.dot_dimension_numbers<[1], [0], [0], [1], [0, 0, 1, 1], [], []>} : vector<128x64xbf16>, vector<64x64xbf16>, vector<128x64xf32> -> vector<128x64xf32>
    %25 = vector.broadcast %3 : vector<1x64xf32> to vector<128x64xf32>
    %26 = arith.addf %24, %25 : vector<128x64xf32>
    %27 = vector.extract_strided_slice %26 {offsets = [0, 0], sizes = [128, 32], strides = [1, 1]} : vector<128x64xf32> to vector<128x32xf32>
    %28 = vector.extract_strided_slice %26 {offsets = [0, 32], sizes = [128, 32], strides = [1, 1]} : vector<128x64xf32> to vector<128x32xf32>
    %c0_13 = arith.constant 0 : index
    %c0_14 = arith.constant 0 : index
    %29 = vector.load %arg2[%c0_13, %c0_14] : memref<128x32xf32, #tpu.memory_space<vmem>>, vector<128x32xf32>
    %cst_15 = arith.constant 5.000000e-01 : f32
    %30 = vector.broadcast %cst_15 : f32 to vector<128x32xf32>
    %31 = arith.mulf %30, %28 : vector<128x32xf32>
    %32 = math.exp %31 : vector<128x32xf32>
    %33 = arith.mulf %29, %32 : vector<128x32xf32>
    %34 = arith.addf %33, %27 : vector<128x32xf32>
    %35 = arith.truncf %34 : vector<128x32xf32> to vector<128x32xbf16>
    %c0_16 = arith.constant 0 : index
    %c0_17 = arith.constant 0 : index
    %36 = vector.load %arg6[%c0_16, %c0_17] : memref<32x64xbf16, #tpu.memory_space<vmem>>, vector<32x64xbf16>
    %cst_18 = arith.constant dense<0.000000e+00> : vector<128x64xf32>
    %37 = tpu.matmul %35, %36, %cst_18 {dimension_numbers = #tpu.dot_dimension_numbers<[1], [0], [0], [1], [0, 0, 1, 1], [], []>} : vector<128x32xbf16>, vector<32x64xbf16>, vector<128x64xf32> -> vector<128x64xf32>
    %38 = vector.broadcast %4 : vector<1x64xf32> to vector<128x64xf32>
    %39 = arith.addf %37, %38 : vector<128x64xf32>
    %cst_19 = arith.constant 0.000000e+00 : f32
    %40 = vector.broadcast %cst_19 : f32 to vector<128x64xf32>
    %41 = arith.maximumf %39, %40 : vector<128x64xf32>
    %42 = arith.truncf %41 : vector<128x64xf32> to vector<128x64xbf16>
    %c0_20 = arith.constant 0 : index
    %c0_21 = arith.constant 0 : index
    %43 = vector.load %arg7[%c0_20, %c0_21] : memref<64x128xbf16, #tpu.memory_space<vmem>>, vector<64x128xbf16>
    %cst_22 = arith.constant dense<0.000000e+00> : vector<128x128xf32>
    %44 = tpu.matmul %42, %43, %cst_22 {dimension_numbers = #tpu.dot_dimension_numbers<[1], [0], [0], [1], [0, 0, 1, 1], [], []>} : vector<128x64xbf16>, vector<64x128xbf16>, vector<128x128xf32> -> vector<128x128xf32>
    %45 = vector.broadcast %5 : vector<1x128xf32> to vector<128x128xf32>
    %46 = arith.addf %44, %45 : vector<128x128xf32>
    %cst_23 = arith.constant 0.000000e+00 : f32
    %47 = vector.broadcast %cst_23 : f32 to vector<128x128xf32>
    %48 = arith.maximumf %46, %47 : vector<128x128xf32>
    %49 = arith.truncf %48 : vector<128x128xf32> to vector<128x128xbf16>
    %c0_24 = arith.constant 0 : index
    %c0_25 = arith.constant 0 : index
    %50 = vector.load %arg8[%c0_24, %c0_25] : memref<128x784xbf16, #tpu.memory_space<vmem>>, vector<128x784xbf16>
    %cst_26 = arith.constant dense<0.000000e+00> : vector<128x784xf32>
    %51 = tpu.matmul %49, %50, %cst_26 {dimension_numbers = #tpu.dot_dimension_numbers<[1], [0], [0], [1], [0, 0, 1, 1], [], []>} : vector<128x128xbf16>, vector<128x784xbf16>, vector<128x784xf32> -> vector<128x784xf32>
    %52 = vector.broadcast %6 : vector<1x784xf32> to vector<128x784xf32>
    %53 = arith.addf %51, %52 : vector<128x784xf32>
    %54 = arith.negf %53 : vector<128x784xf32>
    %55 = math.exp %54 : vector<128x784xf32>
    %cst_27 = arith.constant 1.000000e+00 : f32
    %56 = vector.broadcast %cst_27 : f32 to vector<128x784xf32>
    %57 = arith.addf %56, %55 : vector<128x784xf32>
    %58 = arith.divf %56, %57 : vector<128x784xf32>
    %59 = arith.truncf %58 : vector<128x784xf32> to vector<128x784xbf16>
    %c0_28 = arith.constant 0 : index
    %c0_29 = arith.constant 0 : index
    %60 = vector.load %arg10[%c0_28, %c0_29] : memref<128x784xbf16, #tpu.memory_space<vmem>>, vector<128x784xbf16>
    tpu.vector_store %arg10[%c0_28, %c0_29], %59 {strides = array<i32>} : memref<128x784xbf16, #tpu.memory_space<vmem>>, vector<128x784xbf16>,
    %c0_30 = arith.constant 0 : index
    %c0_31 = arith.constant 0 : index
    %61 = vector.load %arg11[%c0_30, %c0_31] : memref<128x64xf32, #tpu.memory_space<vmem>>, vector<128x64xf32>
    tpu.vector_store %arg11[%c0_30, %c0_31], %26 {strides = array<i32>} : memref<128x64xf32, #tpu.memory_space<vmem>>, vector<128x64xf32>,
    return
  }
  func.func @transform_0(%arg0: i32) -> (i32, i32) {
    %c0_i32 = arith.constant 0 : i32
    %c0_i32_0 = arith.constant 0 : i32
    return %arg0, %c0_i32 : i32, i32
  }
  func.func @transform_1(%arg0: i32) -> (i32, i32) {
    %c0_i32 = arith.constant 0 : i32
    %c0_i32_0 = arith.constant 0 : i32
    return %arg0, %c0_i32 : i32, i32
  }
  func.func @transform_2(%arg0: i32) -> (i32, i32) {
    %c0_i32 = arith.constant 0 : i32
    %c0_i32_0 = arith.constant 0 : i32
    %c0_i32_1 = arith.constant 0 : i32
    return %c0_i32, %c0_i32_0 : i32, i32
  }
  func.func @transform_3(%arg0: i32) -> (i32, i32) {
    %c0_i32 = arith.constant 0 : i32
    %c0_i32_0 = arith.constant 0 : i32
    %c0_i32_1 = arith.constant 0 : i32
    return %c0_i32, %c0_i32_0 : i32, i32
  }
  func.func @transform_4(%arg0: i32) -> (i32, i32) {
    %c0_i32 = arith.constant 0 : i32
    %c0_i32_0 = arith.constant 0 : i32
    %c0_i32_1 = arith.constant 0 : i32
    return %c0_i32, %c0_i32_0 : i32, i32
  }
  func.func @transform_5(%arg0: i32) -> (i32, i32) {
    %c0_i32 = arith.constant 0 : i32
    %c0_i32_0 = arith.constant 0 : i32
    %c0_i32_1 = arith.constant 0 : i32
    return %c0_i32, %c0_i32_0 : i32, i32
  }
  func.func @transform_6(%arg0: i32) -> (i32, i32) {
    %c0_i32 = arith.constant 0 : i32
    %c0_i32_0 = arith.constant 0 : i32
    %c0_i32_1 = arith.constant 0 : i32
    return %c0_i32, %c0_i32_0 : i32, i32
  }
  func.func @transform_7(%arg0: i32) -> (i32, i32) {
    %c0_i32 = arith.constant 0 : i32
    %c0_i32_0 = arith.constant 0 : i32
    %c0_i32_1 = arith.constant 0 : i32
    return %c0_i32, %c0_i32_0 : i32, i32
  }
  func.func @transform_8(%arg0: i32) -> (i32, i32) {
    %c0_i32 = arith.constant 0 : i32
    %c0_i32_0 = arith.constant 0 : i32
    %c0_i32_1 = arith.constant 0 : i32
    return %c0_i32, %c0_i32_0 : i32, i32
  }
  func.func @transform_9(%arg0: i32) -> (i32, i32) {
    %c0_i32 = arith.constant 0 : i32
    %c0_i32_0 = arith.constant 0 : i32
    return %arg0, %c0_i32 : i32, i32
  }
  func.func @transform_10(%arg0: i32) -> (i32, i32) {
    %c0_i32 = arith.constant 0 : i32
    %c0_i32_0 = arith.constant 0 : i32
    return %arg0, %c0_i32 : i32, i32
  }
}

</mosaic_0001>

<llo_original>
// kernel: vae_forward.1
$region0: #{vae_forward.1}
  #allocation0 [shape = 'u32[]', space=smem, size = 0x4, offset = 0x4, fixed_abs, tag = 'smem constant byte address 0x4 - core index']
  #allocation1 [shape = 'u32[144,128]{1,0:T(1,128)}', space=vmem, size = 0x12000, scoped, tag = 'internal scratch']
  %s0 = inlined_call_operand.vmem [shape: f32[256,784], index: 0, kind: input, shape index: {}]
  %s1 = inlined_call_operand.vmem [shape: f32[256,32], index: 1, kind: input, shape index: {}]
  %s2 = inlined_call_operand.vmem [shape: bf16[784,128], index: 2, kind: input, shape index: {}]
  %s3 = inlined_call_operand.vmem [shape: bf16[128,64], index: 3, kind: input, shape index: {}]
  %s4 = inlined_call_operand.vmem [shape: bf16[64,64], index: 4, kind: input, shape index: {}]
  %s5 = inlined_call_operand.vmem [shape: bf16[32,64], index: 5, kind: input, shape index: {}]
  %s6 = inlined_call_operand.vmem [shape: bf16[64,128], index: 6, kind: input, shape index: {}]
  %s7 = inlined_call_operand.vmem [shape: bf16[128,784], index: 7, kind: input, shape index: {}]
  %s8 = inlined_call_operand.vmem [shape: f32[8,784], index: 8, kind: input, shape index: {}]
  %s9 = inlined_call_operand.vmem [shape: bf16[256,784], index: 9, kind: output, shape index: {0}]
  %s10 = inlined_call_operand.vmem [shape: f32[256,64], index: 10, kind: output, shape index: {1}]
  %11 = xla_tuple %s9, %s10
  %s12 = sld [smem:[#allocation0]]
  $region77: #{vae_forward.1} parent=0
    _
  %s14 = ssub.s32 1, %s12
  %s15 = scalar_select 0, %s14, %s12
  loop: start=0, step=1, limit=4
  $region2: #{vae_forward.1} parent=0 // loop_pre_header
    _
  $region3: #{vae_forward.1} parent=0 // loop_header
    %s17 = sphi 0, %s21
    %p18 = scmp.ge.s32.totalorder %s17, 4
    %s27 = sphi 0, %s29
    %s30 = sphi 0, %s27
    %s31 = sphi 0, %s30
    %s47 = sphi 0, %s31
    %s53 = sphi 0, %s55
    %s56 = sphi 0, %s53
    %s57 = sphi 0, %s56
    %s73 = sphi 0, %s57
    %s77 = sphi 0, %s77
    %s79 = sphi 0, %s77
    %s80 = sphi 0, %s79
    %s94 = sphi 0, %s80
    %s98 = sphi 0, %s98
    %s100 = sphi 0, %s98
    %s101 = sphi 0, %s100
    %s115 = sphi 0, %s101
    %s119 = sphi 0, %s119
    %s121 = sphi 0, %s119
    %s122 = sphi 0, %s121
    %s136 = sphi 0, %s122
    %s140 = sphi 0, %s140
    %s142 = sphi 0, %s140
    %s143 = sphi 0, %s142
    %s157 = sphi 0, %s143
    %s161 = sphi 0, %s161
    %s163 = sphi 0, %s161
    %s164 = sphi 0, %s163
    %s178 = sphi 0, %s164
    %s182 = sphi 0, %s182
    %s184 = sphi 0, %s182
    %s185 = sphi 0, %s184
    %s199 = sphi 0, %s185
    %s203 = sphi 0, %s203
    %s205 = sphi 0, %s203
    %s206 = sphi 0, %s205
    %s220 = sphi 0, %s206
    %s226 = sphi 0, %s228
    %s229 = sphi 0, %s226
    %s230 = sphi 0, %s229
    %s246 = sphi 0, %s230
    %s252 = sphi 0, %s254
    %s255 = sphi 0, %s252
    %s256 = sphi 0, %s255
    %s272 = sphi 0, %s256
  $region4: #{vae_forward.1} parent=0 // loop_header_branch
    %20 = sbr.rel (%p18) target = $region8
  $region5: #{vae_forward.1} parent=0 // loop_body
    %s22 = ssub.s32 %s17, 1
    %s23 = ssub.s32 %s17, 2
    %s24 = sadd.s32 %s17, 1
    %s25 = ssub.s32 %s17, %s24
    %p26 = scmp.eq.s32.totalorder %s25, 0
    %s28 = sadd.s32 %s27, 1
    %s29 = scalar_select %p26, %s27, %s28
    %p32 = pneg %p26
    %p33 = scmp.eq.s32.totalorder %s17, 1
    %p34 = por %p32, %p33
    %p35 = scmp.ne.s32.totalorder %s27, %s30
    %p36 = scmp.eq.s32.totalorder %s17, 0
    %p37 = por %p35, %p36
    %p38 = scmp.ne.s32.totalorder %s27, %s30
    %p39 = scmp.eq.s32.totalorder %s22, 1
    %p40 = por %p38, %p39
    %p41 = scmp.ne.s32.totalorder %s30, %s31
    %p42 = scmp.eq.s32.totalorder %s22, 0
    %p43 = por %p41, %p42
    %p44 = scmp.ne.s32.totalorder %s30, %s31
    %p45 = scmp.eq.s32.totalorder %s23, 1
    %p46 = por %p44, %p45
    %p48 = scmp.ne.s32.totalorder %s31, %s47
    %p49 = scmp.eq.s32.totalorder %s23, 0
    %p50 = por %p48, %p49
    %s51 = ssub.s32 %s17, %s24
    %p52 = scmp.eq.s32.totalorder %s51, 0
    %s54 = sadd.s32 %s53, 1
    %s55 = scalar_select %p52, %s53, %s54
    %p58 = pneg %p52
    %p59 = scmp.eq.s32.totalorder %s17, 1
    %p60 = por %p58, %p59
    %p61 = scmp.ne.s32.totalorder %s53, %s56
    %p62 = scmp.eq.s32.totalorder %s17, 0
    %p63 = por %p61, %p62
    %p64 = scmp.ne.s32.totalorder %s53, %s56
    %p65 = scmp.eq.s32.totalorder %s22, 1
    %p66 = por %p64, %p65
    %p67 = scmp.ne.s32.totalorder %s56, %s57
    %p68 = scmp.eq.s32.totalorder %s22, 0
    %p69 = por %p67, %p68
    %p70 = scmp.ne.s32.totalorder %s56, %s57
    %p71 = scmp.eq.s32.totalorder %s23, 1
    %p72 = por %p70, %p71
    %p74 = scmp.ne.s32.totalorder %s57, %s73
    %p75 = scmp.eq.s32.totalorder %s23, 0
    %p76 = por %p74, %p75
    %s78 = sadd.s32 %s77, 1
    %p81 = scmp.eq.s32.totalorder %s17, 1
    %p82 = scmp.ne.s32.totalorder %s77, %s79
    %p83 = scmp.eq.s32.totalorder %s17, 0
    %p84 = por %p82, %p83
    %p85 = scmp.ne.s32.totalorder %s77, %s79
    %p86 = scmp.eq.s32.totalorder %s22, 1
    %p87 = por %p85, %p86
    %p88 = scmp.ne.s32.totalorder %s79, %s80
    %p89 = scmp.eq.s32.totalorder %s22, 0
    %p90 = por %p88, %p89
    %p91 = scmp.ne.s32.totalorder %s79, %s80
    %p92 = scmp.eq.s32.totalorder %s23, 1
    %p93 = por %p91, %p92
    %p95 = scmp.ne.s32.totalorder %s80, %s94
    %p96 = scmp.eq.s32.totalorder %s23, 0
    %p97 = por %p95, %p96
    %s99 = sadd.s32 %s98, 1
    %p102 = scmp.eq.s32.totalorder %s17, 1
    %p103 = scmp.ne.s32.totalorder %s98, %s100
    %p104 = scmp.eq.s32.totalorder %s17, 0
    %p105 = por %p103, %p104
    %p106 = scmp.ne.s32.totalorder %s98, %s100
    %p107 = scmp.eq.s32.totalorder %s22, 1
    %p108 = por %p106, %p107
    %p109 = scmp.ne.s32.totalorder %s100, %s101
    %p110 = scmp.eq.s32.totalorder %s22, 0
    %p111 = por %p109, %p110
    %p112 = scmp.ne.s32.totalorder %s100, %s101
    %p113 = scmp.eq.s32.totalorder %s23, 1
    %p114 = por %p112, %p113
    %p116 = scmp.ne.s32.totalorder %s101, %s115
    %p117 = scmp.eq.s32.totalorder %s23, 0
    %p118 = por %p116, %p117
    %s120 = sadd.s32 %s119, 1
    %p123 = scmp.eq.s32.totalorder %s17, 1
    %p124 = scmp.ne.s32.totalorder %s119, %s121
    %p125 = scmp.eq.s32.totalorder %s17, 0
    %p126 = por %p124, %p125
    %p127 = scmp.ne.s32.totalorder %s119, %s121
    %p128 = scmp.eq.s32.totalorder %s22, 1
    %p129 = por %p127, %p128
    %p130 = scmp.ne.s32.totalorder %s121, %s122
    %p131 = scmp.eq.s32.totalorder %s22, 0
    %p132 = por %p130, %p131
    %p133 = scmp.ne.s32.totalorder %s121, %s122
    %p134 = scmp.eq.s32.totalorder %s23, 1
    %p135 = por %p133, %p134
    %p137 = scmp.ne.s32.totalorder %s122, %s136
    %p138 = scmp.eq.s32.totalorder %s23, 0
    %p139 = por %p137, %p138
    %s141 = sadd.s32 %s140, 1
    %p144 = scmp.eq.s32.totalorder %s17, 1
    %p145 = scmp.ne.s32.totalorder %s140, %s142
    %p146 = scmp.eq.s32.totalorder %s17, 0
    %p147 = por %p145, %p146
    %p148 = scmp.ne.s32.totalorder %s140, %s142
    %p149 = scmp.eq.s32.totalorder %s22, 1
    %p150 = por %p148, %p149
    %p151 = scmp.ne.s32.totalorder %s142, %s143
    %p152 = scmp.eq.s32.totalorder %s22, 0
    %p153 = por %p151, %p152
    %p154 = scmp.ne.s32.totalorder %s142, %s143
    %p155 = scmp.eq.s32.totalorder %s23, 1
    %p156 = por %p154, %p155
    %p158 = scmp.ne.s32.totalorder %s143, %s157
    %p159 = scmp.eq.s32.totalorder %s23, 0
    %p160 = por %p158, %p159
    %s162 = sadd.s32 %s161, 1
    %p165 = scmp.eq.s32.totalorder %s17, 1
    %p166 = scmp.ne.s32.totalorder %s161, %s163
    %p167 = scmp.eq.s32.totalorder %s17, 0
    %p168 = por %p166, %p167
    %p169 = scmp.ne.s32.totalorder %s161, %s163
    %p170 = scmp.eq.s32.totalorder %s22, 1
    %p171 = por %p169, %p170
    %p172 = scmp.ne.s32.totalorder %s163, %s164
    %p173 = scmp.eq.s32.totalorder %s22, 0
    %p174 = por %p172, %p173
    %p175 = scmp.ne.s32.totalorder %s163, %s164
    %p176 = scmp.eq.s32.totalorder %s23, 1
    %p177 = por %p175, %p176
    %p179 = scmp.ne.s32.totalorder %s164, %s178
    %p180 = scmp.eq.s32.totalorder %s23, 0
    %p181 = por %p179, %p180
    %s183 = sadd.s32 %s182, 1
    %p186 = scmp.eq.s32.totalorder %s17, 1
    %p187 = scmp.ne.s32.totalorder %s182, %s184
    %p188 = scmp.eq.s32.totalorder %s17, 0
    %p189 = por %p187, %p188
    %p190 = scmp.ne.s32.totalorder %s182, %s184
    %p191 = scmp.eq.s32.totalorder %s22, 1
    %p192 = por %p190, %p191
    %p193 = scmp.ne.s32.totalorder %s184, %s185
    %p194 = scmp.eq.s32.totalorder %s22, 0
    %p195 = por %p193, %p194
    %p196 = scmp.ne.s32.totalorder %s184, %s185
    %p197 = scmp.eq.s32.totalorder %s23, 1
    %p198 = por %p196, %p197
    %p200 = scmp.ne.s32.totalorder %s185, %s199
    %p201 = scmp.eq.s32.totalorder %s23, 0
    %p202 = por %p200, %p201
    %s204 = sadd.s32 %s203, 1
    %p207 = scmp.eq.s32.totalorder %s17, 1
    %p208 = scmp.ne.s32.totalorder %s203, %s205
    %p209 = scmp.eq.s32.totalorder %s17, 0
    %p210 = por %p208, %p209
    %p211 = scmp.ne.s32.totalorder %s203, %s205
    %p212 = scmp.eq.s32.totalorder %s22, 1
    %p213 = por %p211, %p212
    %p214 = scmp.ne.s32.totalorder %s205, %s206
    %p215 = scmp.eq.s32.totalorder %s22, 0
    %p216 = por %p214, %p215
    %p217 = scmp.ne.s32.totalorder %s205, %s206
    %p218 = scmp.eq.s32.totalorder %s23, 1
    %p219 = por %p217, %p218
    %p221 = scmp.ne.s32.totalorder %s206, %s220
    %p222 = scmp.eq.s32.totalorder %s23, 0
    %p223 = por %p221, %p222
    %s224 = ssub.s32 %s17, %s24
    %p225 = scmp.eq.s32.totalorder %s224, 0
    %s227 = sadd.s32 %s226, 1
    %s228 = scalar_select %p225, %s226, %s227
    %p231 = pneg %p225
    %p232 = scmp.eq.s32.totalorder %s17, 1
    %p233 = por %p231, %p232
    %p234 = scmp.ne.s32.totalorder %s226, %s229
    %p235 = scmp.eq.s32.totalorder %s17, 0
    %p236 = por %p234, %p235
    %p237 = scmp.ne.s32.totalorder %s226, %s229
    %p238 = scmp.eq.s32.totalorder %s22, 1
    %p239 = por %p237, %p238
    %p240 = scmp.ne.s32.totalorder %s229, %s230
    %p241 = scmp.eq.s32.totalorder %s22, 0
    %p242 = por %p240, %p241
    %p243 = scmp.ne.s32.totalorder %s229, %s230
    %p244 = scmp.eq.s32.totalorder %s23, 1
    %p245 = por %p243, %p244
    %p247 = scmp.ne.s32.totalorder %s230, %s246
    %p248 = scmp.eq.s32.totalorder %s23, 0
    %p249 = por %p247, %p248
    %s250 = ssub.s32 %s17, %s24
    %p251 = scmp.eq.s32.totalorder %s250, 0
    %s253 = sadd.s32 %s252, 1
    %s254 = scalar_select %p251, %s252, %s253
    %p257 = pneg %p251
    %p258 = scmp.eq.s32.totalorder %s17, 1
    %p259 = por %p257, %p258
    %p260 = scmp.ne.s32.totalorder %s252, %s255
    %p261 = scmp.eq.s32.totalorder %s17, 0
    %p262 = por %p260, %p261
    %p263 = scmp.ne.s32.totalorder %s252, %s255
    %p264 = scmp.eq.s32.totalorder %s22, 1
    %p265 = por %p263, %p264
    %p266 = scmp.ne.s32.totalorder %s255, %s256
    %p267 = scmp.eq.s32.totalorder %s22, 0
    %p268 = por %p266, %p267
    %p269 = scmp.ne.s32.totalorder %s255, %s256
    %p270 = scmp.eq.s32.totalorder %s23, 1
    %p271 = por %p269, %p270
    %p273 = scmp.ne.s32.totalorder %s256, %s272
    %p274 = scmp.eq.s32.totalorder %s23, 0
    %p275 = por %p273, %p274
    %p276 = scmp.le.s32.totalorder 1, %s17
    %p277 = scmp.lt.s32.totalorder %s17, 3
    %p278 = pnand %p276, %p277
    %p279 = pneg %p278
    // Predicated region
    $region9: #{vae_forward.1} parent=5 // pred_check
      _
    $region10: #{vae_forward.1} parent=5 // pred_check_branch
      %281 = sbr.rel (%p278) target = $region12
    $region11: #{vae_forward.1} parent=5 // pred_region
      %s282 = ssub.s32 %s17, 1
      // Predicated region
      $region13: #{vae_forward.1} parent=11 // pred_check
        %p283 = pneg %p90
      $region14: #{vae_forward.1} parent=11 // pred_check_branch
        %285 = sbr.rel (%p283) target = $region16
      $region15: #{vae_forward.1} parent=11 // pred_region
        _
      $region16: #{vae_forward.1} parent=11 // pred_fallthru
        _
      // Predicated region
      $region17: #{vae_forward.1} parent=11 // pred_check
        %p286 = pneg %p111
      $region18: #{vae_forward.1} parent=11 // pred_check_branch
        %288 = sbr.rel (%p286) target = $region20
      $region19: #{vae_forward.1} parent=11 // pred_region
        _
      $region20: #{vae_forward.1} parent=11 // pred_fallthru
        _
      // Predicated region
      $region21: #{vae_forward.1} parent=11 // pred_check
        %p289 = pneg %p132
      $region22: #{vae_forward.1} parent=11 // pred_check_branch
        %291 = sbr.rel (%p289) target = $region24
      $region23: #{vae_forward.1} parent=11 // pred_region
        _
      $region24: #{vae_forward.1} parent=11 // pred_fallthru
        _
      // Predicated region
      $region25: #{vae_forward.1} parent=11 // pred_check
        %p292 = pneg %p153
      $region26: #{vae_forward.1} parent=11 // pred_check_branch
        %294 = sbr.rel (%p292) target = $region28
      $region27: #{vae_forward.1} parent=11 // pred_region
        _
      $region28: #{vae_forward.1} parent=11 // pred_fallthru
        _
      // Predicated region
      $region29: #{vae_forward.1} parent=11 // pred_check
        %p295 = pneg %p174
      $region30: #{vae_forward.1} parent=11 // pred_check_branch
        %297 = sbr.rel (%p295) target = $region32
      $region31: #{vae_forward.1} parent=11 // pred_region
        _
      $region32: #{vae_forward.1} parent=11 // pred_fallthru
        _
      // Predicated region
      $region33: #{vae_forward.1} parent=11 // pred_check
        %p298 = pneg %p195
      $region34: #{vae_forward.1} parent=11 // pred_check_branch
        %300 = sbr.rel (%p298) target = $region36
      $region35: #{vae_forward.1} parent=11 // pred_region
        _
      $region36: #{vae_forward.1} parent=11 // pred_fallthru
        _
      // Predicated region
      $region37: #{vae_forward.1} parent=11 // pred_check
        %p301 = pneg %p216
      $region38: #{vae_forward.1} parent=11 // pred_check_branch
        %303 = sbr.rel (%p301) target = $region40
      $region39: #{vae_forward.1} parent=11 // pred_region
        _
      $region40: #{vae_forward.1} parent=11 // pred_fallthru
        _
    $region12: #{vae_forward.1} parent=5 // pred_fallthru
      _
    %p304 = scmp.lt.s32.totalorder %s17, 2
    // Predicated region
    $region41: #{vae_forward.1} parent=5 // pred_check
      %p305 = pneg %p304
    $region42: #{vae_forward.1} parent=5 // pred_check_branch
      %307 = sbr.rel (%p305) target = $region44
    $region43: #{vae_forward.1} parent=5 // pred_region
      // Predicated region
      $region45: #{vae_forward.1} parent=43 // pred_check
        %p308 = pneg %p37
      $region46: #{vae_forward.1} parent=43 // pred_check_branch
        %310 = sbr.rel (%p308) target = $region48
      $region47: #{vae_forward.1} parent=43 // pred_region
        %s311 = smul.u32 16, %s17
        %p312 = scmp.lt.s32.totalorder %s311, 31
        %s313 = scalar_select %p312, %s311, 31
        %s314 = smul.addr %s313, 7
        %s315 = smul.addr %s314, 8
        %s316 = scalar_lea.vmem %s0, %s315
        %s317 = smul.u32 16, %s17
      $region48: #{vae_forward.1} parent=43 // pred_fallthru
        _
      // Predicated region
      $region49: #{vae_forward.1} parent=43 // pred_check
        %p318 = pneg %p63
      $region50: #{vae_forward.1} parent=43 // pred_check_branch
        %320 = sbr.rel (%p318) target = $region52
      $region51: #{vae_forward.1} parent=43 // pred_region
        %s321 = smul.u32 16, %s17
        %p322 = scmp.lt.s32.totalorder %s321, 31
        %s323 = scalar_select %p322, %s321, 31
        %s324 = smul.addr %s323, 8
        %s325 = scalar_lea.vmem %s1, %s324
        %s326 = smul.u32 16, %s17
      $region52: #{vae_forward.1} parent=43 // pred_fallthru
        _
    $region44: #{vae_forward.1} parent=5 // pred_fallthru
      _
    %p327 = scmp.le.s32.totalorder 1, %s17
    %p328 = scmp.lt.s32.totalorder %s17, 3
    %p329 = pnand %p327, %p328
    %p330 = pneg %p329
    // Predicated region
    $region53: #{vae_forward.1} parent=5 // pred_check
      _
    $region54: #{vae_forward.1} parent=5 // pred_check_branch
      %332 = sbr.rel (%p329) target = $region56
    $region55: #{vae_forward.1} parent=5 // pred_region
      %s333 = ssub.s32 %s17, 1
      %s334 = smul.u32 16, %s22
      %p335 = scmp.lt.s32.totalorder %s334, 31
      %s336 = scalar_select %p335, %s334, 31
      %s337 = smul.addr %s336, 7
      %s338 = smul.addr %s337, 8
      %s339 = scalar_lea.vmem %s0, %s338
      %p340 = pneg %p43
      %p341 = pneg %p40
      %s342 = smul.u32 16, %s22
      %p343 = scmp.lt.s32.totalorder %s342, 31
      %s344 = scalar_select %p343, %s342, 31
      %s345 = smul.addr %s344, 8
      %s346 = scalar_lea.vmem %s1, %s345
      %p347 = pneg %p69
      %p348 = pneg %p66
      %p349 = pneg %p90
      %p350 = pneg %p87
      %p351 = pneg %p111
      %p352 = pneg %p108
      %p353 = pneg %p132
      %p354 = pneg %p129
      %p355 = pneg %p153
      %p356 = pneg %p150
      %p357 = pneg %p174
      %p358 = pneg %p171
      %p359 = pneg %p195
      %p360 = pneg %p192
      %p361 = pneg %p216
      %p362 = pneg %p213
      %p363 = pneg %p242
      %p364 = pneg %p239
      %s365 = smul.u32 16, %s22
      %p366 = scmp.lt.s32.totalorder %s365, 31
      %s367 = scalar_select %p366, %s365, 31
      %s368 = smul.addr %s367, 7
      %s369 = smul.addr %s368, 4
      %s370 = scalar_lea.vmem %s9, %s369
      %p371 = pneg %p268
      %p372 = pneg %p265
      %s373 = smul.u32 16, %s22
      %p374 = scmp.lt.s32.totalorder %s373, 31
      %s375 = scalar_select %p374, %s373, 31
      %s376 = smul.addr %s375, 8
      %s377 = scalar_lea.vmem %s10, %s376
      %s378 = smul.u32 16, %s22
      %p379 = scmp.lt.s32.totalorder %s378, 31
      %s380 = scalar_select %p379, %s378, 31
      %s381 = smul.addr %s380, 7
      %s382 = smul.addr %s381, 8
      %s383 = scalar_lea.vmem %s0, %s382
      %s384 = smul.u32 16, %s22
      %s385 = smul.u32 16, %s22
      %p386 = scmp.lt.s32.totalorder %s385, 31
      %s387 = scalar_select %p386, %s385, 31
      %s388 = smul.addr %s387, 8
      %s389 = scalar_lea.vmem %s1, %s388
      %s390 = smul.u32 16, %s22
      %s391 = smul.u32 16, %s22
      %p392 = scmp.lt.s32.totalorder %s391, 31
      %s393 = scalar_select %p392, %s391, 31
      %s394 = smul.addr %s393, 7
      %s395 = smul.addr %s394, 4
      %s396 = scalar_lea.vmem %s9, %s395
      %s397 = smul.u32 16, %s22
      %s398 = smul.u32 16, %s22
      %p399 = scmp.lt.s32.totalorder %s398, 31
      %s400 = scalar_select %p399, %s398, 31
      %s401 = smul.addr %s400, 8
      %s402 = scalar_lea.vmem %s10, %s401
      %s403 = smul.u32 16, %s22
      %v405 = vld [vmem:[%s8] sm:$0xff]
      %v406 = vld [vmem:[%s8 + $0x8] sm:$0xff]
      %v407 = vld [vmem:[%s8 + $0x10] sm:$0xff]
      %v408 = vld [vmem:[%s8 + $0x18] sm:$0xff]
      %v409 = vld [vmem:[%s8 + $0x20] sm:$0xff]
      %v410 = vld [vmem:[%s8 + $0x28] sm:$0xff]
      %v411 = vld [vmem:[%s8 + $0x30] sm:$0xff]
      %v412 = vld [vmem:[%s383] sm:$0xff]
      %v413 = vld [vmem:[%s383 + $0x8] sm:$0xff]
      %v414 = vld [vmem:[%s383 + $0x10] sm:$0xff]
      %v415 = vld [vmem:[%s383 + $0x18] sm:$0xff]
      %v416 = vld [vmem:[%s383 + $0x20] sm:$0xff]
      %v417 = vld [vmem:[%s383 + $0x28] sm:$0xff]
      %v418 = vld [vmem:[%s383 + $0x30] sm:$0xff]
      %v419 = vld [vmem:[%s383 + $0x38] sm:$0xff]
      %v420 = vld [vmem:[%s383 + $0x40] sm:$0xff]
      %v421 = vld [vmem:[%s383 + $0x48] sm:$0xff]
      %v422 = vld [vmem:[%s383 + $0x50] sm:$0xff]
      %v423 = vld [vmem:[%s383 + $0x58] sm:$0xff]
      %v424 = vld [vmem:[%s383 + $0x60] sm:$0xff]
      %v425 = vld [vmem:[%s383 + $0x68] sm:$0xff]
      %v426 = vld [vmem:[%s383 + $0x70] sm:$0xff]
      %v427 = vld [vmem:[%s383 + $0x78] sm:$0xff]
      %v428 = vld [vmem:[%s383 + $0x80] sm:$0xff]
      %v429 = vld [vmem:[%s383 + $0x88] sm:$0xff]
      %v430 = vld [vmem:[%s383 + $0x90] sm:$0xff]
      %v431 = vld [vmem:[%s383 + $0x98] sm:$0xff]
      %v432 = vld [vmem:[%s383 + $0xa0] sm:$0xff]
      %v433 = vld [vmem:[%s383 + $0xa8] sm:$0xff]
      %v434 = vld [vmem:[%s383 + $0xb0] sm:$0xff]
      %v435 = vld [vmem:[%s383 + $0xb8] sm:$0xff]
      %v436 = vld [vmem:[%s383 + $0xc0] sm:$0xff]
      %v437 = vld [vmem:[%s383 + $0xc8] sm:$0xff]
      %v438 = vld [vmem:[%s383 + $0xd0] sm:$0xff]
      %v439 = vld [vmem:[%s383 + $0xd8] sm:$0xff]
      %v440 = vld [vmem:[%s383 + $0xe0] sm:$0xff]
      %v441 = vld [vmem:[%s383 + $0xe8] sm:$0xff]
      %v442 = vld [vmem:[%s383 + $0xf0] sm:$0xff]
      %v443 = vld [vmem:[%s383 + $0xf8] sm:$0xff]
      %v444 = vld [vmem:[%s383 + $0x100] sm:$0xff]
      %v445 = vld [vmem:[%s383 + $0x108] sm:$0xff]
      %v446 = vld [vmem:[%s383 + $0x110] sm:$0xff]
      %v447 = vld [vmem:[%s383 + $0x118] sm:$0xff]
      %v448 = vld [vmem:[%s383 + $0x120] sm:$0xff]
      %v449 = vld [vmem:[%s383 + $0x128] sm:$0xff]
      %v450 = vld [vmem:[%s383 + $0x130] sm:$0xff]
      %v451 = vld [vmem:[%s383 + $0x138] sm:$0xff]
      %v452 = vld [vmem:[%s383 + $0x140] sm:$0xff]
      %v453 = vld [vmem:[%s383 + $0x148] sm:$0xff]
      %v454 = vld [vmem:[%s383 + $0x150] sm:$0xff]
      %v455 = vld [vmem:[%s383 + $0x158] sm:$0xff]
      %v456 = vld [vmem:[%s383 + $0x160] sm:$0xff]
      %v457 = vld [vmem:[%s383 + $0x168] sm:$0xff]
      %v458 = vld [vmem:[%s383 + $0x170] sm:$0xff]
      %v459 = vld [vmem:[%s383 + $0x178] sm:$0xff]
      %v460 = vld [vmem:[%s383 + $0x180] sm:$0xff]
      %v461 = vld [vmem:[%s383 + $0x188] sm:$0xff]
      %v462 = vld [vmem:[%s383 + $0x190] sm:$0xff]
      %v463 = vld [vmem:[%s383 + $0x198] sm:$0xff]
      %v464 = vld [vmem:[%s383 + $0x1a0] sm:$0xff]
      %v465 = vld [vmem:[%s383 + $0x1a8] sm:$0xff]
      %v466 = vld [vmem:[%s383 + $0x1b0] sm:$0xff]
      %v467 = vld [vmem:[%s383 + $0x1b8] sm:$0xff]
      %v468 = vld [vmem:[%s383 + $0x1c0] sm:$0xff]
      %v469 = vld [vmem:[%s383 + $0x1c8] sm:$0xff]
      %v470 = vld [vmem:[%s383 + $0x1d0] sm:$0xff]
      %v471 = vld [vmem:[%s383 + $0x1d8] sm:$0xff]
      %v472 = vld [vmem:[%s383 + $0x1e0] sm:$0xff]
      %v473 = vld [vmem:[%s383 + $0x1e8] sm:$0xff]
      %v474 = vld [vmem:[%s383 + $0x1f0] sm:$0xff]
      %v475 = vld [vmem:[%s383 + $0x1f8] sm:$0xff]
      %v476 = vld [vmem:[%s383 + $0x200] sm:$0xff]
      %v477 = vld [vmem:[%s383 + $0x208] sm:$0xff]
      %v478 = vld [vmem:[%s383 + $0x210] sm:$0xff]
      %v479 = vld [vmem:[%s383 + $0x218] sm:$0xff]
      %v480 = vld [vmem:[%s383 + $0x220] sm:$0xff]
      %v481 = vld [vmem:[%s383 + $0x228] sm:$0xff]
      %v482 = vld [vmem:[%s383 + $0x230] sm:$0xff]
      %v483 = vld [vmem:[%s383 + $0x238] sm:$0xff]
      %v484 = vld [vmem:[%s383 + $0x240] sm:$0xff]
      %v485 = vld [vmem:[%s383 + $0x248] sm:$0xff]
      %v486 = vld [vmem:[%s383 + $0x250] sm:$0xff]
      %v487 = vld [vmem:[%s383 + $0x258] sm:$0xff]
      %v488 = vld [vmem:[%s383 + $0x260] sm:$0xff]
      %v489 = vld [vmem:[%s383 + $0x268] sm:$0xff]
      %v490 = vld [vmem:[%s383 + $0x270] sm:$0xff]
      %v491 = vld [vmem:[%s383 + $0x278] sm:$0xff]
      %v492 = vld [vmem:[%s383 + $0x280] sm:$0xff]
      %v493 = vld [vmem:[%s383 + $0x288] sm:$0xff]
      %v494 = vld [vmem:[%s383 + $0x290] sm:$0xff]
      %v495 = vld [vmem:[%s383 + $0x298] sm:$0xff]
      %v496 = vld [vmem:[%s383 + $0x2a0] sm:$0xff]
      %v497 = vld [vmem:[%s383 + $0x2a8] sm:$0xff]
      %v498 = vld [vmem:[%s383 + $0x2b0] sm:$0xff]
      %v499 = vld [vmem:[%s383 + $0x2b8] sm:$0xff]
      %v500 = vld [vmem:[%s383 + $0x2c0] sm:$0xff]
      %v501 = vld [vmem:[%s383 + $0x2c8] sm:$0xff]
      %v502 = vld [vmem:[%s383 + $0x2d0] sm:$0xff]
      %v503 = vld [vmem:[%s383 + $0x2d8] sm:$0xff]
      %v504 = vld [vmem:[%s383 + $0x2e0] sm:$0xff]
      %v505 = vld [vmem:[%s383 + $0x2e8] sm:$0xff]
      %v506 = vld [vmem:[%s383 + $0x2f0] sm:$0xff]
      %v507 = vld [vmem:[%s383 + $0x2f8] sm:$0xff]
      %v508 = vld [vmem:[%s383 + $0x300] sm:$0xff]
      %v509 = vld [vmem:[%s383 + $0x308] sm:$0xff]
      %v510 = vld [vmem:[%s383 + $0x310] sm:$0xff]
      %v511 = vld [vmem:[%s383 + $0x318] sm:$0xff]
      %v512 = vld [vmem:[%s383 + $0x320] sm:$0xff]
      %v513 = vld [vmem:[%s383 + $0x328] sm:$0xff]
      %v514 = vld [vmem:[%s383 + $0x330] sm:$0xff]
      %v515 = vld [vmem:[%s383 + $0x338] sm:$0xff]
      %v516 = vld [vmem:[%s383 + $0x340] sm:$0xff]
      %v517 = vld [vmem:[%s383 + $0x348] sm:$0xff]
      %v518 = vld [vmem:[%s383 + $0x350] sm:$0xff]
      %v519 = vld [vmem:[%s383 + $0x358] sm:$0xff]
      %v520 = vld [vmem:[%s383 + $0x360] sm:$0xff]
      %v521 = vld [vmem:[%s383 + $0x368] sm:$0xff]
      %v522 = vld [vmem:[%s383 + $0x370] sm:$0xff]
      %v523 = vld [vmem:[%s383 + $0x378] sm:$0xff]
      %v524 = vpack.c.bf16 %v419, %v412
      %v525 = vpack.c.bf16 %v420, %v413
      %v526 = vpack.c.bf16 %v421, %v414
      %v527 = vpack.c.bf16 %v422, %v415
      %v528 = vpack.c.bf16 %v423, %v416
      %v529 = vpack.c.bf16 %v424, %v417
      %v530 = vpack.c.bf16 %v425, %v418
      %v531 = vpack.c.bf16 %v433, %v426
      %v532 = vpack.c.bf16 %v434, %v427
      %v533 = vpack.c.bf16 %v435, %v428
      %v534 = vpack.c.bf16 %v436, %v429
      %v535 = vpack.c.bf16 %v437, %v430
      %v536 = vpack.c.bf16 %v438, %v431
      %v537 = vpack.c.bf16 %v439, %v432
      %v538 = vpack.c.bf16 %v447, %v440
      %v539 = vpack.c.bf16 %v448, %v441
      %v540 = vpack.c.bf16 %v449, %v442
      %v541 = vpack.c.bf16 %v450, %v443
      %v542 = vpack.c.bf16 %v451, %v444
      %v543 = vpack.c.bf16 %v452, %v445
      %v544 = vpack.c.bf16 %v453, %v446
      %v545 = vpack.c.bf16 %v461, %v454
      %v546 = vpack.c.bf16 %v462, %v455
      %v547 = vpack.c.bf16 %v463, %v456
      %v548 = vpack.c.bf16 %v464, %v457
      %v549 = vpack.c.bf16 %v465, %v458
      %v550 = vpack.c.bf16 %v466, %v459
      %v551 = vpack.c.bf16 %v467, %v460
      %v552 = vpack.c.bf16 %v475, %v468
      %v553 = vpack.c.bf16 %v476, %v469
      %v554 = vpack.c.bf16 %v477, %v470
      %v555 = vpack.c.bf16 %v478, %v471
      %v556 = vpack.c.bf16 %v479, %v472
      %v557 = vpack.c.bf16 %v480, %v473
      %v558 = vpack.c.bf16 %v481, %v474
      %v559 = vpack.c.bf16 %v489, %v482
      %v560 = vpack.c.bf16 %v490, %v483
      %v561 = vpack.c.bf16 %v491, %v484
      %v562 = vpack.c.bf16 %v492, %v485
      %v563 = vpack.c.bf16 %v493, %v486
      %v564 = vpack.c.bf16 %v494, %v487
      %v565 = vpack.c.bf16 %v495, %v488
      %v566 = vpack.c.bf16 %v503, %v496
      %v567 = vpack.c.bf16 %v504, %v497
      %v568 = vpack.c.bf16 %v505, %v498
      %v569 = vpack.c.bf16 %v506, %v499
      %v570 = vpack.c.bf16 %v507, %v500
      %v571 = vpack.c.bf16 %v508, %v501
      %v572 = vpack.c.bf16 %v509, %v502
      %v573 = vpack.c.bf16 %v517, %v510
      %v574 = vpack.c.bf16 %v518, %v511
      %v575 = vpack.c.bf16 %v519, %v512
      %v576 = vpack.c.bf16 %v520, %v513
      %v577 = vpack.c.bf16 %v521, %v514
      %v578 = vpack.c.bf16 %v522, %v515
      %v579 = vpack.c.bf16 %v523, %v516
      %v580 = vld [vmem:[%s2] sm:$0xf]
      %v581 = vld [vmem:[%s2 + $0x4] sm:$0xf]
      %v582 = vld [vmem:[%s2 + $0x8] sm:$0xf]
      %v583 = vld [vmem:[%s2 + $0xc] sm:$0xf]
      %v584 = vld [vmem:[%s2 + $0x10] sm:$0xf]
      %v585 = vld [vmem:[%s2 + $0x14] sm:$0xf]
      %v586 = vld [vmem:[%s2 + $0x18] sm:$0xf]
      %v587 = vld [vmem:[%s2 + $0x1c] sm:$0xf]
      %v588 = vld [vmem:[%s2 + $0x20] sm:$0xf]
      %v589 = vld [vmem:[%s2 + $0x24] sm:$0xf]
      %v590 = vld [vmem:[%s2 + $0x28] sm:$0xf]
      %v591 = vld [vmem:[%s2 + $0x2c] sm:$0xf]
      %v592 = vld [vmem:[%s2 + $0x30] sm:$0xf]
      %v593 = vld [vmem:[%s2 + $0x34] sm:$0xf]
      %v594 = vld [vmem:[%s2 + $0x38] sm:$0xf]
      %v595 = vld [vmem:[%s2 + $0x3c] sm:$0xf]
      %v596 = vld [vmem:[%s2 + $0x40] sm:$0xf]
      %v597 = vld [vmem:[%s2 + $0x44] sm:$0xf]
      %v598 = vld [vmem:[%s2 + $0x48] sm:$0xf]
      %v599 = vld [vmem:[%s2 + $0x4c] sm:$0xf]
      %v600 = vld [vmem:[%s2 + $0x50] sm:$0xf]
      %v601 = vld [vmem:[%s2 + $0x54] sm:$0xf]
      %v602 = vld [vmem:[%s2 + $0x58] sm:$0xf]
      %v603 = vld [vmem:[%s2 + $0x5c] sm:$0xf]
      %v604 = vld [vmem:[%s2 + $0x60] sm:$0xf]
      %v605 = vld [vmem:[%s2 + $0x64] sm:$0xf]
      %v606 = vld [vmem:[%s2 + $0x68] sm:$0xf]
      %v607 = vld [vmem:[%s2 + $0x6c] sm:$0xf]
      %v608 = vld [vmem:[%s2 + $0x70] sm:$0xf]
      %v609 = vld [vmem:[%s2 + $0x74] sm:$0xf]
      %v610 = vld [vmem:[%s2 + $0x78] sm:$0xf]
      %v611 = vld [vmem:[%s2 + $0x7c] sm:$0xf]
      %v612 = vld [vmem:[%s2 + $0x80] sm:$0xf]
      %v613 = vld [vmem:[%s2 + $0x84] sm:$0xf]
      %v614 = vld [vmem:[%s2 + $0x88] sm:$0xf]
      %v615 = vld [vmem:[%s2 + $0x8c] sm:$0xf]
      %v616 = vld [vmem:[%s2 + $0x90] sm:$0xf]
      %v617 = vld [vmem:[%s2 + $0x94] sm:$0xf]
      %v618 = vld [vmem:[%s2 + $0x98] sm:$0xf]
      %v619 = vld [vmem:[%s2 + $0x9c] sm:$0xf]
      %v620 = vld [vmem:[%s2 + $0xa0] sm:$0xf]
      %v621 = vld [vmem:[%s2 + $0xa4] sm:$0xf]
      %v622 = vld [vmem:[%s2 + $0xa8] sm:$0xf]
      %v623 = vld [vmem:[%s2 + $0xac] sm:$0xf]
      %v624 = vld [vmem:[%s2 + $0xb0] sm:$0xf]
      %v625 = vld [vmem:[%s2 + $0xb4] sm:$0xf]
      %v626 = vld [vmem:[%s2 + $0xb8] sm:$0xf]
      %v627 = vld [vmem:[%s2 + $0xbc] sm:$0xf]
      %v628 = vld [vmem:[%s2 + $0xc0] sm:$0xf]
      %v629 = vld [vmem:[%s2 + $0xc4] sm:$0xf]
      %v630 = vld [vmem:[%s2 + $0xc8] sm:$0xf]
      %v631 = vld [vmem:[%s2 + $0xcc] sm:$0xf]
      %v632 = vld [vmem:[%s2 + $0xd0] sm:$0xf]
      %v633 = vld [vmem:[%s2 + $0xd4] sm:$0xf]
      %v634 = vld [vmem:[%s2 + $0xd8] sm:$0xf]
      %v635 = vld [vmem:[%s2 + $0xdc] sm:$0xf]
      %v636 = vld [vmem:[%s2 + $0xe0] sm:$0xf]
      %v637 = vld [vmem:[%s2 + $0xe4] sm:$0xf]
      %v638 = vld [vmem:[%s2 + $0xe8] sm:$0xf]
      %v639 = vld [vmem:[%s2 + $0xec] sm:$0xf]
      %v640 = vld [vmem:[%s2 + $0xf0] sm:$0xf]
      %v641 = vld [vmem:[%s2 + $0xf4] sm:$0xf]
      %v642 = vld [vmem:[%s2 + $0xf8] sm:$0xf]
      %v643 = vld [vmem:[%s2 + $0xfc] sm:$0xf]
      %v644 = vld [vmem:[%s2 + $0x100] sm:$0xf]
      %v645 = vld [vmem:[%s2 + $0x104] sm:$0xf]
      %v646 = vld [vmem:[%s2 + $0x108] sm:$0xf]
      %v647 = vld [vmem:[%s2 + $0x10c] sm:$0xf]
      %v648 = vld [vmem:[%s2 + $0x110] sm:$0xf]
      %v649 = vld [vmem:[%s2 + $0x114] sm:$0xf]
      %v650 = vld [vmem:[%s2 + $0x118] sm:$0xf]
      %v651 = vld [vmem:[%s2 + $0x11c] sm:$0xf]
      %v652 = vld [vmem:[%s2 + $0x120] sm:$0xf]
      %v653 = vld [vmem:[%s2 + $0x124] sm:$0xf]
      %v654 = vld [vmem:[%s2 + $0x128] sm:$0xf]
      %v655 = vld [vmem:[%s2 + $0x12c] sm:$0xf]
      %v656 = vld [vmem:[%s2 + $0x130] sm:$0xf]
      %v657 = vld [vmem:[%s2 + $0x134] sm:$0xf]
      %v658 = vld [vmem:[%s2 + $0x138] sm:$0xf]
      %v659 = vld [vmem:[%s2 + $0x13c] sm:$0xf]
      %v660 = vld [vmem:[%s2 + $0x140] sm:$0xf]
      %v661 = vld [vmem:[%s2 + $0x144] sm:$0xf]
      %v662 = vld [vmem:[%s2 + $0x148] sm:$0xf]
      %v663 = vld [vmem:[%s2 + $0x14c] sm:$0xf]
      %v664 = vld [vmem:[%s2 + $0x150] sm:$0xf]
      %v665 = vld [vmem:[%s2 + $0x154] sm:$0xf]
      %v666 = vld [vmem:[%s2 + $0x158] sm:$0xf]
      %v667 = vld [vmem:[%s2 + $0x15c] sm:$0xf]
      %v668 = vld [vmem:[%s2 + $0x160] sm:$0xf]
      %v669 = vld [vmem:[%s2 + $0x164] sm:$0xf]
      %v670 = vld [vmem:[%s2 + $0x168] sm:$0xf]
      %v671 = vld [vmem:[%s2 + $0x16c] sm:$0xf]
      %v672 = vld [vmem:[%s2 + $0x170] sm:$0xf]
      %v673 = vld [vmem:[%s2 + $0x174] sm:$0xf]
      %v674 = vld [vmem:[%s2 + $0x178] sm:$0xf]
      %v675 = vld [vmem:[%s2 + $0x17c] sm:$0xf]
      %v676 = vld [vmem:[%s2 + $0x180] sm:$0xf]
      %v677 = vld [vmem:[%s2 + $0x184] sm:$0xf]
      %v678 = vlaneseq
      %v679 = vshrl.u32 %v678, 7
      %v680 = vsub.s32 0, %v679
      %v681 = vrot.slane %v405, %v680
      %v780 = vunpack.c.l.b16 %v580
      %v781 = vunpack.c.l.b16 %v581
      %v782 = vunpack.c.l.b16 %v582
      %v783 = vunpack.c.l.b16 %v583
      %v784 = vunpack.c.l.b16 %v584
      %v785 = vunpack.c.l.b16 %v585
      %v786 = vunpack.c.l.b16 %v586
      %v787 = vunpack.c.l.b16 %v587
      %v788 = vunpack.c.l.b16 %v588
      %v789 = vunpack.c.l.b16 %v589
      %v790 = vunpack.c.l.b16 %v590
      %v791 = vunpack.c.l.b16 %v591
      %v792 = vunpack.c.l.b16 %v592
      %v793 = vunpack.c.l.b16 %v593
      %v794 = vunpack.c.l.b16 %v594
      %v795 = vunpack.c.l.b16 %v595
      %v796 = vunpack.c.l.b16 %v596
      %v797 = vunpack.c.l.b16 %v597
      %v798 = vunpack.c.l.b16 %v598
      %v799 = vunpack.c.l.b16 %v599
      %v800 = vunpack.c.l.b16 %v600
      %v801 = vunpack.c.l.b16 %v601
      %v802 = vunpack.c.l.b16 %v602
      %v803 = vunpack.c.l.b16 %v603
      %v804 = vunpack.c.l.b16 %v604
      %v805 = vunpack.c.l.b16 %v605
      %v806 = vunpack.c.l.b16 %v606
      %v807 = vunpack.c.l.b16 %v607
      %v808 = vunpack.c.l.b16 %v608
      %v809 = vunpack.c.l.b16 %v609
      %v810 = vunpack.c.l.b16 %v610
      %v811 = vunpack.c.l.b16 %v611
      %v812 = vunpack.c.l.b16 %v612
      %v813 = vunpack.c.l.b16 %v613
      %v814 = vunpack.c.l.b16 %v614
      %v815 = vunpack.c.l.b16 %v615
      %v816 = vunpack.c.l.b16 %v616
      %v817 = vunpack.c.l.b16 %v617
      %v818 = vunpack.c.l.b16 %v618
      %v819 = vunpack.c.l.b16 %v619
      %v820 = vunpack.c.l.b16 %v620
      %v821 = vunpack.c.l.b16 %v621
      %v822 = vunpack.c.l.b16 %v622
      %v823 = vunpack.c.l.b16 %v623
      %v824 = vunpack.c.l.b16 %v624
      %v825 = vunpack.c.l.b16 %v625
      %v826 = vunpack.c.l.b16 %v626
      %v827 = vunpack.c.l.b16 %v627
      %v828 = vunpack.c.l.b16 %v628
      %v829 = vunpack.c.l.b16 %v629
      %v830 = vunpack.c.l.b16 %v630
      %v831 = vunpack.c.l.b16 %v631
      %v832 = vunpack.c.l.b16 %v632
      %v833 = vunpack.c.l.b16 %v633
      %v834 = vunpack.c.l.b16 %v634
      %v835 = vunpack.c.l.b16 %v635
      %v836 = vunpack.c.l.b16 %v636
      %v837 = vunpack.c.l.b16 %v637
      %v838 = vunpack.c.l.b16 %v638
      %v839 = vunpack.c.l.b16 %v639
      %v840 = vunpack.c.l.b16 %v640
      %v841 = vunpack.c.l.b16 %v641
      %v842 = vunpack.c.l.b16 %v642
      %v843 = vunpack.c.l.b16 %v643
      %v844 = vunpack.c.l.b16 %v644
      %v845 = vunpack.c.l.b16 %v645
      %v846 = vunpack.c.l.b16 %v646
      %v847 = vunpack.c.l.b16 %v647
      %v848 = vunpack.c.l.b16 %v648
      %v849 = vunpack.c.l.b16 %v649
      %v850 = vunpack.c.l.b16 %v650
      %v851 = vunpack.c.l.b16 %v651
      %v852 = vunpack.c.l.b16 %v652
      %v853 = vunpack.c.l.b16 %v653
      %v854 = vunpack.c.l.b16 %v654
      %v855 = vunpack.c.l.b16 %v655
      %v856 = vunpack.c.l.b16 %v656
      %v857 = vunpack.c.l.b16 %v657
      %v858 = vunpack.c.l.b16 %v658
      %v859 = vunpack.c.l.b16 %v659
      %v860 = vunpack.c.l.b16 %v660
      %v861 = vunpack.c.l.b16 %v661
      %v862 = vunpack.c.l.b16 %v662
      %v863 = vunpack.c.l.b16 %v663
      %v864 = vunpack.c.l.b16 %v664
      %v865 = vunpack.c.l.b16 %v665
      %v866 = vunpack.c.l.b16 %v666
      %v867 = vunpack.c.l.b16 %v667
      %v868 = vunpack.c.l.b16 %v668
      %v869 = vunpack.c.l.b16 %v669
      %v870 = vunpack.c.l.b16 %v670
      %v871 = vunpack.c.l.b16 %v671
      %v872 = vunpack.c.l.b16 %v672
      %v873 = vunpack.c.l.b16 %v673
      %v874 = vunpack.c.l.b16 %v674
      %v875 = vunpack.c.l.b16 %v675
      %v876 = vunpack.c.l.b16 %v676
      %v877 = vunpack.c.l.b16 %v677
      %v878 = vpack.c.b16 %v781, %v780
      %v879 = vpack.c.b16 %v783, %v782
      %v880 = vpack.c.b16 %v785, %v784
      %v881 = vpack.c.b16 %v787, %v786
      %v882 = vpack.c.b16 %v789, %v788
      %v883 = vpack.c.b16 %v791, %v790
      %v884 = vpack.c.b16 %v793, %v792
      %v885 = vpack.c.b16 %v795, %v794
      %v886 = vpack.c.b16 %v797, %v796
      %v887 = vpack.c.b16 %v799, %v798
      %v888 = vpack.c.b16 %v801, %v800
      %v889 = vpack.c.b16 %v803, %v802
      %v890 = vpack.c.b16 %v805, %v804
      %v891 = vpack.c.b16 %v807, %v806
      %v892 = vpack.c.b16 %v809, %v808
      %v893 = vpack.c.b16 %v811, %v810
      %v894 = vpack.c.b16 %v813, %v812
      %v895 = vpack.c.b16 %v815, %v814
      %v896 = vpack.c.b16 %v817, %v816
      %v897 = vpack.c.b16 %v819, %v818
      %v898 = vpack.c.b16 %v821, %v820
      %v899 = vpack.c.b16 %v823, %v822
      %v900 = vpack.c.b16 %v825, %v824
      %v901 = vpack.c.b16 %v827, %v826
      %v902 = vpack.c.b16 %v829, %v828
      %v903 = vpack.c.b16 %v831, %v830
      %v904 = vpack.c.b16 %v833, %v832
      %v905 = vpack.c.b16 %v835, %v834
      %v906 = vpack.c.b16 %v837, %v836
      %v907 = vpack.c.b16 %v839, %v838
      %v908 = vpack.c.b16 %v841, %v840
      %v909 = vpack.c.b16 %v843, %v842
      %v910 = vpack.c.b16 %v845, %v844
      %v911 = vpack.c.b16 %v847, %v846
      %v912 = vpack.c.b16 %v849, %v848
      %v913 = vpack.c.b16 %v851, %v850
      %v914 = vpack.c.b16 %v853, %v852
      %v915 = vpack.c.b16 %v855, %v854
      %v916 = vpack.c.b16 %v857, %v856
      %v917 = vpack.c.b16 %v859, %v858
      %v918 = vpack.c.b16 %v861, %v860
      %v919 = vpack.c.b16 %v863, %v862
      %v920 = vpack.c.b16 %v865, %v864
      %v921 = vpack.c.b16 %v867, %v866
      %v922 = vpack.c.b16 %v869, %v868
      %v923 = vpack.c.b16 %v871, %v870
      %v924 = vpack.c.b16 %v873, %v872
      %v925 = vpack.c.b16 %v875, %v874
      %v926 = vpack.c.b16 %v877, %v876
      %vm976 = vcmask 130048
      %v978 = vsel %vm976, %v530, 0
      %v981 = vsel %vm976, %v537, 0
      %v984 = vsel %vm976, %v544, 0
      %v987 = vsel %vm976, %v551, 0
      %v990 = vsel %vm976, %v558, 0
      %v993 = vsel %vm976, %v565, 0
      %v996 = vsel %vm976, %v572, 0
      %v999 = vsel %vm976, %v579, 0
      %1001 = vmatprep.subr.bf16.mxu0 0
      %1002 = vmatpush1.bf16.msra.mxu0 %v885
      %1003 = vmatprep.subr.bf16.mxu0 0
      %1004 = vmatpush1.bf16.msra.mxu0 %v884
      %1005 = vmatprep.subr.bf16.mxu0 0
      %1006 = vmatpush1.bf16.msra.mxu0 %v883
      %1007 = vmatprep.subr.bf16.mxu0 0
      %1008 = vmatpush1.bf16.msra.mxu0 %v882
      %1009 = vmatprep.subr.bf16.mxu0 0
      %1010 = vmatpush1.bf16.msra.mxu0 %v881
      %1011 = vmatprep.subr.bf16.mxu0 0
      %1012 = vmatpush1.bf16.msra.mxu0 %v880
      %1013 = vmatprep.subr.bf16.mxu0 0
      %1014 = vmatpush1.bf16.msra.mxu0 %v879
      %1015 = vmatprep.subr.bf16.mxu0 0
      %1016 = vmatpush1.bf16.msra.mxu0 %v878
      %1017 = vmatprep.subr.bf16.mxu0 0
      %1018 = vmatpush2.bf16.msra.mxu0 %v893
      %1019 = vmatprep.subr.bf16.mxu0 0
      %1020 = vmatpush2.bf16.msra.mxu0 %v892
      %1021 = vmatprep.subr.bf16.mxu0 0
      %1022 = vmatpush2.bf16.msra.mxu0 %v891
      %1023 = vmatprep.subr.bf16.mxu0 0
      %1024 = vmatpush2.bf16.msra.mxu0 %v890
      %1025 = vmatprep.subr.bf16.mxu0 0
      %1026 = vmatpush2.bf16.msra.mxu0 %v889
      %1027 = vmatprep.subr.bf16.mxu0 0
      %1028 = vmatpush2.bf16.msra.mxu0 %v888
      %1029 = vmatprep.subr.bf16.mxu0 0
      %1030 = vmatpush2.bf16.msra.mxu0 %v887
      %1031 = vmatprep.subr.bf16.mxu0 0
      %1032 = vmatpush2.bf16.msra.mxu0 %v886
      %1033 = vmatprep.mubr.bf16.mxu0 %v525
      %1034 = vmatmul.mubr.bf16.gmra.mxu0 %v524
      %v1035 = vpop.f32.mrf.mxu0
      %v1036 = vadd.f32 %v681, %v1035
      %v1037 = vpop.f32.mrf.mxu0
      %v1038 = vpop.f32.mrf.mxu0
      %v1039 = vadd.f32 %v681, %v1038
      %v1040 = vpop.f32.mrf.mxu0
      %1041 = vmatprep.mubr.bf16.mxu0 %v532
      %1042 = vmatmul.mubr.bf16.gmra.mxu0 %v531
      %v1043 = vpop.f32.mrf.mxu0
      %v1044 = vadd.f32 %v681, %v1043
      %v1045 = vpop.f32.mrf.mxu0
      %v1046 = vpop.f32.mrf.mxu0
      %v1047 = vadd.f32 %v681, %v1046
      %v1048 = vpop.f32.mrf.mxu0
      %1049 = vmatprep.mubr.bf16.mxu0 %v539
      %1050 = vmatmul.mubr.bf16.gmra.mxu0 %v538
      %v1051 = vpop.f32.mrf.mxu0
      %v1052 = vadd.f32 %v681, %v1051
      %v1053 = vpop.f32.mrf.mxu0
      %v1054 = vpop.f32.mrf.mxu0
      %v1055 = vadd.f32 %v681, %v1054
      %v1056 = vpop.f32.mrf.mxu0
      %1057 = vmatprep.mubr.bf16.mxu0 %v546
      %1058 = vmatmul.mubr.bf16.gmra.mxu0 %v545
      %v1059 = vpop.f32.mrf.mxu0
      %v1060 = vadd.f32 %v681, %v1059
      %v1061 = vpop.f32.mrf.mxu0
      %v1062 = vpop.f32.mrf.mxu0
      %v1063 = vadd.f32 %v681, %v1062
      %v1064 = vpop.f32.mrf.mxu0
      %1065 = vmatprep.mubr.bf16.mxu0 %v553
      %1066 = vmatmul.mubr.bf16.gmra.mxu0 %v552
      %v1067 = vpop.f32.mrf.mxu0
      %v1068 = vadd.f32 %v681, %v1067
      %v1069 = vpop.f32.mrf.mxu0
      %v1070 = vpop.f32.mrf.mxu0
      %v1071 = vadd.f32 %v681, %v1070
      %v1072 = vpop.f32.mrf.mxu0
      %1073 = vmatprep.mubr.bf16.mxu0 %v560
      %1074 = vmatmul.mubr.bf16.gmra.mxu0 %v559
      %v1075 = vpop.f32.mrf.mxu0
      %v1076 = vadd.f32 %v681, %v1075
      %v1077 = vpop.f32.mrf.mxu0
      %v1078 = vpop.f32.mrf.mxu0
      %v1079 = vadd.f32 %v681, %v1078
      %v1080 = vpop.f32.mrf.mxu0
      %1081 = vmatprep.mubr.bf16.mxu0 %v567
      %1082 = vmatmul.mubr.bf16.gmra.mxu0 %v566
      %v1083 = vpop.f32.mrf.mxu0
      %v1084 = vadd.f32 %v681, %v1083
      %v1085 = vpop.f32.mrf.mxu0
      %v1086 = vpop.f32.mrf.mxu0
      %v1087 = vadd.f32 %v681, %v1086
      %v1088 = vpop.f32.mrf.mxu0
      %1089 = vmatprep.mubr.bf16.mxu0 %v574
      %1090 = vmatmul.mubr.bf16.gmra.mxu0 %v573
      %v1091 = vpop.f32.mrf.mxu0
      %v1092 = vadd.f32 %v681, %v1091
      %v1093 = vpop.f32.mrf.mxu0
      %v1094 = vpop.f32.mrf.mxu0
      %v1095 = vadd.f32 %v681, %v1094
      %v1096 = vpop.f32.mrf.mxu0
      %1097 = vdwg.mxu0
      %1098 = vmatprep.subr.bf16.mxu0 0
      %1099 = vmatpush1.bf16.msra.mxu0 %v901
      %1100 = vmatprep.subr.bf16.mxu0 0
      %1101 = vmatpush1.bf16.msra.mxu0 %v900
      %1102 = vmatprep.subr.bf16.mxu0 0
      %1103 = vmatpush1.bf16.msra.mxu0 %v899
      %1104 = vmatprep.subr.bf16.mxu0 0
      %1105 = vmatpush1.bf16.msra.mxu0 %v898
      %1106 = vmatprep.subr.bf16.mxu0 0
      %1107 = vmatpush1.bf16.msra.mxu0 %v897
      %1108 = vmatprep.subr.bf16.mxu0 0
      %1109 = vmatpush1.bf16.msra.mxu0 %v896
      %1110 = vmatprep.subr.bf16.mxu0 0
      %1111 = vmatpush1.bf16.msra.mxu0 %v895
      %1112 = vmatprep.subr.bf16.mxu0 0
      %1113 = vmatpush1.bf16.msra.mxu0 %v894
      %1114 = vmatprep.subr.bf16.mxu0 0
      %1115 = vmatpush2.bf16.msra.mxu0 %v909
      %1116 = vmatprep.subr.bf16.mxu0 0
      %1117 = vmatpush2.bf16.msra.mxu0 %v908
      %1118 = vmatprep.subr.bf16.mxu0 0
      %1119 = vmatpush2.bf16.msra.mxu0 %v907
      %1120 = vmatprep.subr.bf16.mxu0 0
      %1121 = vmatpush2.bf16.msra.mxu0 %v906
      %1122 = vmatprep.subr.bf16.mxu0 0
      %1123 = vmatpush2.bf16.msra.mxu0 %v905
      %1124 = vmatprep.subr.bf16.mxu0 0
      %1125 = vmatpush2.bf16.msra.mxu0 %v904
      %1126 = vmatprep.subr.bf16.mxu0 0
      %1127 = vmatpush2.bf16.msra.mxu0 %v903
      %1128 = vmatprep.subr.bf16.mxu0 0
      %1129 = vmatpush2.bf16.msra.mxu0 %v902
      %1130 = vmatprep.mubr.bf16.mxu0 %v527
      %1131 = vmatmul.mubr.bf16.gmra.mxu0 %v526
      %v1132 = vpop.f32.mrf.mxu0
      %v1133 = vadd.f32 %v1036, %v1132
      %v1134 = vpop.f32.mrf.mxu0
      %v1135 = vpop.f32.mrf.mxu0
      %v1136 = vadd.f32 %v1039, %v1135
      %v1137 = vpop.f32.mrf.mxu0
      %1138 = vmatprep.mubr.bf16.mxu0 %v534
      %1139 = vmatmul.mubr.bf16.gmra.mxu0 %v533
      %v1140 = vpop.f32.mrf.mxu0
      %v1141 = vadd.f32 %v1044, %v1140
      %v1142 = vpop.f32.mrf.mxu0
      %v1143 = vpop.f32.mrf.mxu0
      %v1144 = vadd.f32 %v1047, %v1143
      %v1145 = vpop.f32.mrf.mxu0
      %1146 = vmatprep.mubr.bf16.mxu0 %v541
      %1147 = vmatmul.mubr.bf16.gmra.mxu0 %v540
      %v1148 = vpop.f32.mrf.mxu0
      %v1149 = vadd.f32 %v1052, %v1148
      %v1150 = vpop.f32.mrf.mxu0
      %v1151 = vpop.f32.mrf.mxu0
      %v1152 = vadd.f32 %v1055, %v1151
      %v1153 = vpop.f32.mrf.mxu0
      %1154 = vmatprep.mubr.bf16.mxu0 %v548
      %1155 = vmatmul.mubr.bf16.gmra.mxu0 %v547
      %v1156 = vpop.f32.mrf.mxu0
      %v1157 = vadd.f32 %v1060, %v1156
      %v1158 = vpop.f32.mrf.mxu0
      %v1159 = vpop.f32.mrf.mxu0
      %v1160 = vadd.f32 %v1063, %v1159
      %v1161 = vpop.f32.mrf.mxu0
      %1162 = vmatprep.mubr.bf16.mxu0 %v555
      %1163 = vmatmul.mubr.bf16.gmra.mxu0 %v554
      %v1164 = vpop.f32.mrf.mxu0
      %v1165 = vadd.f32 %v1068, %v1164
      %v1166 = vpop.f32.mrf.mxu0
      %v1167 = vpop.f32.mrf.mxu0
      %v1168 = vadd.f32 %v1071, %v1167
      %v1169 = vpop.f32.mrf.mxu0
      %1170 = vmatprep.mubr.bf16.mxu0 %v562
      %1171 = vmatmul.mubr.bf16.gmra.mxu0 %v561
      %v1172 = vpop.f32.mrf.mxu0
      %v1173 = vadd.f32 %v1076, %v1172
      %v1174 = vpop.f32.mrf.mxu0
      %v1175 = vpop.f32.mrf.mxu0
      %v1176 = vadd.f32 %v1079, %v1175
      %v1177 = vpop.f32.mrf.mxu0
      %1178 = vmatprep.mubr.bf16.mxu0 %v569
      %1179 = vmatmul.mubr.bf16.gmra.mxu0 %v568
      %v1180 = vpop.f32.mrf.mxu0
      %v1181 = vadd.f32 %v1084, %v1180
      %v1182 = vpop.f32.mrf.mxu0
      %v1183 = vpop.f32.mrf.mxu0
      %v1184 = vadd.f32 %v1087, %v1183
      %v1185 = vpop.f32.mrf.mxu0
      %1186 = vmatprep.mubr.bf16.mxu0 %v576
      %1187 = vmatmul.mubr.bf16.gmra.mxu0 %v575
      %v1188 = vpop.f32.mrf.mxu0
      %v1189 = vadd.f32 %v1092, %v1188
      %v1190 = vpop.f32.mrf.mxu0
      %v1191 = vpop.f32.mrf.mxu0
      %v1192 = vadd.f32 %v1095, %v1191
      %v1193 = vpop.f32.mrf.mxu0
      %1194 = vdwg.mxu0
      %1195 = vmatprep.subr.bf16.mxu0 0
      %1196 = vmatpush1.bf16.msra.mxu0 %v917
      %1197 = vmatprep.subr.bf16.mxu0 0
      %1198 = vmatpush1.bf16.msra.mxu0 %v916
      %1199 = vmatprep.subr.bf16.mxu0 0
      %1200 = vmatpush1.bf16.msra.mxu0 %v915
      %1201 = vmatprep.subr.bf16.mxu0 0
      %1202 = vmatpush1.bf16.msra.mxu0 %v914
      %1203 = vmatprep.subr.bf16.mxu0 0
      %1204 = vmatpush1.bf16.msra.mxu0 %v913
      %1205 = vmatprep.subr.bf16.mxu0 0
      %1206 = vmatpush1.bf16.msra.mxu0 %v912
      %1207 = vmatprep.subr.bf16.mxu0 0
      %1208 = vmatpush1.bf16.msra.mxu0 %v911
      %1209 = vmatprep.subr.bf16.mxu0 0
      %1210 = vmatpush1.bf16.msra.mxu0 %v910
      %1211 = vmatprep.subr.bf16.mxu0 0
      %1212 = vmatpush2.bf16.msra.mxu0 %v925
      %1213 = vmatprep.subr.bf16.mxu0 0
      %1214 = vmatpush2.bf16.msra.mxu0 %v924
      %1215 = vmatprep.subr.bf16.mxu0 0
      %1216 = vmatpush2.bf16.msra.mxu0 %v923
      %1217 = vmatprep.subr.bf16.mxu0 0
      %1218 = vmatpush2.bf16.msra.mxu0 %v922
      %1219 = vmatprep.subr.bf16.mxu0 0
      %1220 = vmatpush2.bf16.msra.mxu0 %v921
      %1221 = vmatprep.subr.bf16.mxu0 0
      %1222 = vmatpush2.bf16.msra.mxu0 %v920
      %1223 = vmatprep.subr.bf16.mxu0 0
      %1224 = vmatpush2.bf16.msra.mxu0 %v919
      %1225 = vmatprep.subr.bf16.mxu0 0
      %1226 = vmatpush2.bf16.msra.mxu0 %v918
      %1227 = vmatprep.mubr.bf16.mxu0 %v529
      %1228 = vmatmul.mubr.bf16.gmra.mxu0 %v528
      %v1229 = vpop.f32.mrf.mxu0
      %v1230 = vadd.f32 %v1133, %v1229
      %v1231 = vpop.f32.mrf.mxu0
      %v1232 = vpop.f32.mrf.mxu0
      %v1233 = vadd.f32 %v1136, %v1232
      %v1234 = vpop.f32.mrf.mxu0
      %1235 = vmatprep.mubr.bf16.mxu0 %v536
      %1236 = vmatmul.mubr.bf16.gmra.mxu0 %v535
      %v1237 = vpop.f32.mrf.mxu0
      %v1238 = vadd.f32 %v1141, %v1237
      %v1239 = vpop.f32.mrf.mxu0
      %v1240 = vpop.f32.mrf.mxu0
      %v1241 = vadd.f32 %v1144, %v1240
      %v1242 = vpop.f32.mrf.mxu0
      %1243 = vmatprep.mubr.bf16.mxu0 %v543
      %1244 = vmatmul.mubr.bf16.gmra.mxu0 %v542
      %v1245 = vpop.f32.mrf.mxu0
      %v1246 = vadd.f32 %v1149, %v1245
      %v1247 = vpop.f32.mrf.mxu0
      %v1248 = vpop.f32.mrf.mxu0
      %v1249 = vadd.f32 %v1152, %v1248
      %v1250 = vpop.f32.mrf.mxu0
      %1251 = vmatprep.mubr.bf16.mxu0 %v550
      %1252 = vmatmul.mubr.bf16.gmra.mxu0 %v549
      %v1253 = vpop.f32.mrf.mxu0
      %v1254 = vadd.f32 %v1157, %v1253
      %v1255 = vpop.f32.mrf.mxu0
      %v1256 = vpop.f32.mrf.mxu0
      %v1257 = vadd.f32 %v1160, %v1256
      %v1258 = vpop.f32.mrf.mxu0
      %1259 = vmatprep.mubr.bf16.mxu0 %v557
      %1260 = vmatmul.mubr.bf16.gmra.mxu0 %v556
      %v1261 = vpop.f32.mrf.mxu0
      %v1262 = vadd.f32 %v1165, %v1261
      %v1263 = vpop.f32.mrf.mxu0
      %v1264 = vpop.f32.mrf.mxu0
      %v1265 = vadd.f32 %v1168, %v1264
      %v1266 = vpop.f32.mrf.mxu0
      %1267 = vmatprep.mubr.bf16.mxu0 %v564
      %1268 = vmatmul.mubr.bf16.gmra.mxu0 %v563
      %v1269 = vpop.f32.mrf.mxu0
      %v1270 = vadd.f32 %v1173, %v1269
      %v1271 = vpop.f32.mrf.mxu0
      %v1272 = vpop.f32.mrf.mxu0
      %v1273 = vadd.f32 %v1176, %v1272
      %v1274 = vpop.f32.mrf.mxu0
      %1275 = vmatprep.mubr.bf16.mxu0 %v571
      %1276 = vmatmul.mubr.bf16.gmra.mxu0 %v570
      %v1277 = vpop.f32.mrf.mxu0
      %v1278 = vadd.f32 %v1181, %v1277
      %v1279 = vpop.f32.mrf.mxu0
      %v1280 = vpop.f32.mrf.mxu0
      %v1281 = vadd.f32 %v1184, %v1280
      %v1282 = vpop.f32.mrf.mxu0
      %1283 = vmatprep.mubr.bf16.mxu0 %v578
      %1284 = vmatmul.mubr.bf16.gmra.mxu0 %v577
      %v1285 = vpop.f32.mrf.mxu0
      %v1286 = vadd.f32 %v1189, %v1285
      %v1287 = vpop.f32.mrf.mxu0
      %v1288 = vpop.f32.mrf.mxu0
      %v1289 = vadd.f32 %v1192, %v1288
      %v1290 = vpop.f32.mrf.mxu0
      %1291 = vdwg.mxu0
      %1292 = vmatprep.subr.bf16.mxu0 0
      %1293 = vmatpush1.bf16.msra.mxu0 0
      %1294 = vmatprep.subr.bf16.mxu0 0
      %1295 = vmatpush1.bf16.msra.mxu0 0
      %1296 = vmatprep.subr.bf16.mxu0 0
      %1297 = vmatpush1.bf16.msra.mxu0 0
      %1298 = vmatprep.subr.bf16.mxu0 0
      %1299 = vmatpush1.bf16.msra.mxu0 0
      %1300 = vmatprep.subr.bf16.mxu0 0
      %1301 = vmatpush1.bf16.msra.mxu0 0
      %1302 = vmatprep.subr.bf16.mxu0 0
      %1303 = vmatpush1.bf16.msra.mxu0 0
      %1304 = vmatprep.subr.bf16.mxu0 0
      %1305 = vmatpush1.bf16.msra.mxu0 0
      %1306 = vmatprep.subr.bf16.mxu0 0
      %1307 = vmatpush1.bf16.msra.mxu0 %v926
      %1308 = vmatprep.subr.bf16.mxu0 0
      %1309 = vmatpush2.bf16.msra.mxu0 0
      %1310 = vmatprep.subr.bf16.mxu0 0
      %1311 = vmatpush2.bf16.msra.mxu0 0
      %1312 = vmatprep.subr.bf16.mxu0 0
      %1313 = vmatpush2.bf16.msra.mxu0 0
      %1314 = vmatprep.subr.bf16.mxu0 0
      %1315 = vmatpush2.bf16.msra.mxu0 0
      %1316 = vmatprep.subr.bf16.mxu0 0
      %1317 = vmatpush2.bf16.msra.mxu0 0
      %1318 = vmatprep.subr.bf16.mxu0 0
      %1319 = vmatpush2.bf16.msra.mxu0 0
      %1320 = vmatprep.subr.bf16.mxu0 0
      %1321 = vmatpush2.bf16.msra.mxu0 0
      %1322 = vmatprep.subr.bf16.mxu0 0
      %1323 = vmatpush2.bf16.msra.mxu0 0
      %1324 = vmatprep.mubr.bf16.mxu0 0
      %1325 = vmatmul.mubr.bf16.gmra.mxu0 %v978
      %v1326 = vpop.f32.mrf.mxu0
      %v1327 = vadd.f32 %v1230, %v1326
      %v1328 = vpop.f32.mrf.mxu0
      %v1329 = vpop.f32.mrf.mxu0
      %v1330 = vadd.f32 %v1233, %v1329
      %v1331 = vpop.f32.mrf.mxu0
      %1332 = vmatprep.mubr.bf16.mxu0 0
      %1333 = vmatmul.mubr.bf16.gmra.mxu0 %v981
      %v1334 = vpop.f32.mrf.mxu0
      %v1335 = vadd.f32 %v1238, %v1334
      %v1336 = vpop.f32.mrf.mxu0
      %v1337 = vpop.f32.mrf.mxu0
      %v1338 = vadd.f32 %v1241, %v1337
      %v1339 = vpop.f32.mrf.mxu0
      %1340 = vmatprep.mubr.bf16.mxu0 0
      %1341 = vmatmul.mubr.bf16.gmra.mxu0 %v984
      %v1342 = vpop.f32.mrf.mxu0
      %v1343 = vadd.f32 %v1246, %v1342
      %v1344 = vpop.f32.mrf.mxu0
      %v1345 = vpop.f32.mrf.mxu0
      %v1346 = vadd.f32 %v1249, %v1345
      %v1347 = vpop.f32.mrf.mxu0
      %1348 = vmatprep.mubr.bf16.mxu0 0
      %1349 = vmatmul.mubr.bf16.gmra.mxu0 %v987
      %v1350 = vpop.f32.mrf.mxu0
      %v1351 = vadd.f32 %v1254, %v1350
      %v1352 = vpop.f32.mrf.mxu0
      %v1353 = vpop.f32.mrf.mxu0
      %v1354 = vadd.f32 %v1257, %v1353
      %v1355 = vpop.f32.mrf.mxu0
      %1356 = vmatprep.mubr.bf16.mxu0 0
      %1357 = vmatmul.mubr.bf16.gmra.mxu0 %v990
      %v1358 = vpop.f32.mrf.mxu0
      %v1359 = vadd.f32 %v1262, %v1358
      %v1360 = vpop.f32.mrf.mxu0
      %v1361 = vpop.f32.mrf.mxu0
      %v1362 = vadd.f32 %v1265, %v1361
      %v1363 = vpop.f32.mrf.mxu0
      %1364 = vmatprep.mubr.bf16.mxu0 0
      %1365 = vmatmul.mubr.bf16.gmra.mxu0 %v993
      %v1366 = vpop.f32.mrf.mxu0
      %v1367 = vadd.f32 %v1270, %v1366
      %v1368 = vpop.f32.mrf.mxu0
      %v1369 = vpop.f32.mrf.mxu0
      %v1370 = vadd.f32 %v1273, %v1369
      %v1371 = vpop.f32.mrf.mxu0
      %1372 = vmatprep.mubr.bf16.mxu0 0
      %1373 = vmatmul.mubr.bf16.gmra.mxu0 %v996
      %v1374 = vpop.f32.mrf.mxu0
      %v1375 = vadd.f32 %v1278, %v1374
      %v1376 = vpop.f32.mrf.mxu0
      %v1377 = vpop.f32.mrf.mxu0
      %v1378 = vadd.f32 %v1281, %v1377
      %v1379 = vpop.f32.mrf.mxu0
      %1380 = vmatprep.mubr.bf16.mxu0 0
      %1381 = vmatmul.mubr.bf16.gmra.mxu0 %v999
      %v1382 = vpop.f32.mrf.mxu0
      %v1383 = vadd.f32 %v1286, %v1382
      %v1384 = vpop.f32.mrf.mxu0
      %v1385 = vpop.f32.mrf.mxu0
      %v1386 = vadd.f32 %v1289, %v1385
      %v1387 = vpop.f32.mrf.mxu0
      %1388 = vdwg.mxu0
      %v1389 = vmax.f32 %v1327, 0.0
      %v1390 = vmax.f32 %v1330, 0.0
      %v1391 = vmax.f32 %v1335, 0.0
      %v1392 = vmax.f32 %v1338, 0.0
      %v1393 = vmax.f32 %v1343, 0.0
      %v1394 = vmax.f32 %v1346, 0.0
      %v1395 = vmax.f32 %v1351, 0.0
      %v1396 = vmax.f32 %v1354, 0.0
      %v1397 = vmax.f32 %v1359, 0.0
      %v1398 = vmax.f32 %v1362, 0.0
      %v1399 = vmax.f32 %v1367, 0.0
      %v1400 = vmax.f32 %v1370, 0.0
      %v1401 = vmax.f32 %v1375, 0.0
      %v1402 = vmax.f32 %v1378, 0.0
      %v1403 = vmax.f32 %v1383, 0.0
      %v1404 = vmax.f32 %v1386, 0.0
      %v1405 = vpack.c.bf16 %v1390, %v1389
      %v1406 = vpack.c.bf16 %v1392, %v1391
      %v1407 = vpack.c.bf16 %v1394, %v1393
      %v1408 = vpack.c.bf16 %v1396, %v1395
      %v1409 = vpack.c.bf16 %v1398, %v1397
      %v1410 = vpack.c.bf16 %v1400, %v1399
      %v1411 = vpack.c.bf16 %v1402, %v1401
      %v1412 = vpack.c.bf16 %v1404, %v1403
      %v1413 = vld [vmem:[%s3] sm:$0xf]
      %v1414 = vld [vmem:[%s3 + $0x4] sm:$0xf]
      %v1415 = vld [vmem:[%s3 + $0x8] sm:$0xf]
      %v1416 = vld [vmem:[%s3 + $0xc] sm:$0xf]
      %v1417 = vld [vmem:[%s3 + $0x10] sm:$0xf]
      %v1418 = vld [vmem:[%s3 + $0x14] sm:$0xf]
      %v1419 = vld [vmem:[%s3 + $0x18] sm:$0xf]
      %v1420 = vld [vmem:[%s3 + $0x1c] sm:$0xf]
      %v1421 = vld [vmem:[%s3 + $0x20] sm:$0xf]
      %v1422 = vld [vmem:[%s3 + $0x24] sm:$0xf]
      %v1423 = vld [vmem:[%s3 + $0x28] sm:$0xf]
      %v1424 = vld [vmem:[%s3 + $0x2c] sm:$0xf]
      %v1425 = vld [vmem:[%s3 + $0x30] sm:$0xf]
      %v1426 = vld [vmem:[%s3 + $0x34] sm:$0xf]
      %v1427 = vld [vmem:[%s3 + $0x38] sm:$0xf]
      %v1428 = vld [vmem:[%s3 + $0x3c] sm:$0xf]
      %v1429 = vlaneseq
      %v1430 = vshrl.u32 %v1429, 7
      %v1431 = vsub.s32 1, %v1430
      %v1432 = vrot.slane %v405, %v1431
      %v1449 = vunpack.c.l.b16 %v1413
      %v1450 = vunpack.c.l.b16 %v1414
      %v1451 = vunpack.c.l.b16 %v1415
      %v1452 = vunpack.c.l.b16 %v1416
      %v1453 = vunpack.c.l.b16 %v1417
      %v1454 = vunpack.c.l.b16 %v1418
      %v1455 = vunpack.c.l.b16 %v1419
      %v1456 = vunpack.c.l.b16 %v1420
      %v1457 = vunpack.c.l.b16 %v1421
      %v1458 = vunpack.c.l.b16 %v1422
      %v1459 = vunpack.c.l.b16 %v1423
      %v1460 = vunpack.c.l.b16 %v1424
      %v1461 = vunpack.c.l.b16 %v1425
      %v1462 = vunpack.c.l.b16 %v1426
      %v1463 = vunpack.c.l.b16 %v1427
      %v1464 = vunpack.c.l.b16 %v1428
      %v1465 = vpack.c.b16 %v1450, %v1449
      %v1466 = vpack.c.b16 %v1452, %v1451
      %v1467 = vpack.c.b16 %v1454, %v1453
      %v1468 = vpack.c.b16 %v1456, %v1455
      %v1469 = vpack.c.b16 %v1458, %v1457
      %v1470 = vpack.c.b16 %v1460, %v1459
      %v1471 = vpack.c.b16 %v1462, %v1461
      %v1472 = vpack.c.b16 %v1464, %v1463
      %1481 = vmatprep.subr.bf16.mxu0 0
      %1482 = vmatpush1.bf16.msra.mxu0 %v1472
      %1483 = vmatprep.subr.bf16.mxu0 0
      %1484 = vmatpush1.bf16.msra.mxu0 %v1471
      %1485 = vmatprep.subr.bf16.mxu0 0
      %1486 = vmatpush1.bf16.msra.mxu0 %v1470
      %1487 = vmatprep.subr.bf16.mxu0 0
      %1488 = vmatpush1.bf16.msra.mxu0 %v1469
      %1489 = vmatprep.subr.bf16.mxu0 0
      %1490 = vmatpush1.bf16.msra.mxu0 %v1468
      %1491 = vmatprep.subr.bf16.mxu0 0
      %1492 = vmatpush1.bf16.msra.mxu0 %v1467
      %1493 = vmatprep.subr.bf16.mxu0 0
      %1494 = vmatpush1.bf16.msra.mxu0 %v1466
      %1495 = vmatprep.subr.bf16.mxu0 0
      %1496 = vmatpush1.bf16.msra.mxu0 %v1465
      %1497 = vmatprep.subr.bf16.mxu0 0
      %1498 = vmatpush2.bf16.msra.mxu0 0
      %1499 = vmatprep.subr.bf16.mxu0 0
      %1500 = vmatpush2.bf16.msra.mxu0 0
      %1501 = vmatprep.subr.bf16.mxu0 0
      %1502 = vmatpush2.bf16.msra.mxu0 0
      %1503 = vmatprep.subr.bf16.mxu0 0
      %1504 = vmatpush2.bf16.msra.mxu0 0
      %1505 = vmatprep.subr.bf16.mxu0 0
      %1506 = vmatpush2.bf16.msra.mxu0 0
      %1507 = vmatprep.subr.bf16.mxu0 0
      %1508 = vmatpush2.bf16.msra.mxu0 0
      %1509 = vmatprep.subr.bf16.mxu0 0
      %1510 = vmatpush2.bf16.msra.mxu0 0
      %1511 = vmatprep.subr.bf16.mxu0 0
      %1512 = vmatpush2.bf16.msra.mxu0 0
      %1513 = vmatprep.mubr.bf16.mxu0 0
      %1514 = vmatmul.mubr.bf16.gmra.mxu0 %v1405
      %v1515 = vpop.f32.mrf.mxu0
      %v1516 = vadd.f32 %v1432, %v1515
      %v1517 = vpop.f32.mrf.mxu0
      %v1518 = vpop.f32.mrf.mxu0
      %v1519 = vadd.f32 %v1432, %v1518
      %v1520 = vpop.f32.mrf.mxu0
      %1521 = vmatprep.mubr.bf16.mxu0 0
      %1522 = vmatmul.mubr.bf16.gmra.mxu0 %v1406
      %v1523 = vpop.f32.mrf.mxu0
      %v1524 = vadd.f32 %v1432, %v1523
      %v1525 = vpop.f32.mrf.mxu0
      %v1526 = vpop.f32.mrf.mxu0
      %v1527 = vadd.f32 %v1432, %v1526
      %v1528 = vpop.f32.mrf.mxu0
      %1529 = vmatprep.mubr.bf16.mxu0 0
      %1530 = vmatmul.mubr.bf16.gmra.mxu0 %v1407
      %v1531 = vpop.f32.mrf.mxu0
      %v1532 = vadd.f32 %v1432, %v1531
      %v1533 = vpop.f32.mrf.mxu0
      %v1534 = vpop.f32.mrf.mxu0
      %v1535 = vadd.f32 %v1432, %v1534
      %v1536 = vpop.f32.mrf.mxu0
      %1537 = vmatprep.mubr.bf16.mxu0 0
      %1538 = vmatmul.mubr.bf16.gmra.mxu0 %v1408
      %v1539 = vpop.f32.mrf.mxu0
      %v1540 = vadd.f32 %v1432, %v1539
      %v1541 = vpop.f32.mrf.mxu0
      %v1542 = vpop.f32.mrf.mxu0
      %v1543 = vadd.f32 %v1432, %v1542
      %v1544 = vpop.f32.mrf.mxu0
      %1545 = vmatprep.mubr.bf16.mxu0 0
      %1546 = vmatmul.mubr.bf16.gmra.mxu0 %v1409
      %v1547 = vpop.f32.mrf.mxu0
      %v1548 = vadd.f32 %v1432, %v1547
      %v1549 = vpop.f32.mrf.mxu0
      %v1550 = vpop.f32.mrf.mxu0
      %v1551 = vadd.f32 %v1432, %v1550
      %v1552 = vpop.f32.mrf.mxu0
      %1553 = vmatprep.mubr.bf16.mxu0 0
      %1554 = vmatmul.mubr.bf16.gmra.mxu0 %v1410
      %v1555 = vpop.f32.mrf.mxu0
      %v1556 = vadd.f32 %v1432, %v1555
      %v1557 = vpop.f32.mrf.mxu0
      %v1558 = vpop.f32.mrf.mxu0
      %v1559 = vadd.f32 %v1432, %v1558
      %v1560 = vpop.f32.mrf.mxu0
      %1561 = vmatprep.mubr.bf16.mxu0 0
      %1562 = vmatmul.mubr.bf16.gmra.mxu0 %v1411
      %v1563 = vpop.f32.mrf.mxu0
      %v1564 = vadd.f32 %v1432, %v1563
      %v1565 = vpop.f32.mrf.mxu0
      %v1566 = vpop.f32.mrf.mxu0
      %v1567 = vadd.f32 %v1432, %v1566
      %v1568 = vpop.f32.mrf.mxu0
      %1569 = vmatprep.mubr.bf16.mxu0 0
      %1570 = vmatmul.mubr.bf16.gmra.mxu0 %v1412
      %v1571 = vpop.f32.mrf.mxu0
      %v1572 = vadd.f32 %v1432, %v1571
      %v1573 = vpop.f32.mrf.mxu0
      %v1574 = vpop.f32.mrf.mxu0
      %v1575 = vadd.f32 %v1432, %v1574
      %v1576 = vpop.f32.mrf.mxu0
      %1577 = vdwg.mxu0
      %v1578 = vmax.f32 %v1516, 0.0
      %v1579 = vmax.f32 %v1519, 0.0
      %v1580 = vmax.f32 %v1524, 0.0
      %v1581 = vmax.f32 %v1527, 0.0
      %v1582 = vmax.f32 %v1532, 0.0
      %v1583 = vmax.f32 %v1535, 0.0
      %v1584 = vmax.f32 %v1540, 0.0
      %v1585 = vmax.f32 %v1543, 0.0
      %v1586 = vmax.f32 %v1548, 0.0
      %v1587 = vmax.f32 %v1551, 0.0
      %v1588 = vmax.f32 %v1556, 0.0
      %v1589 = vmax.f32 %v1559, 0.0
      %v1590 = vmax.f32 %v1564, 0.0
      %v1591 = vmax.f32 %v1567, 0.0
      %v1592 = vmax.f32 %v1572, 0.0
      %v1593 = vmax.f32 %v1575, 0.0
      %v1594 = vpack.c.bf16 %v1579, %v1578
      %v1595 = vpack.c.bf16 %v1581, %v1580
      %v1596 = vpack.c.bf16 %v1583, %v1582
      %v1597 = vpack.c.bf16 %v1585, %v1584
      %v1598 = vpack.c.bf16 %v1587, %v1586
      %v1599 = vpack.c.bf16 %v1589, %v1588
      %v1600 = vpack.c.bf16 %v1591, %v1590
      %v1601 = vpack.c.bf16 %v1593, %v1592
      %v1602 = vld [vmem:[%s4] sm:$0xf]
      %v1603 = vld [vmem:[%s4 + $0x4] sm:$0xf]
      %v1604 = vld [vmem:[%s4 + $0x8] sm:$0xf]
      %v1605 = vld [vmem:[%s4 + $0xc] sm:$0xf]
      %v1606 = vld [vmem:[%s4 + $0x10] sm:$0xf]
      %v1607 = vld [vmem:[%s4 + $0x14] sm:$0xf]
      %v1608 = vld [vmem:[%s4 + $0x18] sm:$0xf]
      %v1609 = vld [vmem:[%s4 + $0x1c] sm:$0xf]
      %v1610 = vlaneseq
      %v1611 = vshrl.u32 %v1610, 7
      %v1612 = vsub.s32 2, %v1611
      %v1613 = vrot.slane %v405, %v1612
      %v1622 = vunpack.c.l.b16 %v1602
      %v1623 = vunpack.c.l.b16 %v1603
      %v1624 = vunpack.c.l.b16 %v1604
      %v1625 = vunpack.c.l.b16 %v1605
      %v1626 = vunpack.c.l.b16 %v1606
      %v1627 = vunpack.c.l.b16 %v1607
      %v1628 = vunpack.c.l.b16 %v1608
      %v1629 = vunpack.c.l.b16 %v1609
      %v1630 = vpack.c.b16 %v1623, %v1622
      %v1631 = vpack.c.b16 %v1625, %v1624
      %v1632 = vpack.c.b16 %v1627, %v1626
      %v1633 = vpack.c.b16 %v1629, %v1628
      %vm1638 = vcmask 523264
      %v1640 = vsel %vm1638, %v1594, 0
      %v1643 = vsel %vm1638, %v1595, 0
      %v1646 = vsel %vm1638, %v1596, 0
      %v1649 = vsel %vm1638, %v1597, 0
      %v1652 = vsel %vm1638, %v1598, 0
      %v1655 = vsel %vm1638, %v1599, 0
      %v1658 = vsel %vm1638, %v1600, 0
      %v1661 = vsel %vm1638, %v1601, 0
      %1663 = vmatprep.subr.bf16.mxu0 0
      %1664 = vmatpush1.bf16.msra.mxu0 0
      %1665 = vmatprep.subr.bf16.mxu0 0
      %1666 = vmatpush1.bf16.msra.mxu0 0
      %1667 = vmatprep.subr.bf16.mxu0 0
      %1668 = vmatpush1.bf16.msra.mxu0 0
      %1669 = vmatprep.subr.bf16.mxu0 0
      %1670 = vmatpush1.bf16.msra.mxu0 0
      %1671 = vmatprep.subr.bf16.mxu0 0
      %1672 = vmatpush1.bf16.msra.mxu0 %v1633
      %1673 = vmatprep.subr.bf16.mxu0 0
      %1674 = vmatpush1.bf16.msra.mxu0 %v1632
      %1675 = vmatprep.subr.bf16.mxu0 0
      %1676 = vmatpush1.bf16.msra.mxu0 %v1631
      %1677 = vmatprep.subr.bf16.mxu0 0
      %1678 = vmatpush1.bf16.msra.mxu0 %v1630
      %1679 = vmatprep.subr.bf16.mxu0 0
      %1680 = vmatpush2.bf16.msra.mxu0 0
      %1681 = vmatprep.subr.bf16.mxu0 0
      %1682 = vmatpush2.bf16.msra.mxu0 0
      %1683 = vmatprep.subr.bf16.mxu0 0
      %1684 = vmatpush2.bf16.msra.mxu0 0
      %1685 = vmatprep.subr.bf16.mxu0 0
      %1686 = vmatpush2.bf16.msra.mxu0 0
      %1687 = vmatprep.subr.bf16.mxu0 0
      %1688 = vmatpush2.bf16.msra.mxu0 0
      %1689 = vmatprep.subr.bf16.mxu0 0
      %1690 = vmatpush2.bf16.msra.mxu0 0
      %1691 = vmatprep.subr.bf16.mxu0 0
      %1692 = vmatpush2.bf16.msra.mxu0 0
      %1693 = vmatprep.subr.bf16.mxu0 0
      %1694 = vmatpush2.bf16.msra.mxu0 0
      %1695 = vmatprep.mubr.bf16.mxu0 0
      %1696 = vmatmul.mubr.bf16.gmra.mxu0 %v1640
      %v1697 = vpop.f32.mrf.mxu0
      %v1698 = vadd.f32 %v1613, %v1697
      %v1699 = vpop.f32.mrf.mxu0
      %v1700 = vpop.f32.mrf.mxu0
      %v1701 = vadd.f32 %v1613, %v1700
      %v1702 = vpop.f32.mrf.mxu0
      %1703 = vmatprep.mubr.bf16.mxu0 0
      %1704 = vmatmul.mubr.bf16.gmra.mxu0 %v1643
      %v1705 = vpop.f32.mrf.mxu0
      %v1706 = vadd.f32 %v1613, %v1705
      %v1707 = vpop.f32.mrf.mxu0
      %v1708 = vpop.f32.mrf.mxu0
      %v1709 = vadd.f32 %v1613, %v1708
      %v1710 = vpop.f32.mrf.mxu0
      %1711 = vmatprep.mubr.bf16.mxu0 0
      %1712 = vmatmul.mubr.bf16.gmra.mxu0 %v1646
      %v1713 = vpop.f32.mrf.mxu0
      %v1714 = vadd.f32 %v1613, %v1713
      %v1715 = vpop.f32.mrf.mxu0
      %v1716 = vpop.f32.mrf.mxu0
      %v1717 = vadd.f32 %v1613, %v1716
      %v1718 = vpop.f32.mrf.mxu0
      %1719 = vmatprep.mubr.bf16.mxu0 0
      %1720 = vmatmul.mubr.bf16.gmra.mxu0 %v1649
      %v1721 = vpop.f32.mrf.mxu0
      %v1722 = vadd.f32 %v1613, %v1721
      %v1723 = vpop.f32.mrf.mxu0
      %v1724 = vpop.f32.mrf.mxu0
      %v1725 = vadd.f32 %v1613, %v1724
      %v1726 = vpop.f32.mrf.mxu0
      %1727 = vmatprep.mubr.bf16.mxu0 0
      %1728 = vmatmul.mubr.bf16.gmra.mxu0 %v1652
      %v1729 = vpop.f32.mrf.mxu0
      %v1730 = vadd.f32 %v1613, %v1729
      %v1731 = vpop.f32.mrf.mxu0
      %v1732 = vpop.f32.mrf.mxu0
      %v1733 = vadd.f32 %v1613, %v1732
      %v1734 = vpop.f32.mrf.mxu0
      %1735 = vmatprep.mubr.bf16.mxu0 0
      %1736 = vmatmul.mubr.bf16.gmra.mxu0 %v1655
      %v1737 = vpop.f32.mrf.mxu0
      %v1738 = vadd.f32 %v1613, %v1737
      %v1739 = vpop.f32.mrf.mxu0
      %v1740 = vpop.f32.mrf.mxu0
      %v1741 = vadd.f32 %v1613, %v1740
      %v1742 = vpop.f32.mrf.mxu0
      %1743 = vmatprep.mubr.bf16.mxu0 0
      %1744 = vmatmul.mubr.bf16.gmra.mxu0 %v1658
      %v1745 = vpop.f32.mrf.mxu0
      %v1746 = vadd.f32 %v1613, %v1745
      %v1747 = vpop.f32.mrf.mxu0
      %v1748 = vpop.f32.mrf.mxu0
      %v1749 = vadd.f32 %v1613, %v1748
      %v1750 = vpop.f32.mrf.mxu0
      %1751 = vmatprep.mubr.bf16.mxu0 0
      %1752 = vmatmul.mubr.bf16.gmra.mxu0 %v1661
      %v1753 = vpop.f32.mrf.mxu0
      %v1754 = vadd.f32 %v1613, %v1753
      %v1755 = vpop.f32.mrf.mxu0
      %v1756 = vpop.f32.mrf.mxu0
      %v1757 = vadd.f32 %v1613, %v1756
      %v1758 = vpop.f32.mrf.mxu0
      %1759 = vdwg.mxu0
      %v1760 = vld [vmem:[%s389] sm:$0xff]
      %v1761 = vld [vmem:[%s389 + $0x8] sm:$0xff]
      %v1762 = vld [vmem:[%s389 + $0x10] sm:$0xff]
      %v1763 = vld [vmem:[%s389 + $0x18] sm:$0xff]
      %v1764 = vld [vmem:[%s389 + $0x20] sm:$0xff]
      %v1765 = vld [vmem:[%s389 + $0x28] sm:$0xff]
      %v1766 = vld [vmem:[%s389 + $0x30] sm:$0xff]
      %v1767 = vld [vmem:[%s389 + $0x38] sm:$0xff]
      %v1768 = vld [vmem:[%s389 + $0x40] sm:$0xff]
      %v1769 = vld [vmem:[%s389 + $0x48] sm:$0xff]
      %v1770 = vld [vmem:[%s389 + $0x50] sm:$0xff]
      %v1771 = vld [vmem:[%s389 + $0x58] sm:$0xff]
      %v1772 = vld [vmem:[%s389 + $0x60] sm:$0xff]
      %v1773 = vld [vmem:[%s389 + $0x68] sm:$0xff]
      %v1774 = vld [vmem:[%s389 + $0x70] sm:$0xff]
      %v1775 = vld [vmem:[%s389 + $0x78] sm:$0xff]
      %v1776 = vmul.f32 %v1698, 0.5
      %v1777 = vmul.f32 %v1701, 0.5
      %v1778 = vmul.f32 %v1706, 0.5
      %v1779 = vmul.f32 %v1709, 0.5
      %v1780 = vmul.f32 %v1714, 0.5
      %v1781 = vmul.f32 %v1717, 0.5
      %v1782 = vmul.f32 %v1722, 0.5
      %v1783 = vmul.f32 %v1725, 0.5
      %v1784 = vmul.f32 %v1730, 0.5
      %v1785 = vmul.f32 %v1733, 0.5
      %v1786 = vmul.f32 %v1738, 0.5
      %v1787 = vmul.f32 %v1741, 0.5
      %v1788 = vmul.f32 %v1746, 0.5
      %v1789 = vmul.f32 %v1749, 0.5
      %v1790 = vmul.f32 %v1754, 0.5
      %v1791 = vmul.f32 %v1757, 0.5
      %v1792 = vmul.f32 %v1776, 1.442695
      %v1793 = vpow.pop %v1792
      %v1794 = vmul.f32 %v1777, 1.442695
      %v1795 = vpow.pop %v1794
      %v1796 = vmul.f32 %v1778, 1.442695
      %v1797 = vpow.pop %v1796
      %v1798 = vmul.f32 %v1779, 1.442695
      %v1799 = vpow.pop %v1798
      %v1800 = vmul.f32 %v1780, 1.442695
      %v1801 = vpow.pop %v1800
      %v1802 = vmul.f32 %v1781, 1.442695
      %v1803 = vpow.pop %v1802
      %v1804 = vmul.f32 %v1782, 1.442695
      %v1805 = vpow.pop %v1804
      %v1806 = vmul.f32 %v1783, 1.442695
      %v1807 = vpow.pop %v1806
      %v1808 = vmul.f32 %v1784, 1.442695
      %v1809 = vpow.pop %v1808
      %v1810 = vmul.f32 %v1785, 1.442695
      %v1811 = vpow.pop %v1810
      %v1812 = vmul.f32 %v1786, 1.442695
      %v1813 = vpow.pop %v1812
      %v1814 = vmul.f32 %v1787, 1.442695
      %v1815 = vpow.pop %v1814
      %v1816 = vmul.f32 %v1788, 1.442695
      %v1817 = vpow.pop %v1816
      %v1818 = vmul.f32 %v1789, 1.442695
      %v1819 = vpow.pop %v1818
      %v1820 = vmul.f32 %v1790, 1.442695
      %v1821 = vpow.pop %v1820
      %v1822 = vmul.f32 %v1791, 1.442695
      %v1823 = vpow.pop %v1822
      %1840 = vrot.lane.b32.xlu0 %v1793, 96
      %v1841 = vpop.permute.xlu0 %1840
      %1842 = vrot.lane.b32.xlu0 %v1795, 96
      %v1843 = vpop.permute.xlu0 %1842
      %1844 = vrot.lane.b32.xlu0 %v1797, 96
      %v1845 = vpop.permute.xlu0 %1844
      %1846 = vrot.lane.b32.xlu0 %v1799, 96
      %v1847 = vpop.permute.xlu0 %1846
      %1848 = vrot.lane.b32.xlu0 %v1801, 96
      %v1849 = vpop.permute.xlu0 %1848
      %1850 = vrot.lane.b32.xlu0 %v1803, 96
      %v1851 = vpop.permute.xlu0 %1850
      %1852 = vrot.lane.b32.xlu0 %v1805, 96
      %v1853 = vpop.permute.xlu0 %1852
      %1854 = vrot.lane.b32.xlu0 %v1807, 96
      %v1855 = vpop.permute.xlu0 %1854
      %1856 = vrot.lane.b32.xlu0 %v1809, 96
      %v1857 = vpop.permute.xlu0 %1856
      %1858 = vrot.lane.b32.xlu0 %v1811, 96
      %v1859 = vpop.permute.xlu0 %1858
      %1860 = vrot.lane.b32.xlu0 %v1813, 96
      %v1861 = vpop.permute.xlu0 %1860
      %1862 = vrot.lane.b32.xlu0 %v1815, 96
      %v1863 = vpop.permute.xlu0 %1862
      %1864 = vrot.lane.b32.xlu0 %v1817, 96
      %v1865 = vpop.permute.xlu0 %1864
      %1866 = vrot.lane.b32.xlu0 %v1819, 96
      %v1867 = vpop.permute.xlu0 %1866
      %1868 = vrot.lane.b32.xlu0 %v1821, 96
      %v1869 = vpop.permute.xlu0 %1868
      %1870 = vrot.lane.b32.xlu0 %v1823, 96
      %v1871 = vpop.permute.xlu0 %1870
      %v1888 = vmul.f32 %v1760, %v1841
      %v1889 = vmul.f32 %v1761, %v1843
      %v1890 = vmul.f32 %v1762, %v1845
      %v1891 = vmul.f32 %v1763, %v1847
      %v1892 = vmul.f32 %v1764, %v1849
      %v1893 = vmul.f32 %v1765, %v1851
      %v1894 = vmul.f32 %v1766, %v1853
      %v1895 = vmul.f32 %v1767, %v1855
      %v1896 = vmul.f32 %v1768, %v1857
      %v1897 = vmul.f32 %v1769, %v1859
      %v1898 = vmul.f32 %v1770, %v1861
      %v1899 = vmul.f32 %v1771, %v1863
      %v1900 = vmul.f32 %v1772, %v1865
      %v1901 = vmul.f32 %v1773, %v1867
      %v1902 = vmul.f32 %v1774, %v1869
      %v1903 = vmul.f32 %v1775, %v1871
      %v1904 = vadd.f32 %v1888, %v1698
      %v1905 = vadd.f32 %v1889, %v1701
      %v1906 = vadd.f32 %v1890, %v1706
      %v1907 = vadd.f32 %v1891, %v1709
      %v1908 = vadd.f32 %v1892, %v1714
      %v1909 = vadd.f32 %v1893, %v1717
      %v1910 = vadd.f32 %v1894, %v1722
      %v1911 = vadd.f32 %v1895, %v1725
      %v1912 = vadd.f32 %v1896, %v1730
      %v1913 = vadd.f32 %v1897, %v1733
      %v1914 = vadd.f32 %v1898, %v1738
      %v1915 = vadd.f32 %v1899, %v1741
      %v1916 = vadd.f32 %v1900, %v1746
      %v1917 = vadd.f32 %v1901, %v1749
      %v1918 = vadd.f32 %v1902, %v1754
      %v1919 = vadd.f32 %v1903, %v1757
      %v1920 = vpack.c.bf16 %v1905, %v1904
      %v1921 = vpack.c.bf16 %v1907, %v1906
      %v1922 = vpack.c.bf16 %v1909, %v1908
      %v1923 = vpack.c.bf16 %v1911, %v1910
      %v1924 = vpack.c.bf16 %v1913, %v1912
      %v1925 = vpack.c.bf16 %v1915, %v1914
      %v1926 = vpack.c.bf16 %v1917, %v1916
      %v1927 = vpack.c.bf16 %v1919, %v1918
      %v1928 = vld [vmem:[%s5] sm:$0xf]
      %v1929 = vld [vmem:[%s5 + $0x4] sm:$0xf]
      %v1930 = vld [vmem:[%s5 + $0x8] sm:$0xf]
      %v1931 = vld [vmem:[%s5 + $0xc] sm:$0xf]
      %v1932 = vlaneseq
      %v1933 = vshrl.u32 %v1932, 7
      %v1934 = vsub.s32 3, %v1933
      %v1935 = vrot.slane %v405, %v1934
      %v1940 = vunpack.c.l.b16 %v1928
      %v1941 = vunpack.c.l.b16 %v1929
      %v1942 = vunpack.c.l.b16 %v1930
      %v1943 = vunpack.c.l.b16 %v1931
      %v1944 = vpack.c.b16 %v1941, %v1940
      %v1945 = vpack.c.b16 %v1943, %v1942
      %vm1948 = vcmask 261120
      %v1950 = vsel %vm1948, %v1920, 0
      %v1953 = vsel %vm1948, %v1921, 0
      %v1956 = vsel %vm1948, %v1922, 0
      %v1959 = vsel %vm1948, %v1923, 0
      %v1962 = vsel %vm1948, %v1924, 0
      %v1965 = vsel %vm1948, %v1925, 0
      %v1968 = vsel %vm1948, %v1926, 0
      %v1971 = vsel %vm1948, %v1927, 0
      %1973 = vmatprep.subr.bf16.mxu0 0
      %1974 = vmatpush1.bf16.msra.mxu0 0
      %1975 = vmatprep.subr.bf16.mxu0 0
      %1976 = vmatpush1.bf16.msra.mxu0 0
      %1977 = vmatprep.subr.bf16.mxu0 0
      %1978 = vmatpush1.bf16.msra.mxu0 0
      %1979 = vmatprep.subr.bf16.mxu0 0
      %1980 = vmatpush1.bf16.msra.mxu0 0
      %1981 = vmatprep.subr.bf16.mxu0 0
      %1982 = vmatpush1.bf16.msra.mxu0 0
      %1983 = vmatprep.subr.bf16.mxu0 0
      %1984 = vmatpush1.bf16.msra.mxu0 0
      %1985 = vmatprep.subr.bf16.mxu0 0
      %1986 = vmatpush1.bf16.msra.mxu0 %v1945
      %1987 = vmatprep.subr.bf16.mxu0 0
      %1988 = vmatpush1.bf16.msra.mxu0 %v1944
      %1989 = vmatprep.subr.bf16.mxu0 0
      %1990 = vmatpush2.bf16.msra.mxu0 0
      %1991 = vmatprep.subr.bf16.mxu0 0
      %1992 = vmatpush2.bf16.msra.mxu0 0
      %1993 = vmatprep.subr.bf16.mxu0 0
      %1994 = vmatpush2.bf16.msra.mxu0 0
      %1995 = vmatprep.subr.bf16.mxu0 0
      %1996 = vmatpush2.bf16.msra.mxu0 0
      %1997 = vmatprep.subr.bf16.mxu0 0
      %1998 = vmatpush2.bf16.msra.mxu0 0
      %1999 = vmatprep.subr.bf16.mxu0 0
      %2000 = vmatpush2.bf16.msra.mxu0 0
      %2001 = vmatprep.subr.bf16.mxu0 0
      %2002 = vmatpush2.bf16.msra.mxu0 0
      %2003 = vmatprep.subr.bf16.mxu0 0
      %2004 = vmatpush2.bf16.msra.mxu0 0
      %2005 = vmatprep.mubr.bf16.mxu0 0
      %2006 = vmatmul.mubr.bf16.gmra.mxu0 %v1950
      %v2007 = vpop.f32.mrf.mxu0
      %v2008 = vadd.f32 %v1935, %v2007
      %v2009 = vpop.f32.mrf.mxu0
      %v2010 = vpop.f32.mrf.mxu0
      %v2011 = vadd.f32 %v1935, %v2010
      %v2012 = vpop.f32.mrf.mxu0
      %2013 = vmatprep.mubr.bf16.mxu0 0
      %2014 = vmatmul.mubr.bf16.gmra.mxu0 %v1953
      %v2015 = vpop.f32.mrf.mxu0
      %v2016 = vadd.f32 %v1935, %v2015
      %v2017 = vpop.f32.mrf.mxu0
      %v2018 = vpop.f32.mrf.mxu0
      %v2019 = vadd.f32 %v1935, %v2018
      %v2020 = vpop.f32.mrf.mxu0
      %2021 = vmatprep.mubr.bf16.mxu0 0
      %2022 = vmatmul.mubr.bf16.gmra.mxu0 %v1956
      %v2023 = vpop.f32.mrf.mxu0
      %v2024 = vadd.f32 %v1935, %v2023
      %v2025 = vpop.f32.mrf.mxu0
      %v2026 = vpop.f32.mrf.mxu0
      %v2027 = vadd.f32 %v1935, %v2026
      %v2028 = vpop.f32.mrf.mxu0
      %2029 = vmatprep.mubr.bf16.mxu0 0
      %2030 = vmatmul.mubr.bf16.gmra.mxu0 %v1959
      %v2031 = vpop.f32.mrf.mxu0
      %v2032 = vadd.f32 %v1935, %v2031
      %v2033 = vpop.f32.mrf.mxu0
      %v2034 = vpop.f32.mrf.mxu0
      %v2035 = vadd.f32 %v1935, %v2034
      %v2036 = vpop.f32.mrf.mxu0
      %2037 = vmatprep.mubr.bf16.mxu0 0
      %2038 = vmatmul.mubr.bf16.gmra.mxu0 %v1962
      %v2039 = vpop.f32.mrf.mxu0
      %v2040 = vadd.f32 %v1935, %v2039
      %v2041 = vpop.f32.mrf.mxu0
      %v2042 = vpop.f32.mrf.mxu0
      %v2043 = vadd.f32 %v1935, %v2042
      %v2044 = vpop.f32.mrf.mxu0
      %2045 = vmatprep.mubr.bf16.mxu0 0
      %2046 = vmatmul.mubr.bf16.gmra.mxu0 %v1965
      %v2047 = vpop.f32.mrf.mxu0
      %v2048 = vadd.f32 %v1935, %v2047
      %v2049 = vpop.f32.mrf.mxu0
      %v2050 = vpop.f32.mrf.mxu0
      %v2051 = vadd.f32 %v1935, %v2050
      %v2052 = vpop.f32.mrf.mxu0
      %2053 = vmatprep.mubr.bf16.mxu0 0
      %2054 = vmatmul.mubr.bf16.gmra.mxu0 %v1968
      %v2055 = vpop.f32.mrf.mxu0
      %v2056 = vadd.f32 %v1935, %v2055
      %v2057 = vpop.f32.mrf.mxu0
      %v2058 = vpop.f32.mrf.mxu0
      %v2059 = vadd.f32 %v1935, %v2058
      %v2060 = vpop.f32.mrf.mxu0
      %2061 = vmatprep.mubr.bf16.mxu0 0
      %2062 = vmatmul.mubr.bf16.gmra.mxu0 %v1971
      %v2063 = vpop.f32.mrf.mxu0
      %v2064 = vadd.f32 %v1935, %v2063
      %v2065 = vpop.f32.mrf.mxu0
      %v2066 = vpop.f32.mrf.mxu0
      %v2067 = vadd.f32 %v1935, %v2066
      %v2068 = vpop.f32.mrf.mxu0
      %2069 = vdwg.mxu0
      %v2070 = vmax.f32 %v2008, 0.0
      %v2071 = vmax.f32 %v2011, 0.0
      %v2072 = vmax.f32 %v2016, 0.0
      %v2073 = vmax.f32 %v2019, 0.0
      %v2074 = vmax.f32 %v2024, 0.0
      %v2075 = vmax.f32 %v2027, 0.0
      %v2076 = vmax.f32 %v2032, 0.0
      %v2077 = vmax.f32 %v2035, 0.0
      %v2078 = vmax.f32 %v2040, 0.0
      %v2079 = vmax.f32 %v2043, 0.0
      %v2080 = vmax.f32 %v2048, 0.0
      %v2081 = vmax.f32 %v2051, 0.0
      %v2082 = vmax.f32 %v2056, 0.0
      %v2083 = vmax.f32 %v2059, 0.0
      %v2084 = vmax.f32 %v2064, 0.0
      %v2085 = vmax.f32 %v2067, 0.0
      %v2086 = vpack.c.bf16 %v2071, %v2070
      %v2087 = vpack.c.bf16 %v2073, %v2072
      %v2088 = vpack.c.bf16 %v2075, %v2074
      %v2089 = vpack.c.bf16 %v2077, %v2076
      %v2090 = vpack.c.bf16 %v2079, %v2078
      %v2091 = vpack.c.bf16 %v2081, %v2080
      %v2092 = vpack.c.bf16 %v2083, %v2082
      %v2093 = vpack.c.bf16 %v2085, %v2084
      %v2094 = vld [vmem:[%s6] sm:$0xf]
      %v2095 = vld [vmem:[%s6 + $0x4] sm:$0xf]
      %v2096 = vld [vmem:[%s6 + $0x8] sm:$0xf]
      %v2097 = vld [vmem:[%s6 + $0xc] sm:$0xf]
      %v2098 = vld [vmem:[%s6 + $0x10] sm:$0xf]
      %v2099 = vld [vmem:[%s6 + $0x14] sm:$0xf]
      %v2100 = vld [vmem:[%s6 + $0x18] sm:$0xf]
      %v2101 = vld [vmem:[%s6 + $0x1c] sm:$0xf]
      %v2102 = vlaneseq
      %v2103 = vshrl.u32 %v2102, 7
      %v2104 = vsub.s32 4, %v2103
      %v2105 = vrot.slane %v405, %v2104
      %v2114 = vunpack.c.l.b16 %v2094
      %v2115 = vunpack.c.l.b16 %v2095
      %v2116 = vunpack.c.l.b16 %v2096
      %v2117 = vunpack.c.l.b16 %v2097
      %v2118 = vunpack.c.l.b16 %v2098
      %v2119 = vunpack.c.l.b16 %v2099
      %v2120 = vunpack.c.l.b16 %v2100
      %v2121 = vunpack.c.l.b16 %v2101
      %v2122 = vpack.c.b16 %v2115, %v2114
      %v2123 = vpack.c.b16 %v2117, %v2116
      %v2124 = vpack.c.b16 %v2119, %v2118
      %v2125 = vpack.c.b16 %v2121, %v2120
      %v2131 = vsel %vm1638, %v2086, 0
      %v2134 = vsel %vm1638, %v2087, 0
      %v2137 = vsel %vm1638, %v2088, 0
      %v2140 = vsel %vm1638, %v2089, 0
      %v2143 = vsel %vm1638, %v2090, 0
      %v2146 = vsel %vm1638, %v2091, 0
      %v2149 = vsel %vm1638, %v2092, 0
      %v2152 = vsel %vm1638, %v2093, 0
      %2154 = vmatprep.subr.bf16.mxu0 0
      %2155 = vmatpush1.bf16.msra.mxu0 0
      %2156 = vmatprep.subr.bf16.mxu0 0
      %2157 = vmatpush1.bf16.msra.mxu0 0
      %2158 = vmatprep.subr.bf16.mxu0 0
      %2159 = vmatpush1.bf16.msra.mxu0 0
      %2160 = vmatprep.subr.bf16.mxu0 0
      %2161 = vmatpush1.bf16.msra.mxu0 0
      %2162 = vmatprep.subr.bf16.mxu0 0
      %2163 = vmatpush1.bf16.msra.mxu0 %v2125
      %2164 = vmatprep.subr.bf16.mxu0 0
      %2165 = vmatpush1.bf16.msra.mxu0 %v2124
      %2166 = vmatprep.subr.bf16.mxu0 0
      %2167 = vmatpush1.bf16.msra.mxu0 %v2123
      %2168 = vmatprep.subr.bf16.mxu0 0
      %2169 = vmatpush1.bf16.msra.mxu0 %v2122
      %2170 = vmatprep.subr.bf16.mxu0 0
      %2171 = vmatpush2.bf16.msra.mxu0 0
      %2172 = vmatprep.subr.bf16.mxu0 0
      %2173 = vmatpush2.bf16.msra.mxu0 0
      %2174 = vmatprep.subr.bf16.mxu0 0
      %2175 = vmatpush2.bf16.msra.mxu0 0
      %2176 = vmatprep.subr.bf16.mxu0 0
      %2177 = vmatpush2.bf16.msra.mxu0 0
      %2178 = vmatprep.subr.bf16.mxu0 0
      %2179 = vmatpush2.bf16.msra.mxu0 0
      %2180 = vmatprep.subr.bf16.mxu0 0
      %2181 = vmatpush2.bf16.msra.mxu0 0
      %2182 = vmatprep.subr.bf16.mxu0 0
      %2183 = vmatpush2.bf16.msra.mxu0 0
      %2184 = vmatprep.subr.bf16.mxu0 0
      %2185 = vmatpush2.bf16.msra.mxu0 0
      %2186 = vmatprep.mubr.bf16.mxu0 0
      %2187 = vmatmul.mubr.bf16.gmra.mxu0 %v2131
      %v2188 = vpop.f32.mrf.mxu0
      %v2189 = vadd.f32 %v2105, %v2188
      %v2190 = vpop.f32.mrf.mxu0
      %v2191 = vpop.f32.mrf.mxu0
      %v2192 = vadd.f32 %v2105, %v2191
      %v2193 = vpop.f32.mrf.mxu0
      %2194 = vmatprep.mubr.bf16.mxu0 0
      %2195 = vmatmul.mubr.bf16.gmra.mxu0 %v2134
      %v2196 = vpop.f32.mrf.mxu0
      %v2197 = vadd.f32 %v2105, %v2196
      %v2198 = vpop.f32.mrf.mxu0
      %v2199 = vpop.f32.mrf.mxu0
      %v2200 = vadd.f32 %v2105, %v2199
      %v2201 = vpop.f32.mrf.mxu0
      %2202 = vmatprep.mubr.bf16.mxu0 0
      %2203 = vmatmul.mubr.bf16.gmra.mxu0 %v2137
      %v2204 = vpop.f32.mrf.mxu0
      %v2205 = vadd.f32 %v2105, %v2204
      %v2206 = vpop.f32.mrf.mxu0
      %v2207 = vpop.f32.mrf.mxu0
      %v2208 = vadd.f32 %v2105, %v2207
      %v2209 = vpop.f32.mrf.mxu0
      %2210 = vmatprep.mubr.bf16.mxu0 0
      %2211 = vmatmul.mubr.bf16.gmra.mxu0 %v2140
      %v2212 = vpop.f32.mrf.mxu0
      %v2213 = vadd.f32 %v2105, %v2212
      %v2214 = vpop.f32.mrf.mxu0
      %v2215 = vpop.f32.mrf.mxu0
      %v2216 = vadd.f32 %v2105, %v2215
      %v2217 = vpop.f32.mrf.mxu0
      %2218 = vmatprep.mubr.bf16.mxu0 0
      %2219 = vmatmul.mubr.bf16.gmra.mxu0 %v2143
      %v2220 = vpop.f32.mrf.mxu0
      %v2221 = vadd.f32 %v2105, %v2220
      %v2222 = vpop.f32.mrf.mxu0
      %v2223 = vpop.f32.mrf.mxu0
      %v2224 = vadd.f32 %v2105, %v2223
      %v2225 = vpop.f32.mrf.mxu0
      %2226 = vmatprep.mubr.bf16.mxu0 0
      %2227 = vmatmul.mubr.bf16.gmra.mxu0 %v2146
      %v2228 = vpop.f32.mrf.mxu0
      %v2229 = vadd.f32 %v2105, %v2228
      %v2230 = vpop.f32.mrf.mxu0
      %v2231 = vpop.f32.mrf.mxu0
      %v2232 = vadd.f32 %v2105, %v2231
      %v2233 = vpop.f32.mrf.mxu0
      %2234 = vmatprep.mubr.bf16.mxu0 0
      %2235 = vmatmul.mubr.bf16.gmra.mxu0 %v2149
      %v2236 = vpop.f32.mrf.mxu0
      %v2237 = vadd.f32 %v2105, %v2236
      %v2238 = vpop.f32.mrf.mxu0
      %v2239 = vpop.f32.mrf.mxu0
      %v2240 = vadd.f32 %v2105, %v2239
      %v2241 = vpop.f32.mrf.mxu0
      %2242 = vmatprep.mubr.bf16.mxu0 0
      %2243 = vmatmul.mubr.bf16.gmra.mxu0 %v2152
      %v2244 = vpop.f32.mrf.mxu0
      %v2245 = vadd.f32 %v2105, %v2244
      %v2246 = vpop.f32.mrf.mxu0
      %v2247 = vpop.f32.mrf.mxu0
      %v2248 = vadd.f32 %v2105, %v2247
      %v2249 = vpop.f32.mrf.mxu0
      %2250 = vdwg.mxu0
      %v2251 = vmax.f32 %v2189, 0.0
      %v2252 = vmax.f32 %v2192, 0.0
      %v2253 = vmax.f32 %v2197, 0.0
      %v2254 = vmax.f32 %v2200, 0.0
      %v2255 = vmax.f32 %v2205, 0.0
      %v2256 = vmax.f32 %v2208, 0.0
      %v2257 = vmax.f32 %v2213, 0.0
      %v2258 = vmax.f32 %v2216, 0.0
      %v2259 = vmax.f32 %v2221, 0.0
      %v2260 = vmax.f32 %v2224, 0.0
      %v2261 = vmax.f32 %v2229, 0.0
      %v2262 = vmax.f32 %v2232, 0.0
      %v2263 = vmax.f32 %v2237, 0.0
      %v2264 = vmax.f32 %v2240, 0.0
      %v2265 = vmax.f32 %v2245, 0.0
      %v2266 = vmax.f32 %v2248, 0.0
      %v2267 = vpack.c.bf16 %v2252, %v2251
      %v2268 = vpack.c.bf16 %v2254, %v2253
      %v2269 = vpack.c.bf16 %v2256, %v2255
      %v2270 = vpack.c.bf16 %v2258, %v2257
      %v2271 = vpack.c.bf16 %v2260, %v2259
      %v2272 = vpack.c.bf16 %v2262, %v2261
      %v2273 = vpack.c.bf16 %v2264, %v2263
      %v2274 = vpack.c.bf16 %v2266, %v2265
      %v2275 = vld [vmem:[%s7] sm:$0xff]
      %v2276 = vld [vmem:[%s7 + $0x8] sm:$0xff]
      %v2277 = vld [vmem:[%s7 + $0x10] sm:$0xff]
      %v2278 = vld [vmem:[%s7 + $0x18] sm:$0xf]
      %v2279 = vld [vmem:[%s7 + $0x1c] sm:$0xff]
      %v2280 = vld [vmem:[%s7 + $0x24] sm:$0xff]
      %v2281 = vld [vmem:[%s7 + $0x2c] sm:$0xff]
      %v2282 = vld [vmem:[%s7 + $0x34] sm:$0xf]
      %v2283 = vld [vmem:[%s7 + $0x38] sm:$0xff]
      %v2284 = vld [vmem:[%s7 + $0x40] sm:$0xff]
      %v2285 = vld [vmem:[%s7 + $0x48] sm:$0xff]
      %v2286 = vld [vmem:[%s7 + $0x50] sm:$0xf]
      %v2287 = vld [vmem:[%s7 + $0x54] sm:$0xff]
      %v2288 = vld [vmem:[%s7 + $0x5c] sm:$0xff]
      %v2289 = vld [vmem:[%s7 + $0x64] sm:$0xff]
      %v2290 = vld [vmem:[%s7 + $0x6c] sm:$0xf]
      %v2291 = vld [vmem:[%s7 + $0x70] sm:$0xff]
      %v2292 = vld [vmem:[%s7 + $0x78] sm:$0xff]
      %v2293 = vld [vmem:[%s7 + $0x80] sm:$0xff]
      %v2294 = vld [vmem:[%s7 + $0x88] sm:$0xf]
      %v2295 = vld [vmem:[%s7 + $0x8c] sm:$0xff]
      %v2296 = vld [vmem:[%s7 + $0x94] sm:$0xff]
      %v2297 = vld [vmem:[%s7 + $0x9c] sm:$0xff]
      %v2298 = vld [vmem:[%s7 + $0xa4] sm:$0xf]
      %v2299 = vld [vmem:[%s7 + $0xa8] sm:$0xff]
      %v2300 = vld [vmem:[%s7 + $0xb0] sm:$0xff]
      %v2301 = vld [vmem:[%s7 + $0xb8] sm:$0xff]
      %v2302 = vld [vmem:[%s7 + $0xc0] sm:$0xf]
      %v2303 = vld [vmem:[%s7 + $0xc4] sm:$0xff]
      %v2304 = vld [vmem:[%s7 + $0xcc] sm:$0xff]
      %v2305 = vld [vmem:[%s7 + $0xd4] sm:$0xff]
      %v2306 = vld [vmem:[%s7 + $0xdc] sm:$0xf]
      %v2307 = vld [vmem:[%s7 + $0xe0] sm:$0xff]
      %v2308 = vld [vmem:[%s7 + $0xe8] sm:$0xff]
      %v2309 = vld [vmem:[%s7 + $0xf0] sm:$0xff]
      %v2310 = vld [vmem:[%s7 + $0xf8] sm:$0xf]
      %v2311 = vld [vmem:[%s7 + $0xfc] sm:$0xff]
      %v2312 = vld [vmem:[%s7 + $0x104] sm:$0xff]
      %v2313 = vld [vmem:[%s7 + $0x10c] sm:$0xff]
      %v2314 = vld [vmem:[%s7 + $0x114] sm:$0xf]
      %v2315 = vld [vmem:[%s7 + $0x118] sm:$0xff]
      %v2316 = vld [vmem:[%s7 + $0x120] sm:$0xff]
      %v2317 = vld [vmem:[%s7 + $0x128] sm:$0xff]
      %v2318 = vld [vmem:[%s7 + $0x130] sm:$0xf]
      %v2319 = vld [vmem:[%s7 + $0x134] sm:$0xff]
      %v2320 = vld [vmem:[%s7 + $0x13c] sm:$0xff]
      %v2321 = vld [vmem:[%s7 + $0x144] sm:$0xff]
      %v2322 = vld [vmem:[%s7 + $0x14c] sm:$0xf]
      %v2323 = vld [vmem:[%s7 + $0x150] sm:$0xff]
      %v2324 = vld [vmem:[%s7 + $0x158] sm:$0xff]
      %v2325 = vld [vmem:[%s7 + $0x160] sm:$0xff]
      %v2326 = vld [vmem:[%s7 + $0x168] sm:$0xf]
      %v2327 = vld [vmem:[%s7 + $0x16c] sm:$0xff]
      %v2328 = vld [vmem:[%s7 + $0x174] sm:$0xff]
      %v2329 = vld [vmem:[%s7 + $0x17c] sm:$0xff]
      %v2330 = vld [vmem:[%s7 + $0x184] sm:$0xf]
      %v2331 = vld [vmem:[%s7 + $0x188] sm:$0xff]
      %v2332 = vld [vmem:[%s7 + $0x190] sm:$0xff]
      %v2333 = vld [vmem:[%s7 + $0x198] sm:$0xff]
      %v2334 = vld [vmem:[%s7 + $0x1a0] sm:$0xf]
      %v2335 = vld [vmem:[%s7 + $0x1a4] sm:$0xff]
      %v2336 = vld [vmem:[%s7 + $0x1ac] sm:$0xff]
      %v2337 = vld [vmem:[%s7 + $0x1b4] sm:$0xff]
      %v2338 = vld [vmem:[%s7 + $0x1bc] sm:$0xf]
      %v2339 = vlaneseq
      %v2340 = vshrl.u32 %v2339, 7
      %v2341 = vsub.s32 5, %v2340
      %v2342 = vrot.slane %v405, %v2341
      %v2343 = vlaneseq
      %v2344 = vshrl.u32 %v2343, 7
      %v2345 = vsub.s32 5, %v2344
      %v2346 = vrot.slane %v406, %v2345
      %v2347 = vlaneseq
      %v2348 = vshrl.u32 %v2347, 7
      %v2349 = vsub.s32 5, %v2348
      %v2350 = vrot.slane %v407, %v2349
      %v2351 = vlaneseq
      %v2352 = vshrl.u32 %v2351, 7
      %v2353 = vsub.s32 5, %v2352
      %v2354 = vrot.slane %v408, %v2353
      %v2355 = vlaneseq
      %v2356 = vshrl.u32 %v2355, 7
      %v2357 = vsub.s32 5, %v2356
      %v2358 = vrot.slane %v409, %v2357
      %v2359 = vlaneseq
      %v2360 = vshrl.u32 %v2359, 7
      %v2361 = vsub.s32 5, %v2360
      %v2362 = vrot.slane %v410, %v2361
      %v2363 = vlaneseq
      %v2364 = vshrl.u32 %v2363, 7
      %v2365 = vsub.s32 5, %v2364
      %v2366 = vrot.slane %v411, %v2365
      %v2431 = vunpack.c.l.b16 %v2275
      %v2432 = vunpack.c.h.b16 %v2275
      %v2433 = vunpack.c.l.b16 %v2276
      %v2434 = vunpack.c.h.b16 %v2276
      %v2435 = vunpack.c.l.b16 %v2277
      %v2436 = vunpack.c.h.b16 %v2277
      %v2437 = vunpack.c.l.b16 %v2278
      %v2438 = vunpack.c.l.b16 %v2279
      %v2439 = vunpack.c.h.b16 %v2279
      %v2440 = vunpack.c.l.b16 %v2280
      %v2441 = vunpack.c.h.b16 %v2280
      %v2442 = vunpack.c.l.b16 %v2281
      %v2443 = vunpack.c.h.b16 %v2281
      %v2444 = vunpack.c.l.b16 %v2282
      %v2445 = vunpack.c.l.b16 %v2283
      %v2446 = vunpack.c.h.b16 %v2283
      %v2447 = vunpack.c.l.b16 %v2284
      %v2448 = vunpack.c.h.b16 %v2284
      %v2449 = vunpack.c.l.b16 %v2285
      %v2450 = vunpack.c.h.b16 %v2285
      %v2451 = vunpack.c.l.b16 %v2286
      %v2452 = vunpack.c.l.b16 %v2287
      %v2453 = vunpack.c.h.b16 %v2287
      %v2454 = vunpack.c.l.b16 %v2288
      %v2455 = vunpack.c.h.b16 %v2288
      %v2456 = vunpack.c.l.b16 %v2289
      %v2457 = vunpack.c.h.b16 %v2289
      %v2458 = vunpack.c.l.b16 %v2290
      %v2459 = vunpack.c.l.b16 %v2291
      %v2460 = vunpack.c.h.b16 %v2291
      %v2461 = vunpack.c.l.b16 %v2292
      %v2462 = vunpack.c.h.b16 %v2292
      %v2463 = vunpack.c.l.b16 %v2293
      %v2464 = vunpack.c.h.b16 %v2293
      %v2465 = vunpack.c.l.b16 %v2294
      %v2466 = vunpack.c.l.b16 %v2295
      %v2467 = vunpack.c.h.b16 %v2295
      %v2468 = vunpack.c.l.b16 %v2296
      %v2469 = vunpack.c.h.b16 %v2296
      %v2470 = vunpack.c.l.b16 %v2297
      %v2471 = vunpack.c.h.b16 %v2297
      %v2472 = vunpack.c.l.b16 %v2298
      %v2473 = vunpack.c.l.b16 %v2299
      %v2474 = vunpack.c.h.b16 %v2299
      %v2475 = vunpack.c.l.b16 %v2300
      %v2476 = vunpack.c.h.b16 %v2300
      %v2477 = vunpack.c.l.b16 %v2301
      %v2478 = vunpack.c.h.b16 %v2301
      %v2479 = vunpack.c.l.b16 %v2302
      %v2480 = vunpack.c.l.b16 %v2303
      %v2481 = vunpack.c.h.b16 %v2303
      %v2482 = vunpack.c.l.b16 %v2304
      %v2483 = vunpack.c.h.b16 %v2304
      %v2484 = vunpack.c.l.b16 %v2305
      %v2485 = vunpack.c.h.b16 %v2305
      %v2486 = vunpack.c.l.b16 %v2306
      %v2487 = vunpack.c.l.b16 %v2307
      %v2488 = vunpack.c.h.b16 %v2307
      %v2489 = vunpack.c.l.b16 %v2308
      %v2490 = vunpack.c.h.b16 %v2308
      %v2491 = vunpack.c.l.b16 %v2309
      %v2492 = vunpack.c.h.b16 %v2309
      %v2493 = vunpack.c.l.b16 %v2310
      %v2494 = vunpack.c.l.b16 %v2311
      %v2495 = vunpack.c.h.b16 %v2311
      %v2496 = vunpack.c.l.b16 %v2312
      %v2497 = vunpack.c.h.b16 %v2312
      %v2498 = vunpack.c.l.b16 %v2313
      %v2499 = vunpack.c.h.b16 %v2313
      %v2500 = vunpack.c.l.b16 %v2314
      %v2501 = vunpack.c.l.b16 %v2315
      %v2502 = vunpack.c.h.b16 %v2315
      %v2503 = vunpack.c.l.b16 %v2316
      %v2504 = vunpack.c.h.b16 %v2316
      %v2505 = vunpack.c.l.b16 %v2317
      %v2506 = vunpack.c.h.b16 %v2317
      %v2507 = vunpack.c.l.b16 %v2318
      %v2508 = vunpack.c.l.b16 %v2319
      %v2509 = vunpack.c.h.b16 %v2319
      %v2510 = vunpack.c.l.b16 %v2320
      %v2511 = vunpack.c.h.b16 %v2320
      %v2512 = vunpack.c.l.b16 %v2321
      %v2513 = vunpack.c.h.b16 %v2321
      %v2514 = vunpack.c.l.b16 %v2322
      %v2515 = vunpack.c.l.b16 %v2323
      %v2516 = vunpack.c.h.b16 %v2323
      %v2517 = vunpack.c.l.b16 %v2324
      %v2518 = vunpack.c.h.b16 %v2324
      %v2519 = vunpack.c.l.b16 %v2325
      %v2520 = vunpack.c.h.b16 %v2325
      %v2521 = vunpack.c.l.b16 %v2326
      %v2522 = vunpack.c.l.b16 %v2327
      %v2523 = vunpack.c.h.b16 %v2327
      %v2524 = vunpack.c.l.b16 %v2328
      %v2525 = vunpack.c.h.b16 %v2328
      %v2526 = vunpack.c.l.b16 %v2329
      %v2527 = vunpack.c.h.b16 %v2329
      %v2528 = vunpack.c.l.b16 %v2330
      %v2529 = vunpack.c.l.b16 %v2331
      %v2530 = vunpack.c.h.b16 %v2331
      %v2531 = vunpack.c.l.b16 %v2332
      %v2532 = vunpack.c.h.b16 %v2332
      %v2533 = vunpack.c.l.b16 %v2333
      %v2534 = vunpack.c.h.b16 %v2333
      %v2535 = vunpack.c.l.b16 %v2334
      %v2536 = vunpack.c.l.b16 %v2335
      %v2537 = vunpack.c.h.b16 %v2335
      %v2538 = vunpack.c.l.b16 %v2336
      %v2539 = vunpack.c.h.b16 %v2336
      %v2540 = vunpack.c.l.b16 %v2337
      %v2541 = vunpack.c.h.b16 %v2337
      %v2542 = vunpack.c.l.b16 %v2338
      %v2543 = vpack.c.b16 %v2438, %v2431
      %v2544 = vpack.c.b16 %v2439, %v2432
      %v2545 = vpack.c.b16 %v2440, %v2433
      %v2546 = vpack.c.b16 %v2441, %v2434
      %v2547 = vpack.c.b16 %v2442, %v2435
      %v2548 = vpack.c.b16 %v2443, %v2436
      %v2549 = vpack.c.b16 %v2444, %v2437
      %v2550 = vpack.c.b16 %v2452, %v2445
      %v2551 = vpack.c.b16 %v2453, %v2446
      %v2552 = vpack.c.b16 %v2454, %v2447
      %v2553 = vpack.c.b16 %v2455, %v2448
      %v2554 = vpack.c.b16 %v2456, %v2449
      %v2555 = vpack.c.b16 %v2457, %v2450
      %v2556 = vpack.c.b16 %v2458, %v2451
      %v2557 = vpack.c.b16 %v2466, %v2459
      %v2558 = vpack.c.b16 %v2467, %v2460
      %v2559 = vpack.c.b16 %v2468, %v2461
      %v2560 = vpack.c.b16 %v2469, %v2462
      %v2561 = vpack.c.b16 %v2470, %v2463
      %v2562 = vpack.c.b16 %v2471, %v2464
      %v2563 = vpack.c.b16 %v2472, %v2465
      %v2564 = vpack.c.b16 %v2480, %v2473
      %v2565 = vpack.c.b16 %v2481, %v2474
      %v2566 = vpack.c.b16 %v2482, %v2475
      %v2567 = vpack.c.b16 %v2483, %v2476
      %v2568 = vpack.c.b16 %v2484, %v2477
      %v2569 = vpack.c.b16 %v2485, %v2478
      %v2570 = vpack.c.b16 %v2486, %v2479
      %v2571 = vpack.c.b16 %v2494, %v2487
      %v2572 = vpack.c.b16 %v2495, %v2488
      %v2573 = vpack.c.b16 %v2496, %v2489
      %v2574 = vpack.c.b16 %v2497, %v2490
      %v2575 = vpack.c.b16 %v2498, %v2491
      %v2576 = vpack.c.b16 %v2499, %v2492
      %v2577 = vpack.c.b16 %v2500, %v2493
      %v2578 = vpack.c.b16 %v2508, %v2501
      %v2579 = vpack.c.b16 %v2509, %v2502
      %v2580 = vpack.c.b16 %v2510, %v2503
      %v2581 = vpack.c.b16 %v2511, %v2504
      %v2582 = vpack.c.b16 %v2512, %v2505
      %v2583 = vpack.c.b16 %v2513, %v2506
      %v2584 = vpack.c.b16 %v2514, %v2507
      %v2585 = vpack.c.b16 %v2522, %v2515
      %v2586 = vpack.c.b16 %v2523, %v2516
      %v2587 = vpack.c.b16 %v2524, %v2517
      %v2588 = vpack.c.b16 %v2525, %v2518
      %v2589 = vpack.c.b16 %v2526, %v2519
      %v2590 = vpack.c.b16 %v2527, %v2520
      %v2591 = vpack.c.b16 %v2528, %v2521
      %v2592 = vpack.c.b16 %v2536, %v2529
      %v2593 = vpack.c.b16 %v2537, %v2530
      %v2594 = vpack.c.b16 %v2538, %v2531
      %v2595 = vpack.c.b16 %v2539, %v2532
      %v2596 = vpack.c.b16 %v2540, %v2533
      %v2597 = vpack.c.b16 %v2541, %v2534
      %v2598 = vpack.c.b16 %v2542, %v2535
      %2655 = vmatprep.subr.bf16.mxu0 %v2593
      %2656 = vmatpush1.bf16.msra.mxu0 %v2592
      %2657 = vmatprep.subr.bf16.mxu0 %v2586
      %2658 = vmatpush1.bf16.msra.mxu0 %v2585
      %2659 = vmatprep.subr.bf16.mxu0 %v2579
      %2660 = vmatpush1.bf16.msra.mxu0 %v2578
      %2661 = vmatprep.subr.bf16.mxu0 %v2572
      %2662 = vmatpush1.bf16.msra.mxu0 %v2571
      %2663 = vmatprep.subr.bf16.mxu0 %v2565
      %2664 = vmatpush1.bf16.msra.mxu0 %v2564
      %2665 = vmatprep.subr.bf16.mxu0 %v2558
      %2666 = vmatpush1.bf16.msra.mxu0 %v2557
      %2667 = vmatprep.subr.bf16.mxu0 %v2551
      %2668 = vmatpush1.bf16.msra.mxu0 %v2550
      %2669 = vmatprep.subr.bf16.mxu0 %v2544
      %2670 = vmatpush1.bf16.msra.mxu0 %v2543
      %2671 = vmatprep.subr.bf16.mxu0 0
      %2672 = vmatpush2.bf16.msra.mxu0 0
      %2673 = vmatprep.subr.bf16.mxu0 0
      %2674 = vmatpush2.bf16.msra.mxu0 0
      %2675 = vmatprep.subr.bf16.mxu0 0
      %2676 = vmatpush2.bf16.msra.mxu0 0
      %2677 = vmatprep.subr.bf16.mxu0 0
      %2678 = vmatpush2.bf16.msra.mxu0 0
      %2679 = vmatprep.subr.bf16.mxu0 0
      %2680 = vmatpush2.bf16.msra.mxu0 0
      %2681 = vmatprep.subr.bf16.mxu0 0
      %2682 = vmatpush2.bf16.msra.mxu0 0
      %2683 = vmatprep.subr.bf16.mxu0 0
      %2684 = vmatpush2.bf16.msra.mxu0 0
      %2685 = vmatprep.subr.bf16.mxu0 0
      %2686 = vmatpush2.bf16.msra.mxu0 0
      %2687 = vmatprep.mubr.bf16.mxu0 0
      %2688 = vmatmul.mubr.bf16.gmra.mxu0 %v2267
      %v2689 = vpop.f32.mrf.mxu0
      %v2690 = vadd.f32 %v2342, %v2689
      %v2691 = vpop.f32.mrf.mxu0
      %v2692 = vadd.f32 %v2346, %v2691
      %v2693 = vpop.f32.mrf.mxu0
      %v2694 = vadd.f32 %v2342, %v2693
      %v2695 = vpop.f32.mrf.mxu0
      %v2696 = vadd.f32 %v2346, %v2695
      %2697 = vmatprep.mubr.bf16.mxu0 0
      %2698 = vmatmul.mubr.bf16.gmra.mxu0 %v2268
      %v2699 = vpop.f32.mrf.mxu0
      %v2700 = vadd.f32 %v2342, %v2699
      %v2701 = vpop.f32.mrf.mxu0
      %v2702 = vadd.f32 %v2346, %v2701
      %v2703 = vpop.f32.mrf.mxu0
      %v2704 = vadd.f32 %v2342, %v2703
      %v2705 = vpop.f32.mrf.mxu0
      %v2706 = vadd.f32 %v2346, %v2705
      %2707 = vmatprep.mubr.bf16.mxu0 0
      %2708 = vmatmul.mubr.bf16.gmra.mxu0 %v2269
      %v2709 = vpop.f32.mrf.mxu0
      %v2710 = vadd.f32 %v2342, %v2709
      %v2711 = vpop.f32.mrf.mxu0
      %v2712 = vadd.f32 %v2346, %v2711
      %v2713 = vpop.f32.mrf.mxu0
      %v2714 = vadd.f32 %v2342, %v2713
      %v2715 = vpop.f32.mrf.mxu0
      %v2716 = vadd.f32 %v2346, %v2715
      %2717 = vmatprep.mubr.bf16.mxu0 0
      %2718 = vmatmul.mubr.bf16.gmra.mxu0 %v2270
      %v2719 = vpop.f32.mrf.mxu0
      %v2720 = vadd.f32 %v2342, %v2719
      %v2721 = vpop.f32.mrf.mxu0
      %v2722 = vadd.f32 %v2346, %v2721
      %v2723 = vpop.f32.mrf.mxu0
      %v2724 = vadd.f32 %v2342, %v2723
      %v2725 = vpop.f32.mrf.mxu0
      %v2726 = vadd.f32 %v2346, %v2725
      %2727 = vmatprep.mubr.bf16.mxu0 0
      %2728 = vmatmul.mubr.bf16.gmra.mxu0 %v2271
      %v2729 = vpop.f32.mrf.mxu0
      %v2730 = vadd.f32 %v2342, %v2729
      %v2731 = vpop.f32.mrf.mxu0
      %v2732 = vadd.f32 %v2346, %v2731
      %v2733 = vpop.f32.mrf.mxu0
      %v2734 = vadd.f32 %v2342, %v2733
      %v2735 = vpop.f32.mrf.mxu0
      %v2736 = vadd.f32 %v2346, %v2735
      %2737 = vmatprep.mubr.bf16.mxu0 0
      %2738 = vmatmul.mubr.bf16.gmra.mxu0 %v2272
      %v2739 = vpop.f32.mrf.mxu0
      %v2740 = vadd.f32 %v2342, %v2739
      %v2741 = vpop.f32.mrf.mxu0
      %v2742 = vadd.f32 %v2346, %v2741
      %v2743 = vpop.f32.mrf.mxu0
      %v2744 = vadd.f32 %v2342, %v2743
      %v2745 = vpop.f32.mrf.mxu0
      %v2746 = vadd.f32 %v2346, %v2745
      %2747 = vmatprep.mubr.bf16.mxu0 0
      %2748 = vmatmul.mubr.bf16.gmra.mxu0 %v2273
      %v2749 = vpop.f32.mrf.mxu0
      %v2750 = vadd.f32 %v2342, %v2749
      %v2751 = vpop.f32.mrf.mxu0
      %v2752 = vadd.f32 %v2346, %v2751
      %v2753 = vpop.f32.mrf.mxu0
      %v2754 = vadd.f32 %v2342, %v2753
      %v2755 = vpop.f32.mrf.mxu0
      %v2756 = vadd.f32 %v2346, %v2755
      %2757 = vmatprep.mubr.bf16.mxu0 0
      %2758 = vmatmul.mubr.bf16.gmra.mxu0 %v2274
      %v2759 = vpop.f32.mrf.mxu0
      %v2760 = vadd.f32 %v2342, %v2759
      %v2761 = vpop.f32.mrf.mxu0
      %v2762 = vadd.f32 %v2346, %v2761
      %v2763 = vpop.f32.mrf.mxu0
      %v2764 = vadd.f32 %v2342, %v2763
      %v2765 = vpop.f32.mrf.mxu0
      %v2766 = vadd.f32 %v2346, %v2765
      %2767 = vdwg.mxu0
      %2768 = vmatprep.subr.bf16.mxu0 %v2595
      %2769 = vmatpush1.bf16.msra.mxu0 %v2594
      %2770 = vmatprep.subr.bf16.mxu0 %v2588
      %2771 = vmatpush1.bf16.msra.mxu0 %v2587
      %2772 = vmatprep.subr.bf16.mxu0 %v2581
      %2773 = vmatpush1.bf16.msra.mxu0 %v2580
      %2774 = vmatprep.subr.bf16.mxu0 %v2574
      %2775 = vmatpush1.bf16.msra.mxu0 %v2573
      %2776 = vmatprep.subr.bf16.mxu0 %v2567
      %2777 = vmatpush1.bf16.msra.mxu0 %v2566
      %2778 = vmatprep.subr.bf16.mxu0 %v2560
      %2779 = vmatpush1.bf16.msra.mxu0 %v2559
      %2780 = vmatprep.subr.bf16.mxu0 %v2553
      %2781 = vmatpush1.bf16.msra.mxu0 %v2552
      %2782 = vmatprep.subr.bf16.mxu0 %v2546
      %2783 = vmatpush1.bf16.msra.mxu0 %v2545
      %2784 = vmatprep.subr.bf16.mxu0 0
      %2785 = vmatpush2.bf16.msra.mxu0 0
      %2786 = vmatprep.subr.bf16.mxu0 0
      %2787 = vmatpush2.bf16.msra.mxu0 0
      %2788 = vmatprep.subr.bf16.mxu0 0
      %2789 = vmatpush2.bf16.msra.mxu0 0
      %2790 = vmatprep.subr.bf16.mxu0 0
      %2791 = vmatpush2.bf16.msra.mxu0 0
      %2792 = vmatprep.subr.bf16.mxu0 0
      %2793 = vmatpush2.bf16.msra.mxu0 0
      %2794 = vmatprep.subr.bf16.mxu0 0
      %2795 = vmatpush2.bf16.msra.mxu0 0
      %2796 = vmatprep.subr.bf16.mxu0 0
      %2797 = vmatpush2.bf16.msra.mxu0 0
      %2798 = vmatprep.subr.bf16.mxu0 0
      %2799 = vmatpush2.bf16.msra.mxu0 0
      %2800 = vmatprep.mubr.bf16.mxu0 0
      %2801 = vmatmul.mubr.bf16.gmra.mxu0 %v2267
      %v2802 = vpop.f32.mrf.mxu0
      %v2803 = vadd.f32 %v2350, %v2802
      %v2804 = vpop.f32.mrf.mxu0
      %v2805 = vadd.f32 %v2354, %v2804
      %v2806 = vpop.f32.mrf.mxu0
      %v2807 = vadd.f32 %v2350, %v2806
      %v2808 = vpop.f32.mrf.mxu0
      %v2809 = vadd.f32 %v2354, %v2808
      %2810 = vmatprep.mubr.bf16.mxu0 0
      %2811 = vmatmul.mubr.bf16.gmra.mxu0 %v2268
      %v2812 = vpop.f32.mrf.mxu0
      %v2813 = vadd.f32 %v2350, %v2812
      %v2814 = vpop.f32.mrf.mxu0
      %v2815 = vadd.f32 %v2354, %v2814
      %v2816 = vpop.f32.mrf.mxu0
      %v2817 = vadd.f32 %v2350, %v2816
      %v2818 = vpop.f32.mrf.mxu0
      %v2819 = vadd.f32 %v2354, %v2818
      %2820 = vmatprep.mubr.bf16.mxu0 0
      %2821 = vmatmul.mubr.bf16.gmra.mxu0 %v2269
      %v2822 = vpop.f32.mrf.mxu0
      %v2823 = vadd.f32 %v2350, %v2822
      %v2824 = vpop.f32.mrf.mxu0
      %v2825 = vadd.f32 %v2354, %v2824
      %v2826 = vpop.f32.mrf.mxu0
      %v2827 = vadd.f32 %v2350, %v2826
      %v2828 = vpop.f32.mrf.mxu0
      %v2829 = vadd.f32 %v2354, %v2828
      %2830 = vmatprep.mubr.bf16.mxu0 0
      %2831 = vmatmul.mubr.bf16.gmra.mxu0 %v2270
      %v2832 = vpop.f32.mrf.mxu0
      %v2833 = vadd.f32 %v2350, %v2832
      %v2834 = vpop.f32.mrf.mxu0
      %v2835 = vadd.f32 %v2354, %v2834
      %v2836 = vpop.f32.mrf.mxu0
      %v2837 = vadd.f32 %v2350, %v2836
      %v2838 = vpop.f32.mrf.mxu0
      %v2839 = vadd.f32 %v2354, %v2838
      %2840 = vmatprep.mubr.bf16.mxu0 0
      %2841 = vmatmul.mubr.bf16.gmra.mxu0 %v2271
      %v2842 = vpop.f32.mrf.mxu0
      %v2843 = vadd.f32 %v2350, %v2842
      %v2844 = vpop.f32.mrf.mxu0
      %v2845 = vadd.f32 %v2354, %v2844
      %v2846 = vpop.f32.mrf.mxu0
      %v2847 = vadd.f32 %v2350, %v2846
      %v2848 = vpop.f32.mrf.mxu0
      %v2849 = vadd.f32 %v2354, %v2848
      %2850 = vmatprep.mubr.bf16.mxu0 0
      %2851 = vmatmul.mubr.bf16.gmra.mxu0 %v2272
      %v2852 = vpop.f32.mrf.mxu0
      %v2853 = vadd.f32 %v2350, %v2852
      %v2854 = vpop.f32.mrf.mxu0
      %v2855 = vadd.f32 %v2354, %v2854
      %v2856 = vpop.f32.mrf.mxu0
      %v2857 = vadd.f32 %v2350, %v2856
      %v2858 = vpop.f32.mrf.mxu0
      %v2859 = vadd.f32 %v2354, %v2858
      %2860 = vmatprep.mubr.bf16.mxu0 0
      %2861 = vmatmul.mubr.bf16.gmra.mxu0 %v2273
      %v2862 = vpop.f32.mrf.mxu0
      %v2863 = vadd.f32 %v2350, %v2862
      %v2864 = vpop.f32.mrf.mxu0
      %v2865 = vadd.f32 %v2354, %v2864
      %v2866 = vpop.f32.mrf.mxu0
      %v2867 = vadd.f32 %v2350, %v2866
      %v2868 = vpop.f32.mrf.mxu0
      %v2869 = vadd.f32 %v2354, %v2868
      %2870 = vmatprep.mubr.bf16.mxu0 0
      %2871 = vmatmul.mubr.bf16.gmra.mxu0 %v2274
      %v2872 = vpop.f32.mrf.mxu0
      %v2873 = vadd.f32 %v2350, %v2872
      %v2874 = vpop.f32.mrf.mxu0
      %v2875 = vadd.f32 %v2354, %v2874
      %v2876 = vpop.f32.mrf.mxu0
      %v2877 = vadd.f32 %v2350, %v2876
      %v2878 = vpop.f32.mrf.mxu0
      %v2879 = vadd.f32 %v2354, %v2878
      %2880 = vdwg.mxu0
      %2881 = vmatprep.subr.bf16.mxu0 %v2597
      %2882 = vmatpush1.bf16.msra.mxu0 %v2596
      %2883 = vmatprep.subr.bf16.mxu0 %v2590
      %2884 = vmatpush1.bf16.msra.mxu0 %v2589
      %2885 = vmatprep.subr.bf16.mxu0 %v2583
      %2886 = vmatpush1.bf16.msra.mxu0 %v2582
      %2887 = vmatprep.subr.bf16.mxu0 %v2576
      %2888 = vmatpush1.bf16.msra.mxu0 %v2575
      %2889 = vmatprep.subr.bf16.mxu0 %v2569
      %2890 = vmatpush1.bf16.msra.mxu0 %v2568
      %2891 = vmatprep.subr.bf16.mxu0 %v2562
      %2892 = vmatpush1.bf16.msra.mxu0 %v2561
      %2893 = vmatprep.subr.bf16.mxu0 %v2555
      %2894 = vmatpush1.bf16.msra.mxu0 %v2554
      %2895 = vmatprep.subr.bf16.mxu0 %v2548
      %2896 = vmatpush1.bf16.msra.mxu0 %v2547
      %2897 = vmatprep.subr.bf16.mxu0 0
      %2898 = vmatpush2.bf16.msra.mxu0 0
      %2899 = vmatprep.subr.bf16.mxu0 0
      %2900 = vmatpush2.bf16.msra.mxu0 0
      %2901 = vmatprep.subr.bf16.mxu0 0
      %2902 = vmatpush2.bf16.msra.mxu0 0
      %2903 = vmatprep.subr.bf16.mxu0 0
      %2904 = vmatpush2.bf16.msra.mxu0 0
      %2905 = vmatprep.subr.bf16.mxu0 0
      %2906 = vmatpush2.bf16.msra.mxu0 0
      %2907 = vmatprep.subr.bf16.mxu0 0
      %2908 = vmatpush2.bf16.msra.mxu0 0
      %2909 = vmatprep.subr.bf16.mxu0 0
      %2910 = vmatpush2.bf16.msra.mxu0 0
      %2911 = vmatprep.subr.bf16.mxu0 0
      %2912 = vmatpush2.bf16.msra.mxu0 0
      %2913 = vmatprep.mubr.bf16.mxu0 0
      %2914 = vmatmul.mubr.bf16.gmra.mxu0 %v2267
      %v2915 = vpop.f32.mrf.mxu0
      %v2916 = vadd.f32 %v2358, %v2915
      %v2917 = vpop.f32.mrf.mxu0
      %v2918 = vadd.f32 %v2362, %v2917
      %v2919 = vpop.f32.mrf.mxu0
      %v2920 = vadd.f32 %v2358, %v2919
      %v2921 = vpop.f32.mrf.mxu0
      %v2922 = vadd.f32 %v2362, %v2921
      %2923 = vmatprep.mubr.bf16.mxu0 0
      %2924 = vmatmul.mubr.bf16.gmra.mxu0 %v2268
      %v2925 = vpop.f32.mrf.mxu0
      %v2926 = vadd.f32 %v2358, %v2925
      %v2927 = vpop.f32.mrf.mxu0
      %v2928 = vadd.f32 %v2362, %v2927
      %v2929 = vpop.f32.mrf.mxu0
      %v2930 = vadd.f32 %v2358, %v2929
      %v2931 = vpop.f32.mrf.mxu0
      %v2932 = vadd.f32 %v2362, %v2931
      %2933 = vmatprep.mubr.bf16.mxu0 0
      %2934 = vmatmul.mubr.bf16.gmra.mxu0 %v2269
      %v2935 = vpop.f32.mrf.mxu0
      %v2936 = vadd.f32 %v2358, %v2935
      %v2937 = vpop.f32.mrf.mxu0
      %v2938 = vadd.f32 %v2362, %v2937
      %v2939 = vpop.f32.mrf.mxu0
      %v2940 = vadd.f32 %v2358, %v2939
      %v2941 = vpop.f32.mrf.mxu0
      %v2942 = vadd.f32 %v2362, %v2941
      %2943 = vmatprep.mubr.bf16.mxu0 0
      %2944 = vmatmul.mubr.bf16.gmra.mxu0 %v2270
      %v2945 = vpop.f32.mrf.mxu0
      %v2946 = vadd.f32 %v2358, %v2945
      %v2947 = vpop.f32.mrf.mxu0
      %v2948 = vadd.f32 %v2362, %v2947
      %v2949 = vpop.f32.mrf.mxu0
      %v2950 = vadd.f32 %v2358, %v2949
      %v2951 = vpop.f32.mrf.mxu0
      %v2952 = vadd.f32 %v2362, %v2951
      %2953 = vmatprep.mubr.bf16.mxu0 0
      %2954 = vmatmul.mubr.bf16.gmra.mxu0 %v2271
      %v2955 = vpop.f32.mrf.mxu0
      %v2956 = vadd.f32 %v2358, %v2955
      %v2957 = vpop.f32.mrf.mxu0
      %v2958 = vadd.f32 %v2362, %v2957
      %v2959 = vpop.f32.mrf.mxu0
      %v2960 = vadd.f32 %v2358, %v2959
      %v2961 = vpop.f32.mrf.mxu0
      %v2962 = vadd.f32 %v2362, %v2961
      %2963 = vmatprep.mubr.bf16.mxu0 0
      %2964 = vmatmul.mubr.bf16.gmra.mxu0 %v2272
      %v2965 = vpop.f32.mrf.mxu0
      %v2966 = vadd.f32 %v2358, %v2965
      %v2967 = vpop.f32.mrf.mxu0
      %v2968 = vadd.f32 %v2362, %v2967
      %v2969 = vpop.f32.mrf.mxu0
      %v2970 = vadd.f32 %v2358, %v2969
      %v2971 = vpop.f32.mrf.mxu0
      %v2972 = vadd.f32 %v2362, %v2971
      %2973 = vmatprep.mubr.bf16.mxu0 0
      %2974 = vmatmul.mubr.bf16.gmra.mxu0 %v2273
      %v2975 = vpop.f32.mrf.mxu0
      %v2976 = vadd.f32 %v2358, %v2975
      %v2977 = vpop.f32.mrf.mxu0
      %v2978 = vadd.f32 %v2362, %v2977
      %v2979 = vpop.f32.mrf.mxu0
      %v2980 = vadd.f32 %v2358, %v2979
      %v2981 = vpop.f32.mrf.mxu0
      %v2982 = vadd.f32 %v2362, %v2981
      %2983 = vmatprep.mubr.bf16.mxu0 0
      %2984 = vmatmul.mubr.bf16.gmra.mxu0 %v2274
      %v2985 = vpop.f32.mrf.mxu0
      %v2986 = vadd.f32 %v2358, %v2985
      %v2987 = vpop.f32.mrf.mxu0
      %v2988 = vadd.f32 %v2362, %v2987
      %v2989 = vpop.f32.mrf.mxu0
      %v2990 = vadd.f32 %v2358, %v2989
      %v2991 = vpop.f32.mrf.mxu0
      %v2992 = vadd.f32 %v2362, %v2991
      %2993 = vdwg.mxu0
      %2994 = vmatprep.subr.bf16.mxu0 0
      %2995 = vmatpush1.bf16.msra.mxu0 %v2598
      %2996 = vmatprep.subr.bf16.mxu0 0
      %2997 = vmatpush1.bf16.msra.mxu0 %v2591
      %2998 = vmatprep.subr.bf16.mxu0 0
      %2999 = vmatpush1.bf16.msra.mxu0 %v2584
      %3000 = vmatprep.subr.bf16.mxu0 0
      %3001 = vmatpush1.bf16.msra.mxu0 %v2577
      %3002 = vmatprep.subr.bf16.mxu0 0
      %3003 = vmatpush1.bf16.msra.mxu0 %v2570
      %3004 = vmatprep.subr.bf16.mxu0 0
      %3005 = vmatpush1.bf16.msra.mxu0 %v2563
      %3006 = vmatprep.subr.bf16.mxu0 0
      %3007 = vmatpush1.bf16.msra.mxu0 %v2556
      %3008 = vmatprep.subr.bf16.mxu0 0
      %3009 = vmatpush1.bf16.msra.mxu0 %v2549
      %3010 = vmatprep.subr.bf16.mxu0 0
      %3011 = vmatpush2.bf16.msra.mxu0 0
      %3012 = vmatprep.subr.bf16.mxu0 0
      %3013 = vmatpush2.bf16.msra.mxu0 0
      %3014 = vmatprep.subr.bf16.mxu0 0
      %3015 = vmatpush2.bf16.msra.mxu0 0
      %3016 = vmatprep.subr.bf16.mxu0 0
      %3017 = vmatpush2.bf16.msra.mxu0 0
      %3018 = vmatprep.subr.bf16.mxu0 0
      %3019 = vmatpush2.bf16.msra.mxu0 0
      %3020 = vmatprep.subr.bf16.mxu0 0
      %3021 = vmatpush2.bf16.msra.mxu0 0
      %3022 = vmatprep.subr.bf16.mxu0 0
      %3023 = vmatpush2.bf16.msra.mxu0 0
      %3024 = vmatprep.subr.bf16.mxu0 0
      %3025 = vmatpush2.bf16.msra.mxu0 0
      %3026 = vmatprep.mubr.bf16.mxu0 0
      %3027 = vmatmul.mubr.bf16.gmra.mxu0 %v2267
      %v3028 = vpop.f32.mrf.mxu0
      %v3029 = vadd.f32 %v2366, %v3028
      %v3030 = vpop.f32.mrf.mxu0
      %v3031 = vpop.f32.mrf.mxu0
      %v3032 = vadd.f32 %v2366, %v3031
      %v3033 = vpop.f32.mrf.mxu0
      %3034 = vmatprep.mubr.bf16.mxu0 0
      %3035 = vmatmul.mubr.bf16.gmra.mxu0 %v2268
      %v3036 = vpop.f32.mrf.mxu0
      %v3037 = vadd.f32 %v2366, %v3036
      %v3038 = vpop.f32.mrf.mxu0
      %v3039 = vpop.f32.mrf.mxu0
      %v3040 = vadd.f32 %v2366, %v3039
      %v3041 = vpop.f32.mrf.mxu0
      %3042 = vmatprep.mubr.bf16.mxu0 0
      %3043 = vmatmul.mubr.bf16.gmra.mxu0 %v2269
      %v3044 = vpop.f32.mrf.mxu0
      %v3045 = vadd.f32 %v2366, %v3044
      %v3046 = vpop.f32.mrf.mxu0
      %v3047 = vpop.f32.mrf.mxu0
      %v3048 = vadd.f32 %v2366, %v3047
      %v3049 = vpop.f32.mrf.mxu0
      %3050 = vmatprep.mubr.bf16.mxu0 0
      %3051 = vmatmul.mubr.bf16.gmra.mxu0 %v2270
      %v3052 = vpop.f32.mrf.mxu0
      %v3053 = vadd.f32 %v2366, %v3052
      %v3054 = vpop.f32.mrf.mxu0
      %v3055 = vpop.f32.mrf.mxu0
      %v3056 = vadd.f32 %v2366, %v3055
      %v3057 = vpop.f32.mrf.mxu0
      %3058 = vmatprep.mubr.bf16.mxu0 0
      %3059 = vmatmul.mubr.bf16.gmra.mxu0 %v2271
      %v3060 = vpop.f32.mrf.mxu0
      %v3061 = vadd.f32 %v2366, %v3060
      %v3062 = vpop.f32.mrf.mxu0
      %v3063 = vpop.f32.mrf.mxu0
      %v3064 = vadd.f32 %v2366, %v3063
      %v3065 = vpop.f32.mrf.mxu0
      %3066 = vmatprep.mubr.bf16.mxu0 0
      %3067 = vmatmul.mubr.bf16.gmra.mxu0 %v2272
      %v3068 = vpop.f32.mrf.mxu0
      %v3069 = vadd.f32 %v2366, %v3068
      %v3070 = vpop.f32.mrf.mxu0
      %v3071 = vpop.f32.mrf.mxu0
      %v3072 = vadd.f32 %v2366, %v3071
      %v3073 = vpop.f32.mrf.mxu0
      %3074 = vmatprep.mubr.bf16.mxu0 0
      %3075 = vmatmul.mubr.bf16.gmra.mxu0 %v2273
      %v3076 = vpop.f32.mrf.mxu0
      %v3077 = vadd.f32 %v2366, %v3076
      %v3078 = vpop.f32.mrf.mxu0
      %v3079 = vpop.f32.mrf.mxu0
      %v3080 = vadd.f32 %v2366, %v3079
      %v3081 = vpop.f32.mrf.mxu0
      %3082 = vmatprep.mubr.bf16.mxu0 0
      %3083 = vmatmul.mubr.bf16.gmra.mxu0 %v2274
      %v3084 = vpop.f32.mrf.mxu0
      %v3085 = vadd.f32 %v2366, %v3084
      %v3086 = vpop.f32.mrf.mxu0
      %v3087 = vpop.f32.mrf.mxu0
      %v3088 = vadd.f32 %v2366, %v3087
      %v3089 = vpop.f32.mrf.mxu0
      %3090 = vdwg.mxu0
      %v3091 = vxor.u32 %v2690, 2147483648
      %v3092 = vxor.u32 %v2692, 2147483648
      %v3093 = vxor.u32 %v2803, 2147483648
      %v3094 = vxor.u32 %v2805, 2147483648
      %v3095 = vxor.u32 %v2916, 2147483648
      %v3096 = vxor.u32 %v2918, 2147483648
      %v3097 = vxor.u32 %v3029, 2147483648
      %v3098 = vxor.u32 %v2694, 2147483648
      %v3099 = vxor.u32 %v2696, 2147483648
      %v3100 = vxor.u32 %v2807, 2147483648
      %v3101 = vxor.u32 %v2809, 2147483648
      %v3102 = vxor.u32 %v2920, 2147483648
      %v3103 = vxor.u32 %v2922, 2147483648
      %v3104 = vxor.u32 %v3032, 2147483648
      %v3105 = vxor.u32 %v2700, 2147483648
      %v3106 = vxor.u32 %v2702, 2147483648
      %v3107 = vxor.u32 %v2813, 2147483648
      %v3108 = vxor.u32 %v2815, 2147483648
      %v3109 = vxor.u32 %v2926, 2147483648
      %v3110 = vxor.u32 %v2928, 2147483648
      %v3111 = vxor.u32 %v3037, 2147483648
      %v3112 = vxor.u32 %v2704, 2147483648
      %v3113 = vxor.u32 %v2706, 2147483648
      %v3114 = vxor.u32 %v2817, 2147483648
      %v3115 = vxor.u32 %v2819, 2147483648
      %v3116 = vxor.u32 %v2930, 2147483648
      %v3117 = vxor.u32 %v2932, 2147483648
      %v3118 = vxor.u32 %v3040, 2147483648
      %v3119 = vxor.u32 %v2710, 2147483648
      %v3120 = vxor.u32 %v2712, 2147483648
      %v3121 = vxor.u32 %v2823, 2147483648
      %v3122 = vxor.u32 %v2825, 2147483648
      %v3123 = vxor.u32 %v2936, 2147483648
      %v3124 = vxor.u32 %v2938, 2147483648
      %v3125 = vxor.u32 %v3045, 2147483648
      %v3126 = vxor.u32 %v2714, 2147483648
      %v3127 = vxor.u32 %v2716, 2147483648
      %v3128 = vxor.u32 %v2827, 2147483648
      %v3129 = vxor.u32 %v2829, 2147483648
      %v3130 = vxor.u32 %v2940, 2147483648
      %v3131 = vxor.u32 %v2942, 2147483648
      %v3132 = vxor.u32 %v3048, 2147483648
      %v3133 = vxor.u32 %v2720, 2147483648
      %v3134 = vxor.u32 %v2722, 2147483648
      %v3135 = vxor.u32 %v2833, 2147483648
      %v3136 = vxor.u32 %v2835, 2147483648
      %v3137 = vxor.u32 %v2946, 2147483648
      %v3138 = vxor.u32 %v2948, 2147483648
      %v3139 = vxor.u32 %v3053, 2147483648
      %v3140 = vxor.u32 %v2724, 2147483648
      %v3141 = vxor.u32 %v2726, 2147483648
      %v3142 = vxor.u32 %v2837, 2147483648
      %v3143 = vxor.u32 %v2839, 2147483648
      %v3144 = vxor.u32 %v2950, 2147483648
      %v3145 = vxor.u32 %v2952, 2147483648
      %v3146 = vxor.u32 %v3056, 2147483648
      %v3147 = vxor.u32 %v2730, 2147483648
      %v3148 = vxor.u32 %v2732, 2147483648
      %v3149 = vxor.u32 %v2843, 2147483648
      %v3150 = vxor.u32 %v2845, 2147483648
      %v3151 = vxor.u32 %v2956, 2147483648
      %v3152 = vxor.u32 %v2958, 2147483648
      %v3153 = vxor.u32 %v3061, 2147483648
      %v3154 = vxor.u32 %v2734, 2147483648
      %v3155 = vxor.u32 %v2736, 2147483648
      %v3156 = vxor.u32 %v2847, 2147483648
      %v3157 = vxor.u32 %v2849, 2147483648
      %v3158 = vxor.u32 %v2960, 2147483648
      %v3159 = vxor.u32 %v2962, 2147483648
      %v3160 = vxor.u32 %v3064, 2147483648
      %v3161 = vxor.u32 %v2740, 2147483648
      %v3162 = vxor.u32 %v2742, 2147483648
      %v3163 = vxor.u32 %v2853, 2147483648
      %v3164 = vxor.u32 %v2855, 2147483648
      %v3165 = vxor.u32 %v2966, 2147483648
      %v3166 = vxor.u32 %v2968, 2147483648
      %v3167 = vxor.u32 %v3069, 2147483648
      %v3168 = vxor.u32 %v2744, 2147483648
      %v3169 = vxor.u32 %v2746, 2147483648
      %v3170 = vxor.u32 %v2857, 2147483648
      %v3171 = vxor.u32 %v2859, 2147483648
      %v3172 = vxor.u32 %v2970, 2147483648
      %v3173 = vxor.u32 %v2972, 2147483648
      %v3174 = vxor.u32 %v3072, 2147483648
      %v3175 = vxor.u32 %v2750, 2147483648
      %v3176 = vxor.u32 %v2752, 2147483648
      %v3177 = vxor.u32 %v2863, 2147483648
      %v3178 = vxor.u32 %v2865, 2147483648
      %v3179 = vxor.u32 %v2976, 2147483648
      %v3180 = vxor.u32 %v2978, 2147483648
      %v3181 = vxor.u32 %v3077, 2147483648
      %v3182 = vxor.u32 %v2754, 2147483648
      %v3183 = vxor.u32 %v2756, 2147483648
      %v3184 = vxor.u32 %v2867, 2147483648
      %v3185 = vxor.u32 %v2869, 2147483648
      %v3186 = vxor.u32 %v2980, 2147483648
      %v3187 = vxor.u32 %v2982, 2147483648
      %v3188 = vxor.u32 %v3080, 2147483648
      %v3189 = vxor.u32 %v2760, 2147483648
      %v3190 = vxor.u32 %v2762, 2147483648
      %v3191 = vxor.u32 %v2873, 2147483648
      %v3192 = vxor.u32 %v2875, 2147483648
      %v3193 = vxor.u32 %v2986, 2147483648
      %v3194 = vxor.u32 %v2988, 2147483648
      %v3195 = vxor.u32 %v3085, 2147483648
      %v3196 = vxor.u32 %v2764, 2147483648
      %v3197 = vxor.u32 %v2766, 2147483648
      %v3198 = vxor.u32 %v2877, 2147483648
      %v3199 = vxor.u32 %v2879, 2147483648
      %v3200 = vxor.u32 %v2990, 2147483648
      %v3201 = vxor.u32 %v2992, 2147483648
      %v3202 = vxor.u32 %v3088, 2147483648
      %v3203 = vmul.f32 %v3091, 1.442695
      %v3204 = vpow.pop %v3203
      %v3205 = vmul.f32 %v3092, 1.442695
      %v3206 = vpow.pop %v3205
      %v3207 = vmul.f32 %v3093, 1.442695
      %v3208 = vpow.pop %v3207
      %v3209 = vmul.f32 %v3094, 1.442695
      %v3210 = vpow.pop %v3209
      %v3211 = vmul.f32 %v3095, 1.442695
      %v3212 = vpow.pop %v3211
      %v3213 = vmul.f32 %v3096, 1.442695
      %v3214 = vpow.pop %v3213
      %v3215 = vmul.f32 %v3097, 1.442695
      %v3216 = vpow.pop %v3215
      %v3217 = vmul.f32 %v3098, 1.442695
      %v3218 = vpow.pop %v3217
      %v3219 = vmul.f32 %v3099, 1.442695
      %v3220 = vpow.pop %v3219
      %v3221 = vmul.f32 %v3100, 1.442695
      %v3222 = vpow.pop %v3221
      %v3223 = vmul.f32 %v3101, 1.442695
      %v3224 = vpow.pop %v3223
      %v3225 = vmul.f32 %v3102, 1.442695
      %v3226 = vpow.pop %v3225
      %v3227 = vmul.f32 %v3103, 1.442695
      %v3228 = vpow.pop %v3227
      %v3229 = vmul.f32 %v3104, 1.442695
      %v3230 = vpow.pop %v3229
      %v3231 = vmul.f32 %v3105, 1.442695
      %v3232 = vpow.pop %v3231
      %v3233 = vmul.f32 %v3106, 1.442695
      %v3234 = vpow.pop %v3233
      %v3235 = vmul.f32 %v3107, 1.442695
      %v3236 = vpow.pop %v3235
      %v3237 = vmul.f32 %v3108, 1.442695
      %v3238 = vpow.pop %v3237
      %v3239 = vmul.f32 %v3109, 1.442695
      %v3240 = vpow.pop %v3239
      %v3241 = vmul.f32 %v3110, 1.442695
      %v3242 = vpow.pop %v3241
      %v3243 = vmul.f32 %v3111, 1.442695
      %v3244 = vpow.pop %v3243
      %v3245 = vmul.f32 %v3112, 1.442695
      %v3246 = vpow.pop %v3245
      %v3247 = vmul.f32 %v3113, 1.442695
      %v3248 = vpow.pop %v3247
      %v3249 = vmul.f32 %v3114, 1.442695
      %v3250 = vpow.pop %v3249
      %v3251 = vmul.f32 %v3115, 1.442695
      %v3252 = vpow.pop %v3251
      %v3253 = vmul.f32 %v3116, 1.442695
      %v3254 = vpow.pop %v3253
      %v3255 = vmul.f32 %v3117, 1.442695
      %v3256 = vpow.pop %v3255
      %v3257 = vmul.f32 %v3118, 1.442695
      %v3258 = vpow.pop %v3257
      %v3259 = vmul.f32 %v3119, 1.442695
      %v3260 = vpow.pop %v3259
      %v3261 = vmul.f32 %v3120, 1.442695
      %v3262 = vpow.pop %v3261
      %v3263 = vmul.f32 %v3121, 1.442695
      %v3264 = vpow.pop %v3263
      %v3265 = vmul.f32 %v3122, 1.442695
      %v3266 = vpow.pop %v3265
      %v3267 = vmul.f32 %v3123, 1.442695
      %v3268 = vpow.pop %v3267
      %v3269 = vmul.f32 %v3124, 1.442695
      %v3270 = vpow.pop %v3269
      %v3271 = vmul.f32 %v3125, 1.442695
      %v3272 = vpow.pop %v3271
      %v3273 = vmul.f32 %v3126, 1.442695
      %v3274 = vpow.pop %v3273
      %v3275 = vmul.f32 %v3127, 1.442695
      %v3276 = vpow.pop %v3275
      %v3277 = vmul.f32 %v3128, 1.442695
      %v3278 = vpow.pop %v3277
      %v3279 = vmul.f32 %v3129, 1.442695
      %v3280 = vpow.pop %v3279
      %v3281 = vmul.f32 %v3130, 1.442695
      %v3282 = vpow.pop %v3281
      %v3283 = vmul.f32 %v3131, 1.442695
      %v3284 = vpow.pop %v3283
      %v3285 = vmul.f32 %v3132, 1.442695
      %v3286 = vpow.pop %v3285
      %v3287 = vmul.f32 %v3133, 1.442695
      %v3288 = vpow.pop %v3287
      %v3289 = vmul.f32 %v3134, 1.442695
      %v3290 = vpow.pop %v3289
      %v3291 = vmul.f32 %v3135, 1.442695
      %v3292 = vpow.pop %v3291
      %v3293 = vmul.f32 %v3136, 1.442695
      %v3294 = vpow.pop %v3293
      %v3295 = vmul.f32 %v3137, 1.442695
      %v3296 = vpow.pop %v3295
      %v3297 = vmul.f32 %v3138, 1.442695
      %v3298 = vpow.pop %v3297
      %v3299 = vmul.f32 %v3139, 1.442695
      %v3300 = vpow.pop %v3299
      %v3301 = vmul.f32 %v3140, 1.442695
      %v3302 = vpow.pop %v3301
      %v3303 = vmul.f32 %v3141, 1.442695
      %v3304 = vpow.pop %v3303
      %v3305 = vmul.f32 %v3142, 1.442695
      %v3306 = vpow.pop %v3305
      %v3307 = vmul.f32 %v3143, 1.442695
      %v3308 = vpow.pop %v3307
      %v3309 = vmul.f32 %v3144, 1.442695
      %v3310 = vpow.pop %v3309
      %v3311 = vmul.f32 %v3145, 1.442695
      %v3312 = vpow.pop %v3311
      %v3313 = vmul.f32 %v3146, 1.442695
      %v3314 = vpow.pop %v3313
      %v3315 = vmul.f32 %v3147, 1.442695
      %v3316 = vpow.pop %v3315
      %v3317 = vmul.f32 %v3148, 1.442695
      %v3318 = vpow.pop %v3317
      %v3319 = vmul.f32 %v3149, 1.442695
      %v3320 = vpow.pop %v3319
      %v3321 = vmul.f32 %v3150, 1.442695
      %v3322 = vpow.pop %v3321
      %v3323 = vmul.f32 %v3151, 1.442695
      %v3324 = vpow.pop %v3323
      %v3325 = vmul.f32 %v3152, 1.442695
      %v3326 = vpow.pop %v3325
      %v3327 = vmul.f32 %v3153, 1.442695
      %v3328 = vpow.pop %v3327
      %v3329 = vmul.f32 %v3154, 1.442695
      %v3330 = vpow.pop %v3329
      %v3331 = vmul.f32 %v3155, 1.442695
      %v3332 = vpow.pop %v3331
      %v3333 = vmul.f32 %v3156, 1.442695
      %v3334 = vpow.pop %v3333
      %v3335 = vmul.f32 %v3157, 1.442695
      %v3336 = vpow.pop %v3335
      %v3337 = vmul.f32 %v3158, 1.442695
      %v3338 = vpow.pop %v3337
      %v3339 = vmul.f32 %v3159, 1.442695
      %v3340 = vpow.pop %v3339
      %v3341 = vmul.f32 %v3160, 1.442695
      %v3342 = vpow.pop %v3341
      %v3343 = vmul.f32 %v3161, 1.442695
      %v3344 = vpow.pop %v3343
      %v3345 = vmul.f32 %v3162, 1.442695
      %v3346 = vpow.pop %v3345
      %v3347 = vmul.f32 %v3163, 1.442695
      %v3348 = vpow.pop %v3347
      %v3349 = vmul.f32 %v3164, 1.442695
      %v3350 = vpow.pop %v3349
      %v3351 = vmul.f32 %v3165, 1.442695
      %v3352 = vpow.pop %v3351
      %v3353 = vmul.f32 %v3166, 1.442695
      %v3354 = vpow.pop %v3353
      %v3355 = vmul.f32 %v3167, 1.442695
      %v3356 = vpow.pop %v3355
      %v3357 = vmul.f32 %v3168, 1.442695
      %v3358 = vpow.pop %v3357
      %v3359 = vmul.f32 %v3169, 1.442695
      %v3360 = vpow.pop %v3359
      %v3361 = vmul.f32 %v3170, 1.442695
      %v3362 = vpow.pop %v3361
      %v3363 = vmul.f32 %v3171, 1.442695
      %v3364 = vpow.pop %v3363
      %v3365 = vmul.f32 %v3172, 1.442695
      %v3366 = vpow.pop %v3365
      %v3367 = vmul.f32 %v3173, 1.442695
      %v3368 = vpow.pop %v3367
      %v3369 = vmul.f32 %v3174, 1.442695
      %v3370 = vpow.pop %v3369
      %v3371 = vmul.f32 %v3175, 1.442695
      %v3372 = vpow.pop %v3371
      %v3373 = vmul.f32 %v3176, 1.442695
      %v3374 = vpow.pop %v3373
      %v3375 = vmul.f32 %v3177, 1.442695
      %v3376 = vpow.pop %v3375
      %v3377 = vmul.f32 %v3178, 1.442695
      %v3378 = vpow.pop %v3377
      %v3379 = vmul.f32 %v3179, 1.442695
      %v3380 = vpow.pop %v3379
      %v3381 = vmul.f32 %v3180, 1.442695
      %v3382 = vpow.pop %v3381
      %v3383 = vmul.f32 %v3181, 1.442695
      %v3384 = vpow.pop %v3383
      %v3385 = vmul.f32 %v3182, 1.442695
      %v3386 = vpow.pop %v3385
      %v3387 = vmul.f32 %v3183, 1.442695
      %v3388 = vpow.pop %v3387
      %v3389 = vmul.f32 %v3184, 1.442695
      %v3390 = vpow.pop %v3389
      %v3391 = vmul.f32 %v3185, 1.442695
      %v3392 = vpow.pop %v3391
      %v3393 = vmul.f32 %v3186, 1.442695
      %v3394 = vpow.pop %v3393
      %v3395 = vmul.f32 %v3187, 1.442695
      %v3396 = vpow.pop %v3395
      %v3397 = vmul.f32 %v3188, 1.442695
      %v3398 = vpow.pop %v3397
      %v3399 = vmul.f32 %v3189, 1.442695
      %v3400 = vpow.pop %v3399
      %v3401 = vmul.f32 %v3190, 1.442695
      %v3402 = vpow.pop %v3401
      %v3403 = vmul.f32 %v3191, 1.442695
      %v3404 = vpow.pop %v3403
      %v3405 = vmul.f32 %v3192, 1.442695
      %v3406 = vpow.pop %v3405
      %v3407 = vmul.f32 %v3193, 1.442695
      %v3408 = vpow.pop %v3407
      %v3409 = vmul.f32 %v3194, 1.442695
      %v3410 = vpow.pop %v3409
      %v3411 = vmul.f32 %v3195, 1.442695
      %v3412 = vpow.pop %v3411
      %v3413 = vmul.f32 %v3196, 1.442695
      %v3414 = vpow.pop %v3413
      %v3415 = vmul.f32 %v3197, 1.442695
      %v3416 = vpow.pop %v3415
      %v3417 = vmul.f32 %v3198, 1.442695
      %v3418 = vpow.pop %v3417
      %v3419 = vmul.f32 %v3199, 1.442695
      %v3420 = vpow.pop %v3419
      %v3421 = vmul.f32 %v3200, 1.442695
      %v3422 = vpow.pop %v3421
      %v3423 = vmul.f32 %v3201, 1.442695
      %v3424 = vpow.pop %v3423
      %v3425 = vmul.f32 %v3202, 1.442695
      %v3426 = vpow.pop %v3425
      %v3427 = vadd.f32 %v3204, 1.0
      %v3428 = vadd.f32 %v3206, 1.0
      %v3429 = vadd.f32 %v3208, 1.0
      %v3430 = vadd.f32 %v3210, 1.0
      %v3431 = vadd.f32 %v3212, 1.0
      %v3432 = vadd.f32 %v3214, 1.0
      %v3433 = vadd.f32 %v3216, 1.0
      %v3434 = vadd.f32 %v3218, 1.0
      %v3435 = vadd.f32 %v3220, 1.0
      %v3436 = vadd.f32 %v3222, 1.0
      %v3437 = vadd.f32 %v3224, 1.0
      %v3438 = vadd.f32 %v3226, 1.0
      %v3439 = vadd.f32 %v3228, 1.0
      %v3440 = vadd.f32 %v3230, 1.0
      %v3441 = vadd.f32 %v3232, 1.0
      %v3442 = vadd.f32 %v3234, 1.0
      %v3443 = vadd.f32 %v3236, 1.0
      %v3444 = vadd.f32 %v3238, 1.0
      %v3445 = vadd.f32 %v3240, 1.0
      %v3446 = vadd.f32 %v3242, 1.0
      %v3447 = vadd.f32 %v3244, 1.0
      %v3448 = vadd.f32 %v3246, 1.0
      %v3449 = vadd.f32 %v3248, 1.0
      %v3450 = vadd.f32 %v3250, 1.0
      %v3451 = vadd.f32 %v3252, 1.0
      %v3452 = vadd.f32 %v3254, 1.0
      %v3453 = vadd.f32 %v3256, 1.0
      %v3454 = vadd.f32 %v3258, 1.0
      %v3455 = vadd.f32 %v3260, 1.0
      %v3456 = vadd.f32 %v3262, 1.0
      %v3457 = vadd.f32 %v3264, 1.0
      %v3458 = vadd.f32 %v3266, 1.0
      %v3459 = vadd.f32 %v3268, 1.0
      %v3460 = vadd.f32 %v3270, 1.0
      %v3461 = vadd.f32 %v3272, 1.0
      %v3462 = vadd.f32 %v3274, 1.0
      %v3463 = vadd.f32 %v3276, 1.0
      %v3464 = vadd.f32 %v3278, 1.0
      %v3465 = vadd.f32 %v3280, 1.0
      %v3466 = vadd.f32 %v3282, 1.0
      %v3467 = vadd.f32 %v3284, 1.0
      %v3468 = vadd.f32 %v3286, 1.0
      %v3469 = vadd.f32 %v3288, 1.0
      %v3470 = vadd.f32 %v3290, 1.0
      %v3471 = vadd.f32 %v3292, 1.0
      %v3472 = vadd.f32 %v3294, 1.0
      %v3473 = vadd.f32 %v3296, 1.0
      %v3474 = vadd.f32 %v3298, 1.0
      %v3475 = vadd.f32 %v3300, 1.0
      %v3476 = vadd.f32 %v3302, 1.0
      %v3477 = vadd.f32 %v3304, 1.0
      %v3478 = vadd.f32 %v3306, 1.0
      %v3479 = vadd.f32 %v3308, 1.0
      %v3480 = vadd.f32 %v3310, 1.0
      %v3481 = vadd.f32 %v3312, 1.0
      %v3482 = vadd.f32 %v3314, 1.0
      %v3483 = vadd.f32 %v3316, 1.0
      %v3484 = vadd.f32 %v3318, 1.0
      %v3485 = vadd.f32 %v3320, 1.0
      %v3486 = vadd.f32 %v3322, 1.0
      %v3487 = vadd.f32 %v3324, 1.0
      %v3488 = vadd.f32 %v3326, 1.0
      %v3489 = vadd.f32 %v3328, 1.0
      %v3490 = vadd.f32 %v3330, 1.0
      %v3491 = vadd.f32 %v3332, 1.0
      %v3492 = vadd.f32 %v3334, 1.0
      %v3493 = vadd.f32 %v3336, 1.0
      %v3494 = vadd.f32 %v3338, 1.0
      %v3495 = vadd.f32 %v3340, 1.0
      %v3496 = vadd.f32 %v3342, 1.0
      %v3497 = vadd.f32 %v3344, 1.0
      %v3498 = vadd.f32 %v3346, 1.0
      %v3499 = vadd.f32 %v3348, 1.0
      %v3500 = vadd.f32 %v3350, 1.0
      %v3501 = vadd.f32 %v3352, 1.0
      %v3502 = vadd.f32 %v3354, 1.0
      %v3503 = vadd.f32 %v3356, 1.0
      %v3504 = vadd.f32 %v3358, 1.0
      %v3505 = vadd.f32 %v3360, 1.0
      %v3506 = vadd.f32 %v3362, 1.0
      %v3507 = vadd.f32 %v3364, 1.0
      %v3508 = vadd.f32 %v3366, 1.0
      %v3509 = vadd.f32 %v3368, 1.0
      %v3510 = vadd.f32 %v3370, 1.0
      %v3511 = vadd.f32 %v3372, 1.0
      %v3512 = vadd.f32 %v3374, 1.0
      %v3513 = vadd.f32 %v3376, 1.0
      %v3514 = vadd.f32 %v3378, 1.0
      %v3515 = vadd.f32 %v3380, 1.0
      %v3516 = vadd.f32 %v3382, 1.0
      %v3517 = vadd.f32 %v3384, 1.0
      %v3518 = vadd.f32 %v3386, 1.0
      %v3519 = vadd.f32 %v3388, 1.0
      %v3520 = vadd.f32 %v3390, 1.0
      %v3521 = vadd.f32 %v3392, 1.0
      %v3522 = vadd.f32 %v3394, 1.0
      %v3523 = vadd.f32 %v3396, 1.0
      %v3524 = vadd.f32 %v3398, 1.0
      %v3525 = vadd.f32 %v3400, 1.0
      %v3526 = vadd.f32 %v3402, 1.0
      %v3527 = vadd.f32 %v3404, 1.0
      %v3528 = vadd.f32 %v3406, 1.0
      %v3529 = vadd.f32 %v3408, 1.0
      %v3530 = vadd.f32 %v3410, 1.0
      %v3531 = vadd.f32 %v3412, 1.0
      %v3532 = vadd.f32 %v3414, 1.0
      %v3533 = vadd.f32 %v3416, 1.0
      %v3534 = vadd.f32 %v3418, 1.0
      %v3535 = vadd.f32 %v3420, 1.0
      %v3536 = vadd.f32 %v3422, 1.0
      %v3537 = vadd.f32 %v3424, 1.0
      %v3538 = vadd.f32 %v3426, 1.0
      %v3539 = vrcp.pop %v3427
      %v3540 = vmul.f32 1.0, %v3539
      %v3541 = vrcp.pop %v3428
      %v3542 = vmul.f32 1.0, %v3541
      %v3543 = vrcp.pop %v3429
      %v3544 = vmul.f32 1.0, %v3543
      %v3545 = vrcp.pop %v3430
      %v3546 = vmul.f32 1.0, %v3545
      %v3547 = vrcp.pop %v3431
      %v3548 = vmul.f32 1.0, %v3547
      %v3549 = vrcp.pop %v3432
      %v3550 = vmul.f32 1.0, %v3549
      %v3551 = vrcp.pop %v3433
      %v3552 = vmul.f32 1.0, %v3551
      %v3553 = vrcp.pop %v3434
      %v3554 = vmul.f32 1.0, %v3553
      %v3555 = vrcp.pop %v3435
      %v3556 = vmul.f32 1.0, %v3555
      %v3557 = vrcp.pop %v3436
      %v3558 = vmul.f32 1.0, %v3557
      %v3559 = vrcp.pop %v3437
      %v3560 = vmul.f32 1.0, %v3559
      %v3561 = vrcp.pop %v3438
      %v3562 = vmul.f32 1.0, %v3561
      %v3563 = vrcp.pop %v3439
      %v3564 = vmul.f32 1.0, %v3563
      %v3565 = vrcp.pop %v3440
      %v3566 = vmul.f32 1.0, %v3565
      %v3567 = vrcp.pop %v3441
      %v3568 = vmul.f32 1.0, %v3567
      %v3569 = vrcp.pop %v3442
      %v3570 = vmul.f32 1.0, %v3569
      %v3571 = vrcp.pop %v3443
      %v3572 = vmul.f32 1.0, %v3571
      %v3573 = vrcp.pop %v3444
      %v3574 = vmul.f32 1.0, %v3573
      %v3575 = vrcp.pop %v3445
      %v3576 = vmul.f32 1.0, %v3575
      %v3577 = vrcp.pop %v3446
      %v3578 = vmul.f32 1.0, %v3577
      %v3579 = vrcp.pop %v3447
      %v3580 = vmul.f32 1.0, %v3579
      %v3581 = vrcp.pop %v3448
      %v3582 = vmul.f32 1.0, %v3581
      %v3583 = vrcp.pop %v3449
      %v3584 = vmul.f32 1.0, %v3583
      %v3585 = vrcp.pop %v3450
      %v3586 = vmul.f32 1.0, %v3585
      %v3587 = vrcp.pop %v3451
      %v3588 = vmul.f32 1.0, %v3587
      %v3589 = vrcp.pop %v3452
      %v3590 = vmul.f32 1.0, %v3589
      %v3591 = vrcp.pop %v3453
      %v3592 = vmul.f32 1.0, %v3591
      %v3593 = vrcp.pop %v3454
      %v3594 = vmul.f32 1.0, %v3593
      %v3595 = vrcp.pop %v3455
      %v3596 = vmul.f32 1.0, %v3595
      %v3597 = vrcp.pop %v3456
      %v3598 = vmul.f32 1.0, %v3597
      %v3599 = vrcp.pop %v3457
      %v3600 = vmul.f32 1.0, %v3599
      %v3601 = vrcp.pop %v3458
      %v3602 = vmul.f32 1.0, %v3601
      %v3603 = vrcp.pop %v3459
      %v3604 = vmul.f32 1.0, %v3603
      %v3605 = vrcp.pop %v3460
      %v3606 = vmul.f32 1.0, %v3605
      %v3607 = vrcp.pop %v3461
      %v3608 = vmul.f32 1.0, %v3607
      %v3609 = vrcp.pop %v3462
      %v3610 = vmul.f32 1.0, %v3609
      %v3611 = vrcp.pop %v3463
      %v3612 = vmul.f32 1.0, %v3611
      %v3613 = vrcp.pop %v3464
      %v3614 = vmul.f32 1.0, %v3613
      %v3615 = vrcp.pop %v3465
      %v3616 = vmul.f32 1.0, %v3615
      %v3617 = vrcp.pop %v3466
      %v3618 = vmul.f32 1.0, %v3617
      %v3619 = vrcp.pop %v3467
      %v3620 = vmul.f32 1.0, %v3619
      %v3621 = vrcp.pop %v3468
      %v3622 = vmul.f32 1.0, %v3621
      %v3623 = vrcp.pop %v3469
      %v3624 = vmul.f32 1.0, %v3623
      %v3625 = vrcp.pop %v3470
      %v3626 = vmul.f32 1.0, %v3625
      %v3627 = vrcp.pop %v3471
      %v3628 = vmul.f32 1.0, %v3627
      %v3629 = vrcp.pop %v3472
      %v3630 = vmul.f32 1.0, %v3629
      %v3631 = vrcp.pop %v3473
      %v3632 = vmul.f32 1.0, %v3631
      %v3633 = vrcp.pop %v3474
      %v3634 = vmul.f32 1.0, %v3633
      %v3635 = vrcp.pop %v3475
      %v3636 = vmul.f32 1.0, %v3635
      %v3637 = vrcp.pop %v3476
      %v3638 = vmul.f32 1.0, %v3637
      %v3639 = vrcp.pop %v3477
      %v3640 = vmul.f32 1.0, %v3639
      %v3641 = vrcp.pop %v3478
      %v3642 = vmul.f32 1.0, %v3641
      %v3643 = vrcp.pop %v3479
      %v3644 = vmul.f32 1.0, %v3643
      %v3645 = vrcp.pop %v3480
      %v3646 = vmul.f32 1.0, %v3645
      %v3647 = vrcp.pop %v3481
      %v3648 = vmul.f32 1.0, %v3647
      %v3649 = vrcp.pop %v3482
      %v3650 = vmul.f32 1.0, %v3649
      %v3651 = vrcp.pop %v3483
      %v3652 = vmul.f32 1.0, %v3651
      %v3653 = vrcp.pop %v3484
      %v3654 = vmul.f32 1.0, %v3653
      %v3655 = vrcp.pop %v3485
      %v3656 = vmul.f32 1.0, %v3655
      %v3657 = vrcp.pop %v3486
      %v3658 = vmul.f32 1.0, %v3657
      %v3659 = vrcp.pop %v3487
      %v3660 = vmul.f32 1.0, %v3659
      %v3661 = vrcp.pop %v3488
      %v3662 = vmul.f32 1.0, %v3661
      %v3663 = vrcp.pop %v3489
      %v3664 = vmul.f32 1.0, %v3663
      %v3665 = vrcp.pop %v3490
      %v3666 = vmul.f32 1.0, %v3665
      %v3667 = vrcp.pop %v3491
      %v3668 = vmul.f32 1.0, %v3667
      %v3669 = vrcp.pop %v3492
      %v3670 = vmul.f32 1.0, %v3669
      %v3671 = vrcp.pop %v3493
      %v3672 = vmul.f32 1.0, %v3671
      %v3673 = vrcp.pop %v3494
      %v3674 = vmul.f32 1.0, %v3673
      %v3675 = vrcp.pop %v3495
      %v3676 = vmul.f32 1.0, %v3675
      %v3677 = vrcp.pop %v3496
      %v3678 = vmul.f32 1.0, %v3677
      %v3679 = vrcp.pop %v3497
      %v3680 = vmul.f32 1.0, %v3679
      %v3681 = vrcp.pop %v3498
      %v3682 = vmul.f32 1.0, %v3681
      %v3683 = vrcp.pop %v3499
      %v3684 = vmul.f32 1.0, %v3683
      %v3685 = vrcp.pop %v3500
      %v3686 = vmul.f32 1.0, %v3685
      %v3687 = vrcp.pop %v3501
      %v3688 = vmul.f32 1.0, %v3687
      %v3689 = vrcp.pop %v3502
      %v3690 = vmul.f32 1.0, %v3689
      %v3691 = vrcp.pop %v3503
      %v3692 = vmul.f32 1.0, %v3691
      %v3693 = vrcp.pop %v3504
      %v3694 = vmul.f32 1.0, %v3693
      %v3695 = vrcp.pop %v3505
      %v3696 = vmul.f32 1.0, %v3695
      %v3697 = vrcp.pop %v3506
      %v3698 = vmul.f32 1.0, %v3697
      %v3699 = vrcp.pop %v3507
      %v3700 = vmul.f32 1.0, %v3699
      %v3701 = vrcp.pop %v3508
      %v3702 = vmul.f32 1.0, %v3701
      %v3703 = vrcp.pop %v3509
      %v3704 = vmul.f32 1.0, %v3703
      %v3705 = vrcp.pop %v3510
      %v3706 = vmul.f32 1.0, %v3705
      %v3707 = vrcp.pop %v3511
      %v3708 = vmul.f32 1.0, %v3707
      %v3709 = vrcp.pop %v3512
      %v3710 = vmul.f32 1.0, %v3709
      %v3711 = vrcp.pop %v3513
      %v3712 = vmul.f32 1.0, %v3711
      %v3713 = vrcp.pop %v3514
      %v3714 = vmul.f32 1.0, %v3713
      %v3715 = vrcp.pop %v3515
      %v3716 = vmul.f32 1.0, %v3715
      %v3717 = vrcp.pop %v3516
      %v3718 = vmul.f32 1.0, %v3717
      %v3719 = vrcp.pop %v3517
      %v3720 = vmul.f32 1.0, %v3719
      %v3721 = vrcp.pop %v3518
      %v3722 = vmul.f32 1.0, %v3721
      %v3723 = vrcp.pop %v3519
      %v3724 = vmul.f32 1.0, %v3723
      %v3725 = vrcp.pop %v3520
      %v3726 = vmul.f32 1.0, %v3725
      %v3727 = vrcp.pop %v3521
      %v3728 = vmul.f32 1.0, %v3727
      %v3729 = vrcp.pop %v3522
      %v3730 = vmul.f32 1.0, %v3729
      %v3731 = vrcp.pop %v3523
      %v3732 = vmul.f32 1.0, %v3731
      %v3733 = vrcp.pop %v3524
      %v3734 = vmul.f32 1.0, %v3733
      %v3735 = vrcp.pop %v3525
      %v3736 = vmul.f32 1.0, %v3735
      %v3737 = vrcp.pop %v3526
      %v3738 = vmul.f32 1.0, %v3737
      %v3739 = vrcp.pop %v3527
      %v3740 = vmul.f32 1.0, %v3739
      %v3741 = vrcp.pop %v3528
      %v3742 = vmul.f32 1.0, %v3741
      %v3743 = vrcp.pop %v3529
      %v3744 = vmul.f32 1.0, %v3743
      %v3745 = vrcp.pop %v3530
      %v3746 = vmul.f32 1.0, %v3745
      %v3747 = vrcp.pop %v3531
      %v3748 = vmul.f32 1.0, %v3747
      %v3749 = vrcp.pop %v3532
      %v3750 = vmul.f32 1.0, %v3749
      %v3751 = vrcp.pop %v3533
      %v3752 = vmul.f32 1.0, %v3751
      %v3753 = vrcp.pop %v3534
      %v3754 = vmul.f32 1.0, %v3753
      %v3755 = vrcp.pop %v3535
      %v3756 = vmul.f32 1.0, %v3755
      %v3757 = vrcp.pop %v3536
      %v3758 = vmul.f32 1.0, %v3757
      %v3759 = vrcp.pop %v3537
      %v3760 = vmul.f32 1.0, %v3759
      %v3761 = vrcp.pop %v3538
      %v3762 = vmul.f32 1.0, %v3761
      %v3763 = vpack.c.bf16 %v3554, %v3540
      %v3764 = vpack.c.bf16 %v3556, %v3542
      %v3765 = vpack.c.bf16 %v3558, %v3544
      %v3766 = vpack.c.bf16 %v3560, %v3546
      %v3767 = vpack.c.bf16 %v3562, %v3548
      %v3768 = vpack.c.bf16 %v3564, %v3550
      %v3769 = vpack.c.bf16 %v3566, %v3552
      %v3770 = vpack.c.bf16 %v3582, %v3568
      %v3771 = vpack.c.bf16 %v3584, %v3570
      %v3772 = vpack.c.bf16 %v3586, %v3572
      %v3773 = vpack.c.bf16 %v3588, %v3574
      %v3774 = vpack.c.bf16 %v3590, %v3576
      %v3775 = vpack.c.bf16 %v3592, %v3578
      %v3776 = vpack.c.bf16 %v3594, %v3580
      %v3777 = vpack.c.bf16 %v3610, %v3596
      %v3778 = vpack.c.bf16 %v3612, %v3598
      %v3779 = vpack.c.bf16 %v3614, %v3600
      %v3780 = vpack.c.bf16 %v3616, %v3602
      %v3781 = vpack.c.bf16 %v3618, %v3604
      %v3782 = vpack.c.bf16 %v3620, %v3606
      %v3783 = vpack.c.bf16 %v3622, %v3608
      %v3784 = vpack.c.bf16 %v3638, %v3624
      %v3785 = vpack.c.bf16 %v3640, %v3626
      %v3786 = vpack.c.bf16 %v3642, %v3628
      %v3787 = vpack.c.bf16 %v3644, %v3630
      %v3788 = vpack.c.bf16 %v3646, %v3632
      %v3789 = vpack.c.bf16 %v3648, %v3634
      %v3790 = vpack.c.bf16 %v3650, %v3636
      %v3791 = vpack.c.bf16 %v3666, %v3652
      %v3792 = vpack.c.bf16 %v3668, %v3654
      %v3793 = vpack.c.bf16 %v3670, %v3656
      %v3794 = vpack.c.bf16 %v3672, %v3658
      %v3795 = vpack.c.bf16 %v3674, %v3660
      %v3796 = vpack.c.bf16 %v3676, %v3662
      %v3797 = vpack.c.bf16 %v3678, %v3664
      %v3798 = vpack.c.bf16 %v3694, %v3680
      %v3799 = vpack.c.bf16 %v3696, %v3682
      %v3800 = vpack.c.bf16 %v3698, %v3684
      %v3801 = vpack.c.bf16 %v3700, %v3686
      %v3802 = vpack.c.bf16 %v3702, %v3688
      %v3803 = vpack.c.bf16 %v3704, %v3690
      %v3804 = vpack.c.bf16 %v3706, %v3692
      %v3805 = vpack.c.bf16 %v3722, %v3708
      %v3806 = vpack.c.bf16 %v3724, %v3710
      %v3807 = vpack.c.bf16 %v3726, %v3712
      %v3808 = vpack.c.bf16 %v3728, %v3714
      %v3809 = vpack.c.bf16 %v3730, %v3716
      %v3810 = vpack.c.bf16 %v3732, %v3718
      %v3811 = vpack.c.bf16 %v3734, %v3720
      %v3812 = vpack.c.bf16 %v3750, %v3736
      %v3813 = vpack.c.bf16 %v3752, %v3738
      %v3814 = vpack.c.bf16 %v3754, %v3740
      %v3815 = vpack.c.bf16 %v3756, %v3742
      %v3816 = vpack.c.bf16 %v3758, %v3744
      %v3817 = vpack.c.bf16 %v3760, %v3746
      %v3818 = vpack.c.bf16 %v3762, %v3748
      %v3875 = vunpack.c.l.b16 %v3763
      %v3876 = vunpack.c.l.b16 %v3764
      %v3877 = vunpack.c.l.b16 %v3765
      %v3878 = vunpack.c.l.b16 %v3766
      %v3879 = vunpack.c.l.b16 %v3767
      %v3880 = vunpack.c.l.b16 %v3768
      %v3881 = vunpack.c.l.b16 %v3769
      %v3882 = vunpack.c.h.b16 %v3763
      %v3883 = vunpack.c.h.b16 %v3764
      %v3884 = vunpack.c.h.b16 %v3765
      %v3885 = vunpack.c.h.b16 %v3766
      %v3886 = vunpack.c.h.b16 %v3767
      %v3887 = vunpack.c.h.b16 %v3768
      %v3888 = vunpack.c.h.b16 %v3769
      %v3889 = vunpack.c.l.b16 %v3770
      %v3890 = vunpack.c.l.b16 %v3771
      %v3891 = vunpack.c.l.b16 %v3772
      %v3892 = vunpack.c.l.b16 %v3773
      %v3893 = vunpack.c.l.b16 %v3774
      %v3894 = vunpack.c.l.b16 %v3775
      %v3895 = vunpack.c.l.b16 %v3776
      %v3896 = vunpack.c.h.b16 %v3770
      %v3897 = vunpack.c.h.b16 %v3771
      %v3898 = vunpack.c.h.b16 %v3772
      %v3899 = vunpack.c.h.b16 %v3773
      %v3900 = vunpack.c.h.b16 %v3774
      %v3901 = vunpack.c.h.b16 %v3775
      %v3902 = vunpack.c.h.b16 %v3776
      %v3903 = vunpack.c.l.b16 %v3777
      %v3904 = vunpack.c.l.b16 %v3778
      %v3905 = vunpack.c.l.b16 %v3779
      %v3906 = vunpack.c.l.b16 %v3780
      %v3907 = vunpack.c.l.b16 %v3781
      %v3908 = vunpack.c.l.b16 %v3782
      %v3909 = vunpack.c.l.b16 %v3783
      %v3910 = vunpack.c.h.b16 %v3777
      %v3911 = vunpack.c.h.b16 %v3778
      %v3912 = vunpack.c.h.b16 %v3779
      %v3913 = vunpack.c.h.b16 %v3780
      %v3914 = vunpack.c.h.b16 %v3781
      %v3915 = vunpack.c.h.b16 %v3782
      %v3916 = vunpack.c.h.b16 %v3783
      %v3917 = vunpack.c.l.b16 %v3784
      %v3918 = vunpack.c.l.b16 %v3785
      %v3919 = vunpack.c.l.b16 %v3786
      %v3920 = vunpack.c.l.b16 %v3787
      %v3921 = vunpack.c.l.b16 %v3788
      %v3922 = vunpack.c.l.b16 %v3789
      %v3923 = vunpack.c.l.b16 %v3790
      %v3924 = vunpack.c.h.b16 %v3784
      %v3925 = vunpack.c.h.b16 %v3785
      %v3926 = vunpack.c.h.b16 %v3786
      %v3927 = vunpack.c.h.b16 %v3787
      %v3928 = vunpack.c.h.b16 %v3788
      %v3929 = vunpack.c.h.b16 %v3789
      %v3930 = vunpack.c.h.b16 %v3790
      %v3931 = vunpack.c.l.b16 %v3791
      %v3932 = vunpack.c.l.b16 %v3792
      %v3933 = vunpack.c.l.b16 %v3793
      %v3934 = vunpack.c.l.b16 %v3794
      %v3935 = vunpack.c.l.b16 %v3795
      %v3936 = vunpack.c.l.b16 %v3796
      %v3937 = vunpack.c.l.b16 %v3797
      %v3938 = vunpack.c.h.b16 %v3791
      %v3939 = vunpack.c.h.b16 %v3792
      %v3940 = vunpack.c.h.b16 %v3793
      %v3941 = vunpack.c.h.b16 %v3794
      %v3942 = vunpack.c.h.b16 %v3795
      %v3943 = vunpack.c.h.b16 %v3796
      %v3944 = vunpack.c.h.b16 %v3797
      %v3945 = vunpack.c.l.b16 %v3798
      %v3946 = vunpack.c.l.b16 %v3799
      %v3947 = vunpack.c.l.b16 %v3800
      %v3948 = vunpack.c.l.b16 %v3801
      %v3949 = vunpack.c.l.b16 %v3802
      %v3950 = vunpack.c.l.b16 %v3803
      %v3951 = vunpack.c.l.b16 %v3804
      %v3952 = vunpack.c.h.b16 %v3798
      %v3953 = vunpack.c.h.b16 %v3799
      %v3954 = vunpack.c.h.b16 %v3800
      %v3955 = vunpack.c.h.b16 %v3801
      %v3956 = vunpack.c.h.b16 %v3802
      %v3957 = vunpack.c.h.b16 %v3803
      %v3958 = vunpack.c.h.b16 %v3804
      %v3959 = vunpack.c.l.b16 %v3805
      %v3960 = vunpack.c.l.b16 %v3806
      %v3961 = vunpack.c.l.b16 %v3807
      %v3962 = vunpack.c.l.b16 %v3808
      %v3963 = vunpack.c.l.b16 %v3809
      %v3964 = vunpack.c.l.b16 %v3810
      %v3965 = vunpack.c.l.b16 %v3811
      %v3966 = vunpack.c.h.b16 %v3805
      %v3967 = vunpack.c.h.b16 %v3806
      %v3968 = vunpack.c.h.b16 %v3807
      %v3969 = vunpack.c.h.b16 %v3808
      %v3970 = vunpack.c.h.b16 %v3809
      %v3971 = vunpack.c.h.b16 %v3810
      %v3972 = vunpack.c.h.b16 %v3811
      %v3973 = vunpack.c.l.b16 %v3812
      %v3974 = vunpack.c.l.b16 %v3813
      %v3975 = vunpack.c.l.b16 %v3814
      %v3976 = vunpack.c.l.b16 %v3815
      %v3977 = vunpack.c.l.b16 %v3816
      %v3978 = vunpack.c.l.b16 %v3817
      %v3979 = vunpack.c.l.b16 %v3818
      %v3980 = vunpack.c.h.b16 %v3812
      %v3981 = vunpack.c.h.b16 %v3813
      %v3982 = vunpack.c.h.b16 %v3814
      %v3983 = vunpack.c.h.b16 %v3815
      %v3984 = vunpack.c.h.b16 %v3816
      %v3985 = vunpack.c.h.b16 %v3817
      %v3986 = vunpack.c.h.b16 %v3818
      %v3987 = vpack.c.b16 %v3876, %v3875
      %v3988 = vpack.c.b16 %v3878, %v3877
      %v3989 = vpack.c.b16 %v3880, %v3879
      %v3990 = vpack.c.b16 %v3881, %v3881
      %v3991 = vpack.c.b16 %v3883, %v3882
      %v3992 = vpack.c.b16 %v3885, %v3884
      %v3993 = vpack.c.b16 %v3887, %v3886
      %v3994 = vpack.c.b16 %v3888, %v3888
      %v3995 = vpack.c.b16 %v3890, %v3889
      %v3996 = vpack.c.b16 %v3892, %v3891
      %v3997 = vpack.c.b16 %v3894, %v3893
      %v3998 = vpack.c.b16 %v3895, %v3895
      %v3999 = vpack.c.b16 %v3897, %v3896
      %v4000 = vpack.c.b16 %v3899, %v3898
      %v4001 = vpack.c.b16 %v3901, %v3900
      %v4002 = vpack.c.b16 %v3902, %v3902
      %v4003 = vpack.c.b16 %v3904, %v3903
      %v4004 = vpack.c.b16 %v3906, %v3905
      %v4005 = vpack.c.b16 %v3908, %v3907
      %v4006 = vpack.c.b16 %v3909, %v3909
      %v4007 = vpack.c.b16 %v3911, %v3910
      %v4008 = vpack.c.b16 %v3913, %v3912
      %v4009 = vpack.c.b16 %v3915, %v3914
      %v4010 = vpack.c.b16 %v3916, %v3916
      %v4011 = vpack.c.b16 %v3918, %v3917
      %v4012 = vpack.c.b16 %v3920, %v3919
      %v4013 = vpack.c.b16 %v3922, %v3921
      %v4014 = vpack.c.b16 %v3923, %v3923
      %v4015 = vpack.c.b16 %v3925, %v3924
      %v4016 = vpack.c.b16 %v3927, %v3926
      %v4017 = vpack.c.b16 %v3929, %v3928
      %v4018 = vpack.c.b16 %v3930, %v3930
      %v4019 = vpack.c.b16 %v3932, %v3931
      %v4020 = vpack.c.b16 %v3934, %v3933
      %v4021 = vpack.c.b16 %v3936, %v3935
      %v4022 = vpack.c.b16 %v3937, %v3937
      %v4023 = vpack.c.b16 %v3939, %v3938
      %v4024 = vpack.c.b16 %v3941, %v3940
      %v4025 = vpack.c.b16 %v3943, %v3942
      %v4026 = vpack.c.b16 %v3944, %v3944
      %v4027 = vpack.c.b16 %v3946, %v3945
      %v4028 = vpack.c.b16 %v3948, %v3947
      %v4029 = vpack.c.b16 %v3950, %v3949
      %v4030 = vpack.c.b16 %v3951, %v3951
      %v4031 = vpack.c.b16 %v3953, %v3952
      %v4032 = vpack.c.b16 %v3955, %v3954
      %v4033 = vpack.c.b16 %v3957, %v3956
      %v4034 = vpack.c.b16 %v3958, %v3958
      %v4035 = vpack.c.b16 %v3960, %v3959
      %v4036 = vpack.c.b16 %v3962, %v3961
      %v4037 = vpack.c.b16 %v3964, %v3963
      %v4038 = vpack.c.b16 %v3965, %v3965
      %v4039 = vpack.c.b16 %v3967, %v3966
      %v4040 = vpack.c.b16 %v3969, %v3968
      %v4041 = vpack.c.b16 %v3971, %v3970
      %v4042 = vpack.c.b16 %v3972, %v3972
      %v4043 = vpack.c.b16 %v3974, %v3973
      %v4044 = vpack.c.b16 %v3976, %v3975
      %v4045 = vpack.c.b16 %v3978, %v3977
      %v4046 = vpack.c.b16 %v3979, %v3979
      %v4047 = vpack.c.b16 %v3981, %v3980
      %v4048 = vpack.c.b16 %v3983, %v3982
      %v4049 = vpack.c.b16 %v3985, %v3984
      %v4050 = vpack.c.b16 %v3986, %v3986
      %4115 = vst [vmem:[%s396] sm:$0xff] %v3987
      %4116 = vst [vmem:[%s396 + $0x8] sm:$0xff] %v3988
      %4117 = vst [vmem:[%s396 + $0x10] sm:$0xff] %v3989
      %vm4118 = vcmask 125952
      %4119 = vst.msk [vmem:[%s396 + $0x18] sm:$0xf] %vm4118, %v3990
      %4120 = vst [vmem:[%s396 + $0x1c] sm:$0xff] %v3991
      %4121 = vst [vmem:[%s396 + $0x24] sm:$0xff] %v3992
      %4122 = vst [vmem:[%s396 + $0x2c] sm:$0xff] %v3993
      %4123 = vst.msk [vmem:[%s396 + $0x34] sm:$0xf] %vm4118, %v3994
      %4124 = vst [vmem:[%s396 + $0x38] sm:$0xff] %v3995
      %4125 = vst [vmem:[%s396 + $0x40] sm:$0xff] %v3996
      %4126 = vst [vmem:[%s396 + $0x48] sm:$0xff] %v3997
      %4127 = vst.msk [vmem:[%s396 + $0x50] sm:$0xf] %vm4118, %v3998
      %4128 = vst [vmem:[%s396 + $0x54] sm:$0xff] %v3999
      %4129 = vst [vmem:[%s396 + $0x5c] sm:$0xff] %v4000
      %4130 = vst [vmem:[%s396 + $0x64] sm:$0xff] %v4001
      %4131 = vst.msk [vmem:[%s396 + $0x6c] sm:$0xf] %vm4118, %v4002
      %4132 = vst [vmem:[%s396 + $0x70] sm:$0xff] %v4003
      %4133 = vst [vmem:[%s396 + $0x78] sm:$0xff] %v4004
      %4134 = vst [vmem:[%s396 + $0x80] sm:$0xff] %v4005
      %4135 = vst.msk [vmem:[%s396 + $0x88] sm:$0xf] %vm4118, %v4006
      %4136 = vst [vmem:[%s396 + $0x8c] sm:$0xff] %v4007
      %4137 = vst [vmem:[%s396 + $0x94] sm:$0xff] %v4008
      %4138 = vst [vmem:[%s396 + $0x9c] sm:$0xff] %v4009
      %4139 = vst.msk [vmem:[%s396 + $0xa4] sm:$0xf] %vm4118, %v4010
      %4140 = vst [vmem:[%s396 + $0xa8] sm:$0xff] %v4011
      %4141 = vst [vmem:[%s396 + $0xb0] sm:$0xff] %v4012
      %4142 = vst [vmem:[%s396 + $0xb8] sm:$0xff] %v4013
      %4143 = vst.msk [vmem:[%s396 + $0xc0] sm:$0xf] %vm4118, %v4014
      %4144 = vst [vmem:[%s396 + $0xc4] sm:$0xff] %v4015
      %4145 = vst [vmem:[%s396 + $0xcc] sm:$0xff] %v4016
      %4146 = vst [vmem:[%s396 + $0xd4] sm:$0xff] %v4017
      %4147 = vst.msk [vmem:[%s396 + $0xdc] sm:$0xf] %vm4118, %v4018
      %4148 = vst [vmem:[%s396 + $0xe0] sm:$0xff] %v4019
      %4149 = vst [vmem:[%s396 + $0xe8] sm:$0xff] %v4020
      %4150 = vst [vmem:[%s396 + $0xf0] sm:$0xff] %v4021
      %4151 = vst.msk [vmem:[%s396 + $0xf8] sm:$0xf] %vm4118, %v4022
      %4152 = vst [vmem:[%s396 + $0xfc] sm:$0xff] %v4023
      %4153 = vst [vmem:[%s396 + $0x104] sm:$0xff] %v4024
      %4154 = vst [vmem:[%s396 + $0x10c] sm:$0xff] %v4025
      %4155 = vst.msk [vmem:[%s396 + $0x114] sm:$0xf] %vm4118, %v4026
      %4156 = vst [vmem:[%s396 + $0x118] sm:$0xff] %v4027
      %4157 = vst [vmem:[%s396 + $0x120] sm:$0xff] %v4028
      %4158 = vst [vmem:[%s396 + $0x128] sm:$0xff] %v4029
      %4159 = vst.msk [vmem:[%s396 + $0x130] sm:$0xf] %vm4118, %v4030
      %4160 = vst [vmem:[%s396 + $0x134] sm:$0xff] %v4031
      %4161 = vst [vmem:[%s396 + $0x13c] sm:$0xff] %v4032
      %4162 = vst [vmem:[%s396 + $0x144] sm:$0xff] %v4033
      %4163 = vst.msk [vmem:[%s396 + $0x14c] sm:$0xf] %vm4118, %v4034
      %4164 = vst [vmem:[%s396 + $0x150] sm:$0xff] %v4035
      %4165 = vst [vmem:[%s396 + $0x158] sm:$0xff] %v4036
      %4166 = vst [vmem:[%s396 + $0x160] sm:$0xff] %v4037
      %4167 = vst.msk [vmem:[%s396 + $0x168] sm:$0xf] %vm4118, %v4038
      %4168 = vst [vmem:[%s396 + $0x16c] sm:$0xff] %v4039
      %4169 = vst [vmem:[%s396 + $0x174] sm:$0xff] %v4040
      %4170 = vst [vmem:[%s396 + $0x17c] sm:$0xff] %v4041
      %4171 = vst.msk [vmem:[%s396 + $0x184] sm:$0xf] %vm4118, %v4042
      %4172 = vst [vmem:[%s396 + $0x188] sm:$0xff] %v4043
      %4173 = vst [vmem:[%s396 + $0x190] sm:$0xff] %v4044
      %4174 = vst [vmem:[%s396 + $0x198] sm:$0xff] %v4045
      %4175 = vst.msk [vmem:[%s396 + $0x1a0] sm:$0xf] %vm4118, %v4046
      %4176 = vst [vmem:[%s396 + $0x1a4] sm:$0xff] %v4047
      %4177 = vst [vmem:[%s396 + $0x1ac] sm:$0xff] %v4048
      %4178 = vst [vmem:[%s396 + $0x1b4] sm:$0xff] %v4049
      %4179 = vst.msk [vmem:[%s396 + $0x1bc] sm:$0xf] %vm4118, %v4050
      %4180 = vst.msk [vmem:[%s402] sm:$0xff] %vm1638, %v1698
      %4181 = vst.msk [vmem:[%s402 + $0x8] sm:$0xff] %vm1638, %v1701
      %4182 = vst.msk [vmem:[%s402 + $0x10] sm:$0xff] %vm1638, %v1706
      %4183 = vst.msk [vmem:[%s402 + $0x18] sm:$0xff] %vm1638, %v1709
      %4184 = vst.msk [vmem:[%s402 + $0x20] sm:$0xff] %vm1638, %v1714
      %4185 = vst.msk [vmem:[%s402 + $0x28] sm:$0xff] %vm1638, %v1717
      %4186 = vst.msk [vmem:[%s402 + $0x30] sm:$0xff] %vm1638, %v1722
      %4187 = vst.msk [vmem:[%s402 + $0x38] sm:$0xff] %vm1638, %v1725
      %4188 = vst.msk [vmem:[%s402 + $0x40] sm:$0xff] %vm1638, %v1730
      %4189 = vst.msk [vmem:[%s402 + $0x48] sm:$0xff] %vm1638, %v1733
      %4190 = vst.msk [vmem:[%s402 + $0x50] sm:$0xff] %vm1638, %v1738
      %4191 = vst.msk [vmem:[%s402 + $0x58] sm:$0xff] %vm1638, %v1741
      %4192 = vst.msk [vmem:[%s402 + $0x60] sm:$0xff] %vm1638, %v1746
      %4193 = vst.msk [vmem:[%s402 + $0x68] sm:$0xff] %vm1638, %v1749
      %4194 = vst.msk [vmem:[%s402 + $0x70] sm:$0xff] %vm1638, %v1754
      %4195 = vst.msk [vmem:[%s402 + $0x78] sm:$0xff] %vm1638, %v1757
      %s4196 = smul.u32 16, %s22
      %p4197 = scmp.lt.s32.totalorder %s4196, 31
      %s4198 = scalar_select %p4197, %s4196, 31
      %s4199 = smul.addr %s4198, 7
      %s4200 = smul.addr %s4199, 4
      %s4201 = scalar_lea.vmem %s9, %s4200
      %s4202 = smul.u32 16, %s22
      %p4203 = scmp.lt.s32.totalorder %s4202, 31
      %s4204 = scalar_select %p4203, %s4202, 31
      %s4205 = smul.addr %s4204, 8
      %s4206 = scalar_lea.vmem %s10, %s4205
      // Predicated region
      $region57: #{vae_forward.1} parent=55 // pred_check
        %p4207 = pneg %p239
      $region58: #{vae_forward.1} parent=55 // pred_check_branch
        %4209 = sbr.rel (%p4207) target = $region60
      $region59: #{vae_forward.1} parent=55 // pred_region
        %s4210 = smul.u32 16, %s22
      $region60: #{vae_forward.1} parent=55 // pred_fallthru
        _
      // Predicated region
      $region61: #{vae_forward.1} parent=55 // pred_check
        %p4211 = pneg %p265
      $region62: #{vae_forward.1} parent=55 // pred_check_branch
        %4213 = sbr.rel (%p4211) target = $region64
      $region63: #{vae_forward.1} parent=55 // pred_region
        %s4214 = smul.u32 16, %s22
      $region64: #{vae_forward.1} parent=55 // pred_fallthru
        _
    $region56: #{vae_forward.1} parent=5 // pred_fallthru
      _
    %p4215 = scmp.le.s32.totalorder 2, %s17
    // Predicated region
    $region65: #{vae_forward.1} parent=5 // pred_check
      %p4216 = pneg %p4215
    $region66: #{vae_forward.1} parent=5 // pred_check_branch
      %4218 = sbr.rel (%p4216) target = $region68
    $region67: #{vae_forward.1} parent=5 // pred_region
      %s4219 = ssub.s32 %s17, 2
      // Predicated region
      $region69: #{vae_forward.1} parent=67 // pred_check
        %p4220 = pneg %p245
      $region70: #{vae_forward.1} parent=67 // pred_check_branch
        %4222 = sbr.rel (%p4220) target = $region72
      $region71: #{vae_forward.1} parent=67 // pred_region
        %s4223 = smul.u32 16, %s23
        %p4224 = scmp.lt.s32.totalorder %s4223, 31
        %s4225 = scalar_select %p4224, %s4223, 31
        %s4226 = smul.addr %s4225, 7
        %s4227 = smul.addr %s4226, 4
        %s4228 = scalar_lea.vmem %s9, %s4227
      $region72: #{vae_forward.1} parent=67 // pred_fallthru
        _
      // Predicated region
      $region73: #{vae_forward.1} parent=67 // pred_check
        %p4229 = pneg %p271
      $region74: #{vae_forward.1} parent=67 // pred_check_branch
        %4231 = sbr.rel (%p4229) target = $region76
      $region75: #{vae_forward.1} parent=67 // pred_region
        %s4232 = smul.u32 16, %s23
        %p4233 = scmp.lt.s32.totalorder %s4232, 31
        %s4234 = scalar_select %p4233, %s4232, 31
        %s4235 = smul.addr %s4234, 8
        %s4236 = scalar_lea.vmem %s10, %s4235
      $region76: #{vae_forward.1} parent=67 // pred_fallthru
        _
    $region68: #{vae_forward.1} parent=5 // pred_fallthru
      _
  $region6: #{vae_forward.1} parent=0 // loop_footer
    %s21 = sadd.s32 1, %s17
  $region7: #{vae_forward.1} parent=0 // loop_footer_branch
    %16 = sbr.rel target = $region3
  $region8: #{vae_forward.1} parent=0 // loop_exit
    _

</llo_original>
